<compile_context>
chip_gen: v6e
topology: v6e:2x2x1
jax: 0.10.0
libtpu: 0.0.40
codegen_flags: <defaults>
</compile_context>

<pallas_src>
import jax
import jax.numpy as jnp
from jax.experimental import pallas as pl
from jax.experimental.pallas import tpu as pltpu


# --------------------------------------------------------------------------
# Trace-time weight packing (plain JAX, runs once per trace — free at runtime)
# --------------------------------------------------------------------------
def make_banded(w, w_in):
    """Pack a PyTorch conv weight (Cout, Cin, K, K) into K banded slabs.

    Returns wk of shape (K, W_in*Cin, Wo*Cout) such that for an NHWC-flattened
    input row x[h] of length W_in*Cin (index w*Cin + ci), the conv output row
    o[ho] (index wo*Cout + co) is  sum_kh  x[ho+kh] @ wk[kh].
    """
    cout, cin, k, _ = w.shape
    wo = w_in - k + 1
    w4 = jnp.transpose(w, (2, 3, 1, 0)).astype(jnp.float32)      # (K, K, Cin, Cout)
    kw_idx = jnp.arange(w_in)[:, None] - jnp.arange(wo)[None, :]  # (W_in, Wo)
    valid = (kw_idx >= 0) & (kw_idx < k)
    g = w4[:, jnp.clip(kw_idx, 0, k - 1)]                         # (K, W_in, Wo, Cin, Cout)
    g = jnp.where(valid[None, :, :, None, None], g, 0.0)
    g = jnp.transpose(g, (0, 1, 3, 2, 4))                         # (K, W_in, Cin, Wo, Cout)
    return g.reshape(k, w_in * cin, wo * cout)


def pack_lstm(lstm_params):
    """Pack PyTorch LSTM params into lane-dense gate slabs ([i|f|g|o] order)."""
    wih_layers, whh_layers, bg = [], [], []
    for layer in range(2):
        wih_d, whh_d, bg_d = [], [], []
        for d in range(2):
            w_ih, w_hh, b_ih, b_hh = lstm_params[(layer, d)]
            wih_d.append(w_ih.T.astype(jnp.float32))              # (16, 32)
            whh_d.append(w_hh.T.astype(jnp.float32))              # (8, 32)
            bg_d.append((b_ih + b_hh).astype(jnp.float32))        # (32,)
        wih_layers.append(jnp.concatenate(wih_d, axis=1))         # (16, 64)
        whh_layers.append(jnp.stack(whh_d, axis=0))               # (2, 8, 32)
        bg.append(jnp.concatenate(bg_d, axis=0))                  # (64,)
    return (jnp.stack(wih_layers),                                # (2, 16, 64)
            jnp.stack(whh_layers),                                # (2, 2, 8, 32)
            bg[0], bg[1])


# --------------------------------------------------------------------------
# The fused kernel
# --------------------------------------------------------------------------
def _fused_kernel(s1_ref, s2_ref,
                  wk3_ref, wk4_ref, wk1a_ref, wk1b_ref, wk2_ref,
                  wih_ref, whh_ref, bslab_ref,
                  out_ref, feats_ref):
    i = pl.program_id(0)
    bs = bslab_ref[...]                                   # (8, 128) bias slab

    def conv_banded(x, wk_ref, bias):
        # x: (H, W*Cin) value; wk_ref: (K, W*Cin, Wo*Cout); bias: (1, Wo*Cout)
        k, _, woc = wk_ref.shape
        ho = x.shape[0] - k + 1
        acc = jnp.zeros((ho, woc), jnp.float32)
        for kh in range(k):
            acc = acc + jnp.dot(x[kh:kh + ho, :], wk_ref[kh],
                                preferred_element_type=jnp.float32)
        return acc + bias

    # ---- conv path for sample i (all values live in vregs/VMEM) ----
    x1 = s1_ref[0]                                        # (5, 70)   seq1, NHWC-flat
    x2 = s2_ref[0]                                        # (21, 126) seq2, NHWC-flat

    y3 = conv_banded(x2, wk3_ref, bs[0:1, 0:78])          # conv3 -> (13, 78)
    y4 = conv_banded(y3, wk4_ref, bs[1:2, 0:30])          # conv4 -> (5, 30)

    # conv1 on concat([seq1(14ch), conv4_out(6ch)]): split weights, sum results.
    k1, _, woc1 = wk1a_ref.shape
    ho1 = x1.shape[0] - k1 + 1                            # 3
    acc1 = jnp.zeros((ho1, woc1), jnp.float32)
    for kh in range(k1):
        acc1 = acc1 + jnp.dot(x1[kh:kh + ho1, :], wk1a_ref[kh],
                              preferred_element_type=jnp.float32)
        acc1 = acc1 + jnp.dot(y4[kh:kh + ho1, :], wk1b_ref[kh],
                              preferred_element_type=jnp.float32)
    y1 = acc1 + bs[2:3, 0:96]                             # conv1 -> (3, 96)

    feats_i = conv_banded(y1, wk2_ref, bs[3:4, 0:16])     # conv2 -> (1, 16)
    feats_ref[i] = feats_i                                # row i of (T*B, 1, 16)

    # ---- last grid step: LSTM (2-layer, bidirectional, H=8) + Linear(16,1) ----
    @pl.when(i == pl.num_programs(0) - 1)
    def _lstm_head():
        B = out_ref.shape[0]
        n = feats_ref.shape[0]
        T = n // B
        H = 8
        f_all = feats_ref[...]                            # (T*B, 1, 16), t-major rows

        def sigmoid(v):                                   # EUP-friendly form
            return 0.5 * (jnp.tanh(0.5 * v) + 1.0)

        def cell(gates, c):                               # gates: (B, 32) = [i|f|g|o]
            ig = sigmoid(gates[:, 0:H])
            fg = sigmoid(gates[:, H:2 * H])
            gg = jnp.tanh(gates[:, 2 * H:3 * H])
            og = sigmoid(gates[:, 3 * H:4 * H])
            c_new = fg * c + ig * gg
            return og * jnp.tanh(c_new), c_new

        def run_layer(xp, whh_l):
            # xp: list of T (B, 64) pre-projections; whh_l: (2, 8, 32)
            outs = [[None] * T, [None] * T]
            for d, order in ((0, range(T)), (1, range(T - 1, -1, -1))):
                w_d = whh_l[d]
                h = jnp.zeros((B, H), jnp.float32)
                c = jnp.zeros((B, H), jnp.float32)
                for t in order:
                    gates = xp[t][:, d * 4 * H:(d + 1) * 4 * H] + jnp.dot(
                        h, w_d, preferred_element_type=jnp.float32)
                    h, c = cell(gates, c)
                    outs[d][t] = h
            return outs

        # layer 0: hoisted input projections (both directions at once)
        bg0 = bs[4:5, 0:64]
        xp0 = []
        for t in range(T):
            xt = f_all[t * B:(t + 1) * B, 0, :]           # (B, 16)
            xp0.append(jnp.dot(xt, wih_ref[0],
                               preferred_element_type=jnp.float32) + bg0)
        outs0 = run_layer(xp0, whh_ref[0])

        # layer 1: input at t is [h_fwd_l0[t] | h_bwd_l0[t]]
        bg1 = bs[5:6, 0:64]
        xp1 = []
        for t in range(T):
            x1t = jnp.concatenate([outs0[0][t], outs0[1][t]], axis=1)   # (B, 16)
            xp1.append(jnp.dot(x1t, wih_ref[1],
                               preferred_element_type=jnp.float32) + bg1)
        outs1 = run_layer(xp1, whh_ref[1])

        # Linear(16, 1) applied to the LSTM output at timestep t = 2
        hcat = jnp.concatenate([outs1[0][2], outs1[1][2]], axis=1)      # (B, 16)
        lw = bs[6:7, 0:16]
        lb = bs[6:7, 16:17]
        out_ref[...] = jnp.sum(hcat * lw, axis=1, keepdims=True) + lb


# --------------------------------------------------------------------------
# Wrapper: input layout + weight packing + pallas_call
# --------------------------------------------------------------------------
def cnn_lstm_forward(params, pressure, sh500, sh850, total_precipitation,
                     u_surface, u500, u850, v_surface, v850, v500, type_,
                     sh1000, v1000, u1000, dem, Z500, Z850, Z1000,
                     tmp500, tmp850, tmp1000):
    del type_  # `type` is sliced in the PyTorch forward but never used.
    B = pressure.shape[0]
    T = 3

    seq1 = jnp.stack([total_precipitation, u_surface, v_surface, u500, u850,
                      v850, v500, pressure, sh500, sh850, sh1000, v1000,
                      u1000, dem], axis=-1)[:, :T]          # (B, T, 5, 5, 14)
    seq2 = jnp.stack([Z500, Z850, Z1000, tmp500, tmp850, tmp1000],
                     axis=-1)[:, :T]                        # (B, T, 21, 21, 6)
    # (t, b)-major sample order -> feature rows for a fixed t are contiguous.
    s1 = jnp.transpose(seq1, (1, 0, 2, 3, 4)).reshape(T * B, 5, 5 * 14)
    s2 = jnp.transpose(seq2, (1, 0, 2, 3, 4)).reshape(T * B, 21, 21 * 6)
    s1 = s1.astype(jnp.float32)
    s2 = s2.astype(jnp.float32)

    # banded conv weight slabs (trace-time packing)
    wk3 = make_banded(params["conv3_w"], 21)                # (9, 126, 78)
    wk4 = make_banded(params["conv4_w"], 13)                # (9, 78, 30)
    wk1a = make_banded(params["conv1_w"][:, :14], 5)        # (3, 70, 96)
    wk1b = make_banded(params["conv1_w"][:, 14:], 5)        # (3, 30, 96)
    wk2 = make_banded(params["conv2_w"], 3)                 # (3, 96, 16)

    wih, whh, bg0, bg1 = pack_lstm(params["lstm"])

    def pad_row(v):
        v = v.astype(jnp.float32).reshape(-1)
        return jnp.pad(v, (0, 128 - v.shape[0]))

    bslab = jnp.stack([
        pad_row(jnp.tile(params["conv3_b"], 13)),           # row 0: 78 used
        pad_row(jnp.tile(params["conv4_b"], 5)),            # row 1: 30 used
        pad_row(jnp.tile(params["conv1_b"], 3)),            # row 2: 96 used
        pad_row(params["conv2_b"]),                         # row 3: 16 used
        pad_row(bg0),                                       # row 4: 64 used
        pad_row(bg1),                                       # row 5: 64 used
        pad_row(jnp.concatenate([params["lin_w"].reshape(-1),
                                 params["lin_b"].reshape(-1)])),  # row 6: 17 used
        jnp.zeros((128,), jnp.float32),
    ])                                                      # (8, 128)

    def full_spec(arr):
        nd = arr.ndim
        return pl.BlockSpec(arr.shape, lambda i, _nd=nd: (0,) * _nd)

    def sample_spec(arr):
        return pl.BlockSpec((1,) + arr.shape[1:], lambda i: (i, 0, 0))

    n = T * B
    return pl.pallas_call(
        _fused_kernel,
        out_shape=jax.ShapeDtypeStruct((B, 1), jnp.float32),
        grid=(n,),
        in_specs=[
            sample_spec(s1),
            sample_spec(s2),
            full_spec(wk3), full_spec(wk4),
            full_spec(wk1a), full_spec(wk1b), full_spec(wk2),
            full_spec(wih), full_spec(whh), full_spec(bslab),
        ],
        out_specs=pl.BlockSpec((B, 1), lambda i: (0, 0)),
        scratch_shapes=[pltpu.VMEM((n, 1, 16), jnp.float32)],
        compiler_params=pltpu.CompilerParams(
            dimension_semantics=("arbitrary",)),
    )(s1, s2, wk3, wk4, wk1a, wk1b, wk2, wih, whh, bslab)


# --------------------------------------------------------------------------
# Parameters (deterministic, synthetic) and demo
# --------------------------------------------------------------------------
def init_params(key):
    ks = iter(jax.random.split(key, 32))

    def rnd(shape, scale=0.1):
        return (scale * jax.random.normal(next(ks), shape)).astype(jnp.float32)

    p = {
        "conv1_w": rnd((32, 20, 3, 3)), "conv1_b": rnd((32,)),
        "conv2_w": rnd((16, 32, 3, 3)), "conv2_b": rnd((16,)),
        "conv3_w": rnd((6, 6, 9, 9)),   "conv3_b": rnd((6,)),
        "conv4_w": rnd((6, 6, 9, 9)),   "conv4_b": rnd((6,)),
        "lin_w": rnd((1, 16)),          "lin_b": rnd((1,)),
    }
    lstm = {}
    for layer in range(2):
        in_dim = 16  # layer0: 16 conv features; layer1: 2*8 bidirectional hidden
        for d in range(2):
            lstm[(layer, d)] = (rnd((32, in_dim)), rnd((32, 8)),
                                rnd((32,)), rnd((32,)))
    p["lstm"] = lstm
    return p


if __name__ == "__main__":
    key = jax.random.PRNGKey(0)
    pkey, dkey = jax.random.split(key)
    params = init_params(pkey)

    B, T = 2, 3
    small_names = ["pressure", "sh500", "sh850", "total_precipitation",
                   "u_surface", "u500", "u850", "v_surface", "v850", "v500",
                   "type", "sh1000", "v1000", "u1000", "dem"]
    big_names = ["Z500", "Z850", "Z1000", "tmp500", "tmp850", "tmp1000"]
    dkeys = jax.random.split(dkey, len(small_names) + len(big_names))
    inputs = {}
    for i, name in enumerate(small_names):
        inputs[name] = jax.random.normal(dkeys[i], (B, T, 5, 5), jnp.float32)
    for j, name in enumerate(big_names):
        inputs[name] = jax.random.normal(dkeys[len(small_names) + j],
                                         (B, T, 21, 21), jnp.float32)

    fwd = jax.jit(cnn_lstm_forward)
    out = fwd(
        params,
        inputs["pressure"], inputs["sh500"], inputs["sh850"],
        inputs["total_precipitation"], inputs["u_surface"], inputs["u500"],
        inputs["u850"], inputs["v_surface"], inputs["v850"], inputs["v500"],
        inputs["type"], inputs["sh1000"], inputs["v1000"], inputs["u1000"],
        inputs["dem"], inputs["Z500"], inputs["Z850"], inputs["Z1000"],
        inputs["tmp500"], inputs["tmp850"], inputs["tmp1000"],
    )
    out = jax.block_until_ready(out)
    assert out.shape == (B, 1) and out.dtype == jnp.float32
    assert bool(jnp.all(jnp.isfinite(out)))
    print("KERNEL_OK")
</pallas_src>

<mosaic_0001>
module attributes {stable_mosaic.version = 11 : i64} {
  func.func @_fused_kernel(%arg0: i32, %arg1: memref<1x5x70xf32, #tpu.memory_space<vmem>>, %arg2: memref<1x21x126xf32, #tpu.memory_space<vmem>>, %arg3: memref<9x126x78xf32, #tpu.memory_space<vmem>>, %arg4: memref<9x78x30xf32, #tpu.memory_space<vmem>>, %arg5: memref<3x70x96xf32, #tpu.memory_space<vmem>>, %arg6: memref<3x30x96xf32, #tpu.memory_space<vmem>>, %arg7: memref<3x96x16xf32, #tpu.memory_space<vmem>>, %arg8: memref<2x16x64xf32, #tpu.memory_space<vmem>>, %arg9: memref<2x2x8x32xf32, #tpu.memory_space<vmem>>, %arg10: memref<8x128xf32, #tpu.memory_space<vmem>>, %arg11: memref<2x1xf32, #tpu.memory_space<vmem>>, %arg12: memref<6x1x16xf32, #tpu.memory_space<vmem>>) attributes {dimension_semantics = [#tpu.dimension_semantics<arbitrary>], iteration_bounds = array<i64: 6>, scalar_prefetch = 0 : i64, scratch_operands = 1 : i64, tpu.core_type = #tpu.core_type<tc>, window_params = [{transform_indices = @transform_0, window_bounds = array<i64: 1, 5, 70>}, {transform_indices = @transform_1, window_bounds = array<i64: 1, 21, 126>}, {pipeline_mode = #tpu.pipeline_mode<synchronous>, transform_indices = @transform_2, window_bounds = array<i64: 9, 126, 78>}, {pipeline_mode = #tpu.pipeline_mode<synchronous>, transform_indices = @transform_3, window_bounds = array<i64: 9, 78, 30>}, {pipeline_mode = #tpu.pipeline_mode<synchronous>, transform_indices = @transform_4, window_bounds = array<i64: 3, 70, 96>}, {pipeline_mode = #tpu.pipeline_mode<synchronous>, transform_indices = @transform_5, window_bounds = array<i64: 3, 30, 96>}, {pipeline_mode = #tpu.pipeline_mode<synchronous>, transform_indices = @transform_6, window_bounds = array<i64: 3, 96, 16>}, {pipeline_mode = #tpu.pipeline_mode<synchronous>, transform_indices = @transform_7, window_bounds = array<i64: 2, 16, 64>}, {pipeline_mode = #tpu.pipeline_mode<synchronous>, transform_indices = @transform_8, window_bounds = array<i64: 2, 2, 8, 32>}, {pipeline_mode = #tpu.pipeline_mode<synchronous>, transform_indices = @transform_9, window_bounds = array<i64: 8, 128>}, {pipeline_mode = #tpu.pipeline_mode<synchronous>, transform_indices = @transform_10, window_bounds = array<i64: 2, 1>}]} {
    %c0 = arith.constant 0 : index
    %c0_0 = arith.constant 0 : index
    %0 = vector.load %arg10[%c0, %c0_0] : memref<8x128xf32, #tpu.memory_space<vmem>>, vector<8x128xf32>
    %c0_1 = arith.constant 0 : index
    %c0_2 = arith.constant 0 : index
    %c0_3 = arith.constant 0 : index
    %1 = vector.load %arg1[%c0_1, %c0_2, %c0_3] : memref<1x5x70xf32, #tpu.memory_space<vmem>>, vector<1x5x70xf32>
    %2 = vector.shape_cast %1 : vector<1x5x70xf32> to vector<5x70xf32>
    %c0_4 = arith.constant 0 : index
    %c0_5 = arith.constant 0 : index
    %c0_6 = arith.constant 0 : index
    %3 = vector.load %arg2[%c0_4, %c0_5, %c0_6] : memref<1x21x126xf32, #tpu.memory_space<vmem>>, vector<1x21x126xf32>
    %4 = vector.shape_cast %3 : vector<1x21x126xf32> to vector<21x126xf32>
    %5 = vector.extract_strided_slice %0 {offsets = [0, 0], sizes = [1, 78], strides = [1, 1]} : vector<8x128xf32> to vector<1x78xf32>
    %cst = arith.constant 0.000000e+00 : f32
    %6 = vector.broadcast %cst : f32 to vector<13x78xf32>
    %7 = vector.extract_strided_slice %4 {offsets = [0, 0], sizes = [13, 126], strides = [1, 1]} : vector<21x126xf32> to vector<13x126xf32>
    %c0_7 = arith.constant 0 : index
    %c0_8 = arith.constant 0 : index
    %c0_9 = arith.constant 0 : index
    %8 = vector.load %arg3[%c0_7, %c0_8, %c0_9] : memref<9x126x78xf32, #tpu.memory_space<vmem>>, vector<1x126x78xf32>
    %9 = vector.shape_cast %8 : vector<1x126x78xf32> to vector<126x78xf32>
    %cst_10 = arith.constant dense<0.000000e+00> : vector<13x78xf32>
    %10 = tpu.matmul %7, %9, %cst_10 {dimension_numbers = #tpu.dot_dimension_numbers<[1], [0], [0], [1], [0, 0, 1, 1], [], []>} : vector<13x126xf32>, vector<126x78xf32>, vector<13x78xf32> -> vector<13x78xf32>
    %11 = arith.addf %6, %10 : vector<13x78xf32>
    %12 = vector.extract_strided_slice %4 {offsets = [1, 0], sizes = [13, 126], strides = [1, 1]} : vector<21x126xf32> to vector<13x126xf32>
    %c1 = arith.constant 1 : index
    %c0_11 = arith.constant 0 : index
    %c0_12 = arith.constant 0 : index
    %13 = vector.load %arg3[%c1, %c0_11, %c0_12] : memref<9x126x78xf32, #tpu.memory_space<vmem>>, vector<1x126x78xf32>
    %14 = vector.shape_cast %13 : vector<1x126x78xf32> to vector<126x78xf32>
    %cst_13 = arith.constant dense<0.000000e+00> : vector<13x78xf32>
    %15 = tpu.matmul %12, %14, %cst_13 {dimension_numbers = #tpu.dot_dimension_numbers<[1], [0], [0], [1], [0, 0, 1, 1], [], []>} : vector<13x126xf32>, vector<126x78xf32>, vector<13x78xf32> -> vector<13x78xf32>
    %16 = arith.addf %11, %15 : vector<13x78xf32>
    %17 = vector.extract_strided_slice %4 {offsets = [2, 0], sizes = [13, 126], strides = [1, 1]} : vector<21x126xf32> to vector<13x126xf32>
    %c2 = arith.constant 2 : index
    %c0_14 = arith.constant 0 : index
    %c0_15 = arith.constant 0 : index
    %18 = vector.load %arg3[%c2, %c0_14, %c0_15] : memref<9x126x78xf32, #tpu.memory_space<vmem>>, vector<1x126x78xf32>
    %19 = vector.shape_cast %18 : vector<1x126x78xf32> to vector<126x78xf32>
    %cst_16 = arith.constant dense<0.000000e+00> : vector<13x78xf32>
    %20 = tpu.matmul %17, %19, %cst_16 {dimension_numbers = #tpu.dot_dimension_numbers<[1], [0], [0], [1], [0, 0, 1, 1], [], []>} : vector<13x126xf32>, vector<126x78xf32>, vector<13x78xf32> -> vector<13x78xf32>
    %21 = arith.addf %16, %20 : vector<13x78xf32>
    %22 = vector.extract_strided_slice %4 {offsets = [3, 0], sizes = [13, 126], strides = [1, 1]} : vector<21x126xf32> to vector<13x126xf32>
    %c3 = arith.constant 3 : index
    %c0_17 = arith.constant 0 : index
    %c0_18 = arith.constant 0 : index
    %23 = vector.load %arg3[%c3, %c0_17, %c0_18] : memref<9x126x78xf32, #tpu.memory_space<vmem>>, vector<1x126x78xf32>
    %24 = vector.shape_cast %23 : vector<1x126x78xf32> to vector<126x78xf32>
    %cst_19 = arith.constant dense<0.000000e+00> : vector<13x78xf32>
    %25 = tpu.matmul %22, %24, %cst_19 {dimension_numbers = #tpu.dot_dimension_numbers<[1], [0], [0], [1], [0, 0, 1, 1], [], []>} : vector<13x126xf32>, vector<126x78xf32>, vector<13x78xf32> -> vector<13x78xf32>
    %26 = arith.addf %21, %25 : vector<13x78xf32>
    %27 = vector.extract_strided_slice %4 {offsets = [4, 0], sizes = [13, 126], strides = [1, 1]} : vector<21x126xf32> to vector<13x126xf32>
    %c4 = arith.constant 4 : index
    %c0_20 = arith.constant 0 : index
    %c0_21 = arith.constant 0 : index
    %28 = vector.load %arg3[%c4, %c0_20, %c0_21] : memref<9x126x78xf32, #tpu.memory_space<vmem>>, vector<1x126x78xf32>
    %29 = vector.shape_cast %28 : vector<1x126x78xf32> to vector<126x78xf32>
    %cst_22 = arith.constant dense<0.000000e+00> : vector<13x78xf32>
    %30 = tpu.matmul %27, %29, %cst_22 {dimension_numbers = #tpu.dot_dimension_numbers<[1], [0], [0], [1], [0, 0, 1, 1], [], []>} : vector<13x126xf32>, vector<126x78xf32>, vector<13x78xf32> -> vector<13x78xf32>
    %31 = arith.addf %26, %30 : vector<13x78xf32>
    %32 = vector.extract_strided_slice %4 {offsets = [5, 0], sizes = [13, 126], strides = [1, 1]} : vector<21x126xf32> to vector<13x126xf32>
    %c5 = arith.constant 5 : index
    %c0_23 = arith.constant 0 : index
    %c0_24 = arith.constant 0 : index
    %33 = vector.load %arg3[%c5, %c0_23, %c0_24] : memref<9x126x78xf32, #tpu.memory_space<vmem>>, vector<1x126x78xf32>
    %34 = vector.shape_cast %33 : vector<1x126x78xf32> to vector<126x78xf32>
    %cst_25 = arith.constant dense<0.000000e+00> : vector<13x78xf32>
    %35 = tpu.matmul %32, %34, %cst_25 {dimension_numbers = #tpu.dot_dimension_numbers<[1], [0], [0], [1], [0, 0, 1, 1], [], []>} : vector<13x126xf32>, vector<126x78xf32>, vector<13x78xf32> -> vector<13x78xf32>
    %36 = arith.addf %31, %35 : vector<13x78xf32>
    %37 = vector.extract_strided_slice %4 {offsets = [6, 0], sizes = [13, 126], strides = [1, 1]} : vector<21x126xf32> to vector<13x126xf32>
    %c6 = arith.constant 6 : index
    %c0_26 = arith.constant 0 : index
    %c0_27 = arith.constant 0 : index
    %38 = vector.load %arg3[%c6, %c0_26, %c0_27] : memref<9x126x78xf32, #tpu.memory_space<vmem>>, vector<1x126x78xf32>
    %39 = vector.shape_cast %38 : vector<1x126x78xf32> to vector<126x78xf32>
    %cst_28 = arith.constant dense<0.000000e+00> : vector<13x78xf32>
    %40 = tpu.matmul %37, %39, %cst_28 {dimension_numbers = #tpu.dot_dimension_numbers<[1], [0], [0], [1], [0, 0, 1, 1], [], []>} : vector<13x126xf32>, vector<126x78xf32>, vector<13x78xf32> -> vector<13x78xf32>
    %41 = arith.addf %36, %40 : vector<13x78xf32>
    %42 = vector.extract_strided_slice %4 {offsets = [7, 0], sizes = [13, 126], strides = [1, 1]} : vector<21x126xf32> to vector<13x126xf32>
    %c7 = arith.constant 7 : index
    %c0_29 = arith.constant 0 : index
    %c0_30 = arith.constant 0 : index
    %43 = vector.load %arg3[%c7, %c0_29, %c0_30] : memref<9x126x78xf32, #tpu.memory_space<vmem>>, vector<1x126x78xf32>
    %44 = vector.shape_cast %43 : vector<1x126x78xf32> to vector<126x78xf32>
    %cst_31 = arith.constant dense<0.000000e+00> : vector<13x78xf32>
    %45 = tpu.matmul %42, %44, %cst_31 {dimension_numbers = #tpu.dot_dimension_numbers<[1], [0], [0], [1], [0, 0, 1, 1], [], []>} : vector<13x126xf32>, vector<126x78xf32>, vector<13x78xf32> -> vector<13x78xf32>
    %46 = arith.addf %41, %45 : vector<13x78xf32>
    %47 = vector.extract_strided_slice %4 {offsets = [8, 0], sizes = [13, 126], strides = [1, 1]} : vector<21x126xf32> to vector<13x126xf32>
    %c8 = arith.constant 8 : index
    %c0_32 = arith.constant 0 : index
    %c0_33 = arith.constant 0 : index
    %48 = vector.load %arg3[%c8, %c0_32, %c0_33] : memref<9x126x78xf32, #tpu.memory_space<vmem>>, vector<1x126x78xf32>
    %49 = vector.shape_cast %48 : vector<1x126x78xf32> to vector<126x78xf32>
    %cst_34 = arith.constant dense<0.000000e+00> : vector<13x78xf32>
    %50 = tpu.matmul %47, %49, %cst_34 {dimension_numbers = #tpu.dot_dimension_numbers<[1], [0], [0], [1], [0, 0, 1, 1], [], []>} : vector<13x126xf32>, vector<126x78xf32>, vector<13x78xf32> -> vector<13x78xf32>
    %51 = arith.addf %46, %50 : vector<13x78xf32>
    %52 = vector.broadcast %5 : vector<1x78xf32> to vector<13x78xf32>
    %53 = arith.addf %51, %52 : vector<13x78xf32>
    %54 = vector.extract_strided_slice %0 {offsets = [1, 0], sizes = [1, 30], strides = [1, 1]} : vector<8x128xf32> to vector<1x30xf32>
    %cst_35 = arith.constant 0.000000e+00 : f32
    %55 = vector.broadcast %cst_35 : f32 to vector<5x30xf32>
    %56 = vector.extract_strided_slice %53 {offsets = [0, 0], sizes = [5, 78], strides = [1, 1]} : vector<13x78xf32> to vector<5x78xf32>
    %c0_36 = arith.constant 0 : index
    %c0_37 = arith.constant 0 : index
    %c0_38 = arith.constant 0 : index
    %57 = vector.load %arg4[%c0_36, %c0_37, %c0_38] : memref<9x78x30xf32, #tpu.memory_space<vmem>>, vector<1x78x30xf32>
    %58 = vector.shape_cast %57 : vector<1x78x30xf32> to vector<78x30xf32>
    %cst_39 = arith.constant dense<0.000000e+00> : vector<5x30xf32>
    %59 = tpu.matmul %56, %58, %cst_39 {dimension_numbers = #tpu.dot_dimension_numbers<[1], [0], [0], [1], [0, 0, 1, 1], [], []>} : vector<5x78xf32>, vector<78x30xf32>, vector<5x30xf32> -> vector<5x30xf32>
    %60 = arith.addf %55, %59 : vector<5x30xf32>
    %61 = vector.extract_strided_slice %53 {offsets = [1, 0], sizes = [5, 78], strides = [1, 1]} : vector<13x78xf32> to vector<5x78xf32>
    %c1_40 = arith.constant 1 : index
    %c0_41 = arith.constant 0 : index
    %c0_42 = arith.constant 0 : index
    %62 = vector.load %arg4[%c1_40, %c0_41, %c0_42] : memref<9x78x30xf32, #tpu.memory_space<vmem>>, vector<1x78x30xf32>
    %63 = vector.shape_cast %62 : vector<1x78x30xf32> to vector<78x30xf32>
    %cst_43 = arith.constant dense<0.000000e+00> : vector<5x30xf32>
    %64 = tpu.matmul %61, %63, %cst_43 {dimension_numbers = #tpu.dot_dimension_numbers<[1], [0], [0], [1], [0, 0, 1, 1], [], []>} : vector<5x78xf32>, vector<78x30xf32>, vector<5x30xf32> -> vector<5x30xf32>
    %65 = arith.addf %60, %64 : vector<5x30xf32>
    %66 = vector.extract_strided_slice %53 {offsets = [2, 0], sizes = [5, 78], strides = [1, 1]} : vector<13x78xf32> to vector<5x78xf32>
    %c2_44 = arith.constant 2 : index
    %c0_45 = arith.constant 0 : index
    %c0_46 = arith.constant 0 : index
    %67 = vector.load %arg4[%c2_44, %c0_45, %c0_46] : memref<9x78x30xf32, #tpu.memory_space<vmem>>, vector<1x78x30xf32>
    %68 = vector.shape_cast %67 : vector<1x78x30xf32> to vector<78x30xf32>
    %cst_47 = arith.constant dense<0.000000e+00> : vector<5x30xf32>
    %69 = tpu.matmul %66, %68, %cst_47 {dimension_numbers = #tpu.dot_dimension_numbers<[1], [0], [0], [1], [0, 0, 1, 1], [], []>} : vector<5x78xf32>, vector<78x30xf32>, vector<5x30xf32> -> vector<5x30xf32>
    %70 = arith.addf %65, %69 : vector<5x30xf32>
    %71 = vector.extract_strided_slice %53 {offsets = [3, 0], sizes = [5, 78], strides = [1, 1]} : vector<13x78xf32> to vector<5x78xf32>
    %c3_48 = arith.constant 3 : index
    %c0_49 = arith.constant 0 : index
    %c0_50 = arith.constant 0 : index
    %72 = vector.load %arg4[%c3_48, %c0_49, %c0_50] : memref<9x78x30xf32, #tpu.memory_space<vmem>>, vector<1x78x30xf32>
    %73 = vector.shape_cast %72 : vector<1x78x30xf32> to vector<78x30xf32>
    %cst_51 = arith.constant dense<0.000000e+00> : vector<5x30xf32>
    %74 = tpu.matmul %71, %73, %cst_51 {dimension_numbers = #tpu.dot_dimension_numbers<[1], [0], [0], [1], [0, 0, 1, 1], [], []>} : vector<5x78xf32>, vector<78x30xf32>, vector<5x30xf32> -> vector<5x30xf32>
    %75 = arith.addf %70, %74 : vector<5x30xf32>
    %76 = vector.extract_strided_slice %53 {offsets = [4, 0], sizes = [5, 78], strides = [1, 1]} : vector<13x78xf32> to vector<5x78xf32>
    %c4_52 = arith.constant 4 : index
    %c0_53 = arith.constant 0 : index
    %c0_54 = arith.constant 0 : index
    %77 = vector.load %arg4[%c4_52, %c0_53, %c0_54] : memref<9x78x30xf32, #tpu.memory_space<vmem>>, vector<1x78x30xf32>
    %78 = vector.shape_cast %77 : vector<1x78x30xf32> to vector<78x30xf32>
    %cst_55 = arith.constant dense<0.000000e+00> : vector<5x30xf32>
    %79 = tpu.matmul %76, %78, %cst_55 {dimension_numbers = #tpu.dot_dimension_numbers<[1], [0], [0], [1], [0, 0, 1, 1], [], []>} : vector<5x78xf32>, vector<78x30xf32>, vector<5x30xf32> -> vector<5x30xf32>
    %80 = arith.addf %75, %79 : vector<5x30xf32>
    %81 = vector.extract_strided_slice %53 {offsets = [5, 0], sizes = [5, 78], strides = [1, 1]} : vector<13x78xf32> to vector<5x78xf32>
    %c5_56 = arith.constant 5 : index
    %c0_57 = arith.constant 0 : index
    %c0_58 = arith.constant 0 : index
    %82 = vector.load %arg4[%c5_56, %c0_57, %c0_58] : memref<9x78x30xf32, #tpu.memory_space<vmem>>, vector<1x78x30xf32>
    %83 = vector.shape_cast %82 : vector<1x78x30xf32> to vector<78x30xf32>
    %cst_59 = arith.constant dense<0.000000e+00> : vector<5x30xf32>
    %84 = tpu.matmul %81, %83, %cst_59 {dimension_numbers = #tpu.dot_dimension_numbers<[1], [0], [0], [1], [0, 0, 1, 1], [], []>} : vector<5x78xf32>, vector<78x30xf32>, vector<5x30xf32> -> vector<5x30xf32>
    %85 = arith.addf %80, %84 : vector<5x30xf32>
    %86 = vector.extract_strided_slice %53 {offsets = [6, 0], sizes = [5, 78], strides = [1, 1]} : vector<13x78xf32> to vector<5x78xf32>
    %c6_60 = arith.constant 6 : index
    %c0_61 = arith.constant 0 : index
    %c0_62 = arith.constant 0 : index
    %87 = vector.load %arg4[%c6_60, %c0_61, %c0_62] : memref<9x78x30xf32, #tpu.memory_space<vmem>>, vector<1x78x30xf32>
    %88 = vector.shape_cast %87 : vector<1x78x30xf32> to vector<78x30xf32>
    %cst_63 = arith.constant dense<0.000000e+00> : vector<5x30xf32>
    %89 = tpu.matmul %86, %88, %cst_63 {dimension_numbers = #tpu.dot_dimension_numbers<[1], [0], [0], [1], [0, 0, 1, 1], [], []>} : vector<5x78xf32>, vector<78x30xf32>, vector<5x30xf32> -> vector<5x30xf32>
    %90 = arith.addf %85, %89 : vector<5x30xf32>
    %91 = vector.extract_strided_slice %53 {offsets = [7, 0], sizes = [5, 78], strides = [1, 1]} : vector<13x78xf32> to vector<5x78xf32>
    %c7_64 = arith.constant 7 : index
    %c0_65 = arith.constant 0 : index
    %c0_66 = arith.constant 0 : index
    %92 = vector.load %arg4[%c7_64, %c0_65, %c0_66] : memref<9x78x30xf32, #tpu.memory_space<vmem>>, vector<1x78x30xf32>
    %93 = vector.shape_cast %92 : vector<1x78x30xf32> to vector<78x30xf32>
    %cst_67 = arith.constant dense<0.000000e+00> : vector<5x30xf32>
    %94 = tpu.matmul %91, %93, %cst_67 {dimension_numbers = #tpu.dot_dimension_numbers<[1], [0], [0], [1], [0, 0, 1, 1], [], []>} : vector<5x78xf32>, vector<78x30xf32>, vector<5x30xf32> -> vector<5x30xf32>
    %95 = arith.addf %90, %94 : vector<5x30xf32>
    %96 = vector.extract_strided_slice %53 {offsets = [8, 0], sizes = [5, 78], strides = [1, 1]} : vector<13x78xf32> to vector<5x78xf32>
    %c8_68 = arith.constant 8 : index
    %c0_69 = arith.constant 0 : index
    %c0_70 = arith.constant 0 : index
    %97 = vector.load %arg4[%c8_68, %c0_69, %c0_70] : memref<9x78x30xf32, #tpu.memory_space<vmem>>, vector<1x78x30xf32>
    %98 = vector.shape_cast %97 : vector<1x78x30xf32> to vector<78x30xf32>
    %cst_71 = arith.constant dense<0.000000e+00> : vector<5x30xf32>
    %99 = tpu.matmul %96, %98, %cst_71 {dimension_numbers = #tpu.dot_dimension_numbers<[1], [0], [0], [1], [0, 0, 1, 1], [], []>} : vector<5x78xf32>, vector<78x30xf32>, vector<5x30xf32> -> vector<5x30xf32>
    %100 = arith.addf %95, %99 : vector<5x30xf32>
    %101 = vector.broadcast %54 : vector<1x30xf32> to vector<5x30xf32>
    %102 = arith.addf %100, %101 : vector<5x30xf32>
    %cst_72 = arith.constant 0.000000e+00 : f32
    %103 = vector.broadcast %cst_72 : f32 to vector<3x96xf32>
    %104 = vector.extract_strided_slice %2 {offsets = [0, 0], sizes = [3, 70], strides = [1, 1]} : vector<5x70xf32> to vector<3x70xf32>
    %c0_73 = arith.constant 0 : index
    %c0_74 = arith.constant 0 : index
    %c0_75 = arith.constant 0 : index
    %105 = vector.load %arg5[%c0_73, %c0_74, %c0_75] : memref<3x70x96xf32, #tpu.memory_space<vmem>>, vector<1x70x96xf32>
    %106 = vector.shape_cast %105 : vector<1x70x96xf32> to vector<70x96xf32>
    %cst_76 = arith.constant dense<0.000000e+00> : vector<3x96xf32>
    %107 = tpu.matmul %104, %106, %cst_76 {dimension_numbers = #tpu.dot_dimension_numbers<[1], [0], [0], [1], [0, 0, 1, 1], [], []>} : vector<3x70xf32>, vector<70x96xf32>, vector<3x96xf32> -> vector<3x96xf32>
    %108 = arith.addf %103, %107 : vector<3x96xf32>
    %109 = vector.extract_strided_slice %102 {offsets = [0, 0], sizes = [3, 30], strides = [1, 1]} : vector<5x30xf32> to vector<3x30xf32>
    %c0_77 = arith.constant 0 : index
    %c0_78 = arith.constant 0 : index
    %c0_79 = arith.constant 0 : index
    %110 = vector.load %arg6[%c0_77, %c0_78, %c0_79] : memref<3x30x96xf32, #tpu.memory_space<vmem>>, vector<1x30x96xf32>
    %111 = vector.shape_cast %110 : vector<1x30x96xf32> to vector<30x96xf32>
    %cst_80 = arith.constant dense<0.000000e+00> : vector<3x96xf32>
    %112 = tpu.matmul %109, %111, %cst_80 {dimension_numbers = #tpu.dot_dimension_numbers<[1], [0], [0], [1], [0, 0, 1, 1], [], []>} : vector<3x30xf32>, vector<30x96xf32>, vector<3x96xf32> -> vector<3x96xf32>
    %113 = arith.addf %108, %112 : vector<3x96xf32>
    %114 = vector.extract_strided_slice %2 {offsets = [1, 0], sizes = [3, 70], strides = [1, 1]} : vector<5x70xf32> to vector<3x70xf32>
    %c1_81 = arith.constant 1 : index
    %c0_82 = arith.constant 0 : index
    %c0_83 = arith.constant 0 : index
    %115 = vector.load %arg5[%c1_81, %c0_82, %c0_83] : memref<3x70x96xf32, #tpu.memory_space<vmem>>, vector<1x70x96xf32>
    %116 = vector.shape_cast %115 : vector<1x70x96xf32> to vector<70x96xf32>
    %cst_84 = arith.constant dense<0.000000e+00> : vector<3x96xf32>
    %117 = tpu.matmul %114, %116, %cst_84 {dimension_numbers = #tpu.dot_dimension_numbers<[1], [0], [0], [1], [0, 0, 1, 1], [], []>} : vector<3x70xf32>, vector<70x96xf32>, vector<3x96xf32> -> vector<3x96xf32>
    %118 = arith.addf %113, %117 : vector<3x96xf32>
    %119 = vector.extract_strided_slice %102 {offsets = [1, 0], sizes = [3, 30], strides = [1, 1]} : vector<5x30xf32> to vector<3x30xf32>
    %c1_85 = arith.constant 1 : index
    %c0_86 = arith.constant 0 : index
    %c0_87 = arith.constant 0 : index
    %120 = vector.load %arg6[%c1_85, %c0_86, %c0_87] : memref<3x30x96xf32, #tpu.memory_space<vmem>>, vector<1x30x96xf32>
    %121 = vector.shape_cast %120 : vector<1x30x96xf32> to vector<30x96xf32>
    %cst_88 = arith.constant dense<0.000000e+00> : vector<3x96xf32>
    %122 = tpu.matmul %119, %121, %cst_88 {dimension_numbers = #tpu.dot_dimension_numbers<[1], [0], [0], [1], [0, 0, 1, 1], [], []>} : vector<3x30xf32>, vector<30x96xf32>, vector<3x96xf32> -> vector<3x96xf32>
    %123 = arith.addf %118, %122 : vector<3x96xf32>
    %124 = vector.extract_strided_slice %2 {offsets = [2, 0], sizes = [3, 70], strides = [1, 1]} : vector<5x70xf32> to vector<3x70xf32>
    %c2_89 = arith.constant 2 : index
    %c0_90 = arith.constant 0 : index
    %c0_91 = arith.constant 0 : index
    %125 = vector.load %arg5[%c2_89, %c0_90, %c0_91] : memref<3x70x96xf32, #tpu.memory_space<vmem>>, vector<1x70x96xf32>
    %126 = vector.shape_cast %125 : vector<1x70x96xf32> to vector<70x96xf32>
    %cst_92 = arith.constant dense<0.000000e+00> : vector<3x96xf32>
    %127 = tpu.matmul %124, %126, %cst_92 {dimension_numbers = #tpu.dot_dimension_numbers<[1], [0], [0], [1], [0, 0, 1, 1], [], []>} : vector<3x70xf32>, vector<70x96xf32>, vector<3x96xf32> -> vector<3x96xf32>
    %128 = arith.addf %123, %127 : vector<3x96xf32>
    %129 = vector.extract_strided_slice %102 {offsets = [2, 0], sizes = [3, 30], strides = [1, 1]} : vector<5x30xf32> to vector<3x30xf32>
    %c2_93 = arith.constant 2 : index
    %c0_94 = arith.constant 0 : index
    %c0_95 = arith.constant 0 : index
    %130 = vector.load %arg6[%c2_93, %c0_94, %c0_95] : memref<3x30x96xf32, #tpu.memory_space<vmem>>, vector<1x30x96xf32>
    %131 = vector.shape_cast %130 : vector<1x30x96xf32> to vector<30x96xf32>
    %cst_96 = arith.constant dense<0.000000e+00> : vector<3x96xf32>
    %132 = tpu.matmul %129, %131, %cst_96 {dimension_numbers = #tpu.dot_dimension_numbers<[1], [0], [0], [1], [0, 0, 1, 1], [], []>} : vector<3x30xf32>, vector<30x96xf32>, vector<3x96xf32> -> vector<3x96xf32>
    %133 = arith.addf %128, %132 : vector<3x96xf32>
    %134 = vector.extract_strided_slice %0 {offsets = [2, 0], sizes = [1, 96], strides = [1, 1]} : vector<8x128xf32> to vector<1x96xf32>
    %135 = vector.broadcast %134 : vector<1x96xf32> to vector<3x96xf32>
    %136 = arith.addf %133, %135 : vector<3x96xf32>
    %137 = vector.extract_strided_slice %0 {offsets = [3, 0], sizes = [1, 16], strides = [1, 1]} : vector<8x128xf32> to vector<1x16xf32>
    %cst_97 = arith.constant 0.000000e+00 : f32
    %138 = vector.broadcast %cst_97 : f32 to vector<1x16xf32>
    %139 = vector.extract_strided_slice %136 {offsets = [0, 0], sizes = [1, 96], strides = [1, 1]} : vector<3x96xf32> to vector<1x96xf32>
    %c0_98 = arith.constant 0 : index
    %c0_99 = arith.constant 0 : index
    %c0_100 = arith.constant 0 : index
    %140 = vector.load %arg7[%c0_98, %c0_99, %c0_100] : memref<3x96x16xf32, #tpu.memory_space<vmem>>, vector<1x96x16xf32>
    %141 = vector.shape_cast %140 : vector<1x96x16xf32> to vector<96x16xf32>
    %cst_101 = arith.constant dense<0.000000e+00> : vector<1x16xf32>
    %142 = tpu.matmul %139, %141, %cst_101 {dimension_numbers = #tpu.dot_dimension_numbers<[1], [0], [0], [1], [0, 0, 1, 1], [], []>} : vector<1x96xf32>, vector<96x16xf32>, vector<1x16xf32> -> vector<1x16xf32>
    %143 = arith.addf %138, %142 : vector<1x16xf32>
    %144 = vector.extract_strided_slice %136 {offsets = [1, 0], sizes = [1, 96], strides = [1, 1]} : vector<3x96xf32> to vector<1x96xf32>
    %c1_102 = arith.constant 1 : index
    %c0_103 = arith.constant 0 : index
    %c0_104 = arith.constant 0 : index
    %145 = vector.load %arg7[%c1_102, %c0_103, %c0_104] : memref<3x96x16xf32, #tpu.memory_space<vmem>>, vector<1x96x16xf32>
    %146 = vector.shape_cast %145 : vector<1x96x16xf32> to vector<96x16xf32>
    %cst_105 = arith.constant dense<0.000000e+00> : vector<1x16xf32>
    %147 = tpu.matmul %144, %146, %cst_105 {dimension_numbers = #tpu.dot_dimension_numbers<[1], [0], [0], [1], [0, 0, 1, 1], [], []>} : vector<1x96xf32>, vector<96x16xf32>, vector<1x16xf32> -> vector<1x16xf32>
    %148 = arith.addf %143, %147 : vector<1x16xf32>
    %149 = vector.extract_strided_slice %136 {offsets = [2, 0], sizes = [1, 96], strides = [1, 1]} : vector<3x96xf32> to vector<1x96xf32>
    %c2_106 = arith.constant 2 : index
    %c0_107 = arith.constant 0 : index
    %c0_108 = arith.constant 0 : index
    %150 = vector.load %arg7[%c2_106, %c0_107, %c0_108] : memref<3x96x16xf32, #tpu.memory_space<vmem>>, vector<1x96x16xf32>
    %151 = vector.shape_cast %150 : vector<1x96x16xf32> to vector<96x16xf32>
    %cst_109 = arith.constant dense<0.000000e+00> : vector<1x16xf32>
    %152 = tpu.matmul %149, %151, %cst_109 {dimension_numbers = #tpu.dot_dimension_numbers<[1], [0], [0], [1], [0, 0, 1, 1], [], []>} : vector<1x96xf32>, vector<96x16xf32>, vector<1x16xf32> -> vector<1x16xf32>
    %153 = arith.addf %148, %152 : vector<1x16xf32>
    %154 = arith.addf %153, %137 : vector<1x16xf32>
    %155 = arith.index_cast %arg0 : i32 to index
    %c0_110 = arith.constant 0 : index
    %c0_111 = arith.constant 0 : index
    %156 = vector.load %arg12[%155, %c0_110, %c0_111] : memref<6x1x16xf32, #tpu.memory_space<vmem>>, vector<1x1x16xf32>
    %157 = vector.shape_cast %156 : vector<1x1x16xf32> to vector<1x16xf32>
    %158 = vector.shape_cast %154 : vector<1x16xf32> to vector<1x1x16xf32>
    tpu.vector_store %arg12[%155, %c0_110, %c0_111], %158 {strides = array<i32>} : memref<6x1x16xf32, #tpu.memory_space<vmem>>, vector<1x1x16xf32>,
    %c5_i32 = arith.constant 5 : i32
    %159 = arith.cmpi eq, %arg0, %c5_i32 : i32
    %160 = arith.extui %159 : i1 to i32
    %c0_i32 = arith.constant 0 : i32
    %161 = arith.cmpi ne, %160, %c0_i32 : i32
    scf.if %161 {
      %c0_112 = arith.constant 0 : index
      %c0_113 = arith.constant 0 : index
      %c0_114 = arith.constant 0 : index
      %162 = vector.load %arg12[%c0_112, %c0_113, %c0_114] : memref<6x1x16xf32, #tpu.memory_space<vmem>>, vector<6x1x16xf32>
      %163 = vector.extract_strided_slice %0 {offsets = [4, 0], sizes = [1, 64], strides = [1, 1]} : vector<8x128xf32> to vector<1x64xf32>
      %164 = vector.extract_strided_slice %162 {offsets = [0, 0, 0], sizes = [2, 1, 16], strides = [1, 1, 1]} : vector<6x1x16xf32> to vector<2x1x16xf32>
      %165 = vector.shape_cast %164 : vector<2x1x16xf32> to vector<2x16xf32>
      %c0_115 = arith.constant 0 : index
      %c0_116 = arith.constant 0 : index
      %c0_117 = arith.constant 0 : index
      %166 = vector.load %arg8[%c0_115, %c0_116, %c0_117] : memref<2x16x64xf32, #tpu.memory_space<vmem>>, vector<1x16x64xf32>
      %167 = vector.shape_cast %166 : vector<1x16x64xf32> to vector<16x64xf32>
      %cst_118 = arith.constant dense<0.000000e+00> : vector<2x64xf32>
      %168 = tpu.matmul %165, %167, %cst_118 {dimension_numbers = #tpu.dot_dimension_numbers<[1], [0], [0], [1], [0, 0, 1, 1], [], []>} : vector<2x16xf32>, vector<16x64xf32>, vector<2x64xf32> -> vector<2x64xf32>
      %169 = vector.broadcast %163 : vector<1x64xf32> to vector<2x64xf32>
      %170 = arith.addf %168, %169 : vector<2x64xf32>
      %171 = vector.extract_strided_slice %162 {offsets = [2, 0, 0], sizes = [2, 1, 16], strides = [1, 1, 1]} : vector<6x1x16xf32> to vector<2x1x16xf32>
      %172 = vector.shape_cast %171 : vector<2x1x16xf32> to vector<2x16xf32>
      %c0_119 = arith.constant 0 : index
      %c0_120 = arith.constant 0 : index
      %c0_121 = arith.constant 0 : index
      %173 = vector.load %arg8[%c0_119, %c0_120, %c0_121] : memref<2x16x64xf32, #tpu.memory_space<vmem>>, vector<1x16x64xf32>
      %174 = vector.shape_cast %173 : vector<1x16x64xf32> to vector<16x64xf32>
      %cst_122 = arith.constant dense<0.000000e+00> : vector<2x64xf32>
      %175 = tpu.matmul %172, %174, %cst_122 {dimension_numbers = #tpu.dot_dimension_numbers<[1], [0], [0], [1], [0, 0, 1, 1], [], []>} : vector<2x16xf32>, vector<16x64xf32>, vector<2x64xf32> -> vector<2x64xf32>
      %176 = vector.broadcast %163 : vector<1x64xf32> to vector<2x64xf32>
      %177 = arith.addf %175, %176 : vector<2x64xf32>
      %178 = vector.extract_strided_slice %162 {offsets = [4, 0, 0], sizes = [2, 1, 16], strides = [1, 1, 1]} : vector<6x1x16xf32> to vector<2x1x16xf32>
      %179 = vector.shape_cast %178 : vector<2x1x16xf32> to vector<2x16xf32>
      %c0_123 = arith.constant 0 : index
      %c0_124 = arith.constant 0 : index
      %c0_125 = arith.constant 0 : index
      %180 = vector.load %arg8[%c0_123, %c0_124, %c0_125] : memref<2x16x64xf32, #tpu.memory_space<vmem>>, vector<1x16x64xf32>
      %181 = vector.shape_cast %180 : vector<1x16x64xf32> to vector<16x64xf32>
      %cst_126 = arith.constant dense<0.000000e+00> : vector<2x64xf32>
      %182 = tpu.matmul %179, %181, %cst_126 {dimension_numbers = #tpu.dot_dimension_numbers<[1], [0], [0], [1], [0, 0, 1, 1], [], []>} : vector<2x16xf32>, vector<16x64xf32>, vector<2x64xf32> -> vector<2x64xf32>
      %183 = vector.broadcast %163 : vector<1x64xf32> to vector<2x64xf32>
      %184 = arith.addf %182, %183 : vector<2x64xf32>
      %c0_127 = arith.constant 0 : index
      %c0_128 = arith.constant 0 : index
      %c0_129 = arith.constant 0 : index
      %c0_130 = arith.constant 0 : index
      %185 = vector.load %arg9[%c0_127, %c0_128, %c0_129, %c0_130] : memref<2x2x8x32xf32, #tpu.memory_space<vmem>>, vector<1x2x8x32xf32>
      %186 = vector.shape_cast %185 : vector<1x2x8x32xf32> to vector<2x8x32xf32>
      %187 = vector.extract_strided_slice %186 {offsets = [0, 0, 0], sizes = [1, 8, 32], strides = [1, 1, 1]} : vector<2x8x32xf32> to vector<1x8x32xf32>
      %188 = vector.shape_cast %187 : vector<1x8x32xf32> to vector<8x32xf32>
      %cst_131 = arith.constant 0.000000e+00 : f32
      %189 = vector.broadcast %cst_131 : f32 to vector<2x8xf32>
      %cst_132 = arith.constant 0.000000e+00 : f32
      %190 = vector.broadcast %cst_132 : f32 to vector<2x8xf32>
      %191 = vector.extract_strided_slice %170 {offsets = [0, 0], sizes = [2, 32], strides = [1, 1]} : vector<2x64xf32> to vector<2x32xf32>
      %cst_133 = arith.constant dense<0.000000e+00> : vector<2x32xf32>
      %192 = tpu.matmul %189, %188, %cst_133 {dimension_numbers = #tpu.dot_dimension_numbers<[1], [0], [0], [1], [0, 0, 1, 1], [], []>} : vector<2x8xf32>, vector<8x32xf32>, vector<2x32xf32> -> vector<2x32xf32>
      %193 = arith.addf %191, %192 : vector<2x32xf32>
      %194 = vector.extract_strided_slice %193 {offsets = [0, 0], sizes = [2, 8], strides = [1, 1]} : vector<2x32xf32> to vector<2x8xf32>
      %cst_134 = arith.constant 5.000000e-01 : f32
      %195 = vector.broadcast %cst_134 : f32 to vector<2x8xf32>
      %196 = arith.mulf %195, %194 : vector<2x8xf32>
      %197 = math.tanh %196 : vector<2x8xf32>
      %cst_135 = arith.constant 1.000000e+00 : f32
      %198 = vector.broadcast %cst_135 : f32 to vector<2x8xf32>
      %199 = arith.addf %197, %198 : vector<2x8xf32>
      %cst_136 = arith.constant 5.000000e-01 : f32
      %200 = vector.broadcast %cst_136 : f32 to vector<2x8xf32>
      %201 = arith.mulf %200, %199 : vector<2x8xf32>
      %202 = vector.extract_strided_slice %193 {offsets = [0, 8], sizes = [2, 8], strides = [1, 1]} : vector<2x32xf32> to vector<2x8xf32>
      %cst_137 = arith.constant 5.000000e-01 : f32
      %203 = vector.broadcast %cst_137 : f32 to vector<2x8xf32>
      %204 = arith.mulf %203, %202 : vector<2x8xf32>
      %205 = math.tanh %204 : vector<2x8xf32>
      %cst_138 = arith.constant 1.000000e+00 : f32
      %206 = vector.broadcast %cst_138 : f32 to vector<2x8xf32>
      %207 = arith.addf %205, %206 : vector<2x8xf32>
      %cst_139 = arith.constant 5.000000e-01 : f32
      %208 = vector.broadcast %cst_139 : f32 to vector<2x8xf32>
      %209 = arith.mulf %208, %207 : vector<2x8xf32>
      %210 = vector.extract_strided_slice %193 {offsets = [0, 16], sizes = [2, 8], strides = [1, 1]} : vector<2x32xf32> to vector<2x8xf32>
      %211 = math.tanh %210 : vector<2x8xf32>
      %212 = vector.extract_strided_slice %193 {offsets = [0, 24], sizes = [2, 8], strides = [1, 1]} : vector<2x32xf32> to vector<2x8xf32>
      %cst_140 = arith.constant 5.000000e-01 : f32
      %213 = vector.broadcast %cst_140 : f32 to vector<2x8xf32>
      %214 = arith.mulf %213, %212 : vector<2x8xf32>
      %215 = math.tanh %214 : vector<2x8xf32>
      %cst_141 = arith.constant 1.000000e+00 : f32
      %216 = vector.broadcast %cst_141 : f32 to vector<2x8xf32>
      %217 = arith.addf %215, %216 : vector<2x8xf32>
      %cst_142 = arith.constant 5.000000e-01 : f32
      %218 = vector.broadcast %cst_142 : f32 to vector<2x8xf32>
      %219 = arith.mulf %218, %217 : vector<2x8xf32>
      %220 = arith.mulf %209, %190 : vector<2x8xf32>
      %221 = arith.mulf %201, %211 : vector<2x8xf32>
      %222 = arith.addf %220, %221 : vector<2x8xf32>
      %223 = math.tanh %222 : vector<2x8xf32>
      %224 = arith.mulf %219, %223 : vector<2x8xf32>
      %225 = vector.extract_strided_slice %177 {offsets = [0, 0], sizes = [2, 32], strides = [1, 1]} : vector<2x64xf32> to vector<2x32xf32>
      %cst_143 = arith.constant dense<0.000000e+00> : vector<2x32xf32>
      %226 = tpu.matmul %224, %188, %cst_143 {dimension_numbers = #tpu.dot_dimension_numbers<[1], [0], [0], [1], [0, 0, 1, 1], [], []>} : vector<2x8xf32>, vector<8x32xf32>, vector<2x32xf32> -> vector<2x32xf32>
      %227 = arith.addf %225, %226 : vector<2x32xf32>
      %228 = vector.extract_strided_slice %227 {offsets = [0, 0], sizes = [2, 8], strides = [1, 1]} : vector<2x32xf32> to vector<2x8xf32>
      %cst_144 = arith.constant 5.000000e-01 : f32
      %229 = vector.broadcast %cst_144 : f32 to vector<2x8xf32>
      %230 = arith.mulf %229, %228 : vector<2x8xf32>
      %231 = math.tanh %230 : vector<2x8xf32>
      %cst_145 = arith.constant 1.000000e+00 : f32
      %232 = vector.broadcast %cst_145 : f32 to vector<2x8xf32>
      %233 = arith.addf %231, %232 : vector<2x8xf32>
      %cst_146 = arith.constant 5.000000e-01 : f32
      %234 = vector.broadcast %cst_146 : f32 to vector<2x8xf32>
      %235 = arith.mulf %234, %233 : vector<2x8xf32>
      %236 = vector.extract_strided_slice %227 {offsets = [0, 8], sizes = [2, 8], strides = [1, 1]} : vector<2x32xf32> to vector<2x8xf32>
      %cst_147 = arith.constant 5.000000e-01 : f32
      %237 = vector.broadcast %cst_147 : f32 to vector<2x8xf32>
      %238 = arith.mulf %237, %236 : vector<2x8xf32>
      %239 = math.tanh %238 : vector<2x8xf32>
      %cst_148 = arith.constant 1.000000e+00 : f32
      %240 = vector.broadcast %cst_148 : f32 to vector<2x8xf32>
      %241 = arith.addf %239, %240 : vector<2x8xf32>
      %cst_149 = arith.constant 5.000000e-01 : f32
      %242 = vector.broadcast %cst_149 : f32 to vector<2x8xf32>
      %243 = arith.mulf %242, %241 : vector<2x8xf32>
      %244 = vector.extract_strided_slice %227 {offsets = [0, 16], sizes = [2, 8], strides = [1, 1]} : vector<2x32xf32> to vector<2x8xf32>
      %245 = math.tanh %244 : vector<2x8xf32>
      %246 = vector.extract_strided_slice %227 {offsets = [0, 24], sizes = [2, 8], strides = [1, 1]} : vector<2x32xf32> to vector<2x8xf32>
      %cst_150 = arith.constant 5.000000e-01 : f32
      %247 = vector.broadcast %cst_150 : f32 to vector<2x8xf32>
      %248 = arith.mulf %247, %246 : vector<2x8xf32>
      %249 = math.tanh %248 : vector<2x8xf32>
      %cst_151 = arith.constant 1.000000e+00 : f32
      %250 = vector.broadcast %cst_151 : f32 to vector<2x8xf32>
      %251 = arith.addf %249, %250 : vector<2x8xf32>
      %cst_152 = arith.constant 5.000000e-01 : f32
      %252 = vector.broadcast %cst_152 : f32 to vector<2x8xf32>
      %253 = arith.mulf %252, %251 : vector<2x8xf32>
      %254 = arith.mulf %243, %222 : vector<2x8xf32>
      %255 = arith.mulf %235, %245 : vector<2x8xf32>
      %256 = arith.addf %254, %255 : vector<2x8xf32>
      %257 = math.tanh %256 : vector<2x8xf32>
      %258 = arith.mulf %253, %257 : vector<2x8xf32>
      %259 = vector.extract_strided_slice %184 {offsets = [0, 0], sizes = [2, 32], strides = [1, 1]} : vector<2x64xf32> to vector<2x32xf32>
      %cst_153 = arith.constant dense<0.000000e+00> : vector<2x32xf32>
      %260 = tpu.matmul %258, %188, %cst_153 {dimension_numbers = #tpu.dot_dimension_numbers<[1], [0], [0], [1], [0, 0, 1, 1], [], []>} : vector<2x8xf32>, vector<8x32xf32>, vector<2x32xf32> -> vector<2x32xf32>
      %261 = arith.addf %259, %260 : vector<2x32xf32>
      %262 = vector.extract_strided_slice %261 {offsets = [0, 0], sizes = [2, 8], strides = [1, 1]} : vector<2x32xf32> to vector<2x8xf32>
      %cst_154 = arith.constant 5.000000e-01 : f32
      %263 = vector.broadcast %cst_154 : f32 to vector<2x8xf32>
      %264 = arith.mulf %263, %262 : vector<2x8xf32>
      %265 = math.tanh %264 : vector<2x8xf32>
      %cst_155 = arith.constant 1.000000e+00 : f32
      %266 = vector.broadcast %cst_155 : f32 to vector<2x8xf32>
      %267 = arith.addf %265, %266 : vector<2x8xf32>
      %cst_156 = arith.constant 5.000000e-01 : f32
      %268 = vector.broadcast %cst_156 : f32 to vector<2x8xf32>
      %269 = arith.mulf %268, %267 : vector<2x8xf32>
      %270 = vector.extract_strided_slice %261 {offsets = [0, 8], sizes = [2, 8], strides = [1, 1]} : vector<2x32xf32> to vector<2x8xf32>
      %cst_157 = arith.constant 5.000000e-01 : f32
      %271 = vector.broadcast %cst_157 : f32 to vector<2x8xf32>
      %272 = arith.mulf %271, %270 : vector<2x8xf32>
      %273 = math.tanh %272 : vector<2x8xf32>
      %cst_158 = arith.constant 1.000000e+00 : f32
      %274 = vector.broadcast %cst_158 : f32 to vector<2x8xf32>
      %275 = arith.addf %273, %274 : vector<2x8xf32>
      %cst_159 = arith.constant 5.000000e-01 : f32
      %276 = vector.broadcast %cst_159 : f32 to vector<2x8xf32>
      %277 = arith.mulf %276, %275 : vector<2x8xf32>
      %278 = vector.extract_strided_slice %261 {offsets = [0, 16], sizes = [2, 8], strides = [1, 1]} : vector<2x32xf32> to vector<2x8xf32>
      %279 = math.tanh %278 : vector<2x8xf32>
      %280 = vector.extract_strided_slice %261 {offsets = [0, 24], sizes = [2, 8], strides = [1, 1]} : vector<2x32xf32> to vector<2x8xf32>
      %cst_160 = arith.constant 5.000000e-01 : f32
      %281 = vector.broadcast %cst_160 : f32 to vector<2x8xf32>
      %282 = arith.mulf %281, %280 : vector<2x8xf32>
      %283 = math.tanh %282 : vector<2x8xf32>
      %cst_161 = arith.constant 1.000000e+00 : f32
      %284 = vector.broadcast %cst_161 : f32 to vector<2x8xf32>
      %285 = arith.addf %283, %284 : vector<2x8xf32>
      %cst_162 = arith.constant 5.000000e-01 : f32
      %286 = vector.broadcast %cst_162 : f32 to vector<2x8xf32>
      %287 = arith.mulf %286, %285 : vector<2x8xf32>
      %288 = arith.mulf %277, %256 : vector<2x8xf32>
      %289 = arith.mulf %269, %279 : vector<2x8xf32>
      %290 = arith.addf %288, %289 : vector<2x8xf32>
      %291 = math.tanh %290 : vector<2x8xf32>
      %292 = arith.mulf %287, %291 : vector<2x8xf32>
      %293 = vector.extract_strided_slice %186 {offsets = [1, 0, 0], sizes = [1, 8, 32], strides = [1, 1, 1]} : vector<2x8x32xf32> to vector<1x8x32xf32>
      %294 = vector.shape_cast %293 : vector<1x8x32xf32> to vector<8x32xf32>
      %cst_163 = arith.constant 0.000000e+00 : f32
      %295 = vector.broadcast %cst_163 : f32 to vector<2x8xf32>
      %cst_164 = arith.constant 0.000000e+00 : f32
      %296 = vector.broadcast %cst_164 : f32 to vector<2x8xf32>
      %297 = vector.extract_strided_slice %184 {offsets = [0, 32], sizes = [2, 32], strides = [1, 1]} : vector<2x64xf32> to vector<2x32xf32>
      %cst_165 = arith.constant dense<0.000000e+00> : vector<2x32xf32>
      %298 = tpu.matmul %295, %294, %cst_165 {dimension_numbers = #tpu.dot_dimension_numbers<[1], [0], [0], [1], [0, 0, 1, 1], [], []>} : vector<2x8xf32>, vector<8x32xf32>, vector<2x32xf32> -> vector<2x32xf32>
      %299 = arith.addf %297, %298 : vector<2x32xf32>
      %300 = vector.extract_strided_slice %299 {offsets = [0, 0], sizes = [2, 8], strides = [1, 1]} : vector<2x32xf32> to vector<2x8xf32>
      %cst_166 = arith.constant 5.000000e-01 : f32
      %301 = vector.broadcast %cst_166 : f32 to vector<2x8xf32>
      %302 = arith.mulf %301, %300 : vector<2x8xf32>
      %303 = math.tanh %302 : vector<2x8xf32>
      %cst_167 = arith.constant 1.000000e+00 : f32
      %304 = vector.broadcast %cst_167 : f32 to vector<2x8xf32>
      %305 = arith.addf %303, %304 : vector<2x8xf32>
      %cst_168 = arith.constant 5.000000e-01 : f32
      %306 = vector.broadcast %cst_168 : f32 to vector<2x8xf32>
      %307 = arith.mulf %306, %305 : vector<2x8xf32>
      %308 = vector.extract_strided_slice %299 {offsets = [0, 8], sizes = [2, 8], strides = [1, 1]} : vector<2x32xf32> to vector<2x8xf32>
      %cst_169 = arith.constant 5.000000e-01 : f32
      %309 = vector.broadcast %cst_169 : f32 to vector<2x8xf32>
      %310 = arith.mulf %309, %308 : vector<2x8xf32>
      %311 = math.tanh %310 : vector<2x8xf32>
      %cst_170 = arith.constant 1.000000e+00 : f32
      %312 = vector.broadcast %cst_170 : f32 to vector<2x8xf32>
      %313 = arith.addf %311, %312 : vector<2x8xf32>
      %cst_171 = arith.constant 5.000000e-01 : f32
      %314 = vector.broadcast %cst_171 : f32 to vector<2x8xf32>
      %315 = arith.mulf %314, %313 : vector<2x8xf32>
      %316 = vector.extract_strided_slice %299 {offsets = [0, 16], sizes = [2, 8], strides = [1, 1]} : vector<2x32xf32> to vector<2x8xf32>
      %317 = math.tanh %316 : vector<2x8xf32>
      %318 = vector.extract_strided_slice %299 {offsets = [0, 24], sizes = [2, 8], strides = [1, 1]} : vector<2x32xf32> to vector<2x8xf32>
      %cst_172 = arith.constant 5.000000e-01 : f32
      %319 = vector.broadcast %cst_172 : f32 to vector<2x8xf32>
      %320 = arith.mulf %319, %318 : vector<2x8xf32>
      %321 = math.tanh %320 : vector<2x8xf32>
      %cst_173 = arith.constant 1.000000e+00 : f32
      %322 = vector.broadcast %cst_173 : f32 to vector<2x8xf32>
      %323 = arith.addf %321, %322 : vector<2x8xf32>
      %cst_174 = arith.constant 5.000000e-01 : f32
      %324 = vector.broadcast %cst_174 : f32 to vector<2x8xf32>
      %325 = arith.mulf %324, %323 : vector<2x8xf32>
      %326 = arith.mulf %315, %296 : vector<2x8xf32>
      %327 = arith.mulf %307, %317 : vector<2x8xf32>
      %328 = arith.addf %326, %327 : vector<2x8xf32>
      %329 = math.tanh %328 : vector<2x8xf32>
      %330 = arith.mulf %325, %329 : vector<2x8xf32>
      %331 = vector.extract_strided_slice %177 {offsets = [0, 32], sizes = [2, 32], strides = [1, 1]} : vector<2x64xf32> to vector<2x32xf32>
      %cst_175 = arith.constant dense<0.000000e+00> : vector<2x32xf32>
      %332 = tpu.matmul %330, %294, %cst_175 {dimension_numbers = #tpu.dot_dimension_numbers<[1], [0], [0], [1], [0, 0, 1, 1], [], []>} : vector<2x8xf32>, vector<8x32xf32>, vector<2x32xf32> -> vector<2x32xf32>
      %333 = arith.addf %331, %332 : vector<2x32xf32>
      %334 = vector.extract_strided_slice %333 {offsets = [0, 0], sizes = [2, 8], strides = [1, 1]} : vector<2x32xf32> to vector<2x8xf32>
      %cst_176 = arith.constant 5.000000e-01 : f32
      %335 = vector.broadcast %cst_176 : f32 to vector<2x8xf32>
      %336 = arith.mulf %335, %334 : vector<2x8xf32>
      %337 = math.tanh %336 : vector<2x8xf32>
      %cst_177 = arith.constant 1.000000e+00 : f32
      %338 = vector.broadcast %cst_177 : f32 to vector<2x8xf32>
      %339 = arith.addf %337, %338 : vector<2x8xf32>
      %cst_178 = arith.constant 5.000000e-01 : f32
      %340 = vector.broadcast %cst_178 : f32 to vector<2x8xf32>
      %341 = arith.mulf %340, %339 : vector<2x8xf32>
      %342 = vector.extract_strided_slice %333 {offsets = [0, 8], sizes = [2, 8], strides = [1, 1]} : vector<2x32xf32> to vector<2x8xf32>
      %cst_179 = arith.constant 5.000000e-01 : f32
      %343 = vector.broadcast %cst_179 : f32 to vector<2x8xf32>
      %344 = arith.mulf %343, %342 : vector<2x8xf32>
      %345 = math.tanh %344 : vector<2x8xf32>
      %cst_180 = arith.constant 1.000000e+00 : f32
      %346 = vector.broadcast %cst_180 : f32 to vector<2x8xf32>
      %347 = arith.addf %345, %346 : vector<2x8xf32>
      %cst_181 = arith.constant 5.000000e-01 : f32
      %348 = vector.broadcast %cst_181 : f32 to vector<2x8xf32>
      %349 = arith.mulf %348, %347 : vector<2x8xf32>
      %350 = vector.extract_strided_slice %333 {offsets = [0, 16], sizes = [2, 8], strides = [1, 1]} : vector<2x32xf32> to vector<2x8xf32>
      %351 = math.tanh %350 : vector<2x8xf32>
      %352 = vector.extract_strided_slice %333 {offsets = [0, 24], sizes = [2, 8], strides = [1, 1]} : vector<2x32xf32> to vector<2x8xf32>
      %cst_182 = arith.constant 5.000000e-01 : f32
      %353 = vector.broadcast %cst_182 : f32 to vector<2x8xf32>
      %354 = arith.mulf %353, %352 : vector<2x8xf32>
      %355 = math.tanh %354 : vector<2x8xf32>
      %cst_183 = arith.constant 1.000000e+00 : f32
      %356 = vector.broadcast %cst_183 : f32 to vector<2x8xf32>
      %357 = arith.addf %355, %356 : vector<2x8xf32>
      %cst_184 = arith.constant 5.000000e-01 : f32
      %358 = vector.broadcast %cst_184 : f32 to vector<2x8xf32>
      %359 = arith.mulf %358, %357 : vector<2x8xf32>
      %360 = arith.mulf %349, %328 : vector<2x8xf32>
      %361 = arith.mulf %341, %351 : vector<2x8xf32>
      %362 = arith.addf %360, %361 : vector<2x8xf32>
      %363 = math.tanh %362 : vector<2x8xf32>
      %364 = arith.mulf %359, %363 : vector<2x8xf32>
      %365 = vector.extract_strided_slice %170 {offsets = [0, 32], sizes = [2, 32], strides = [1, 1]} : vector<2x64xf32> to vector<2x32xf32>
      %cst_185 = arith.constant dense<0.000000e+00> : vector<2x32xf32>
      %366 = tpu.matmul %364, %294, %cst_185 {dimension_numbers = #tpu.dot_dimension_numbers<[1], [0], [0], [1], [0, 0, 1, 1], [], []>} : vector<2x8xf32>, vector<8x32xf32>, vector<2x32xf32> -> vector<2x32xf32>
      %367 = arith.addf %365, %366 : vector<2x32xf32>
      %368 = vector.extract_strided_slice %367 {offsets = [0, 0], sizes = [2, 8], strides = [1, 1]} : vector<2x32xf32> to vector<2x8xf32>
      %cst_186 = arith.constant 5.000000e-01 : f32
      %369 = vector.broadcast %cst_186 : f32 to vector<2x8xf32>
      %370 = arith.mulf %369, %368 : vector<2x8xf32>
      %371 = math.tanh %370 : vector<2x8xf32>
      %cst_187 = arith.constant 1.000000e+00 : f32
      %372 = vector.broadcast %cst_187 : f32 to vector<2x8xf32>
      %373 = arith.addf %371, %372 : vector<2x8xf32>
      %cst_188 = arith.constant 5.000000e-01 : f32
      %374 = vector.broadcast %cst_188 : f32 to vector<2x8xf32>
      %375 = arith.mulf %374, %373 : vector<2x8xf32>
      %376 = vector.extract_strided_slice %367 {offsets = [0, 8], sizes = [2, 8], strides = [1, 1]} : vector<2x32xf32> to vector<2x8xf32>
      %cst_189 = arith.constant 5.000000e-01 : f32
      %377 = vector.broadcast %cst_189 : f32 to vector<2x8xf32>
      %378 = arith.mulf %377, %376 : vector<2x8xf32>
      %379 = math.tanh %378 : vector<2x8xf32>
      %cst_190 = arith.constant 1.000000e+00 : f32
      %380 = vector.broadcast %cst_190 : f32 to vector<2x8xf32>
      %381 = arith.addf %379, %380 : vector<2x8xf32>
      %cst_191 = arith.constant 5.000000e-01 : f32
      %382 = vector.broadcast %cst_191 : f32 to vector<2x8xf32>
      %383 = arith.mulf %382, %381 : vector<2x8xf32>
      %384 = vector.extract_strided_slice %367 {offsets = [0, 16], sizes = [2, 8], strides = [1, 1]} : vector<2x32xf32> to vector<2x8xf32>
      %385 = math.tanh %384 : vector<2x8xf32>
      %386 = vector.extract_strided_slice %367 {offsets = [0, 24], sizes = [2, 8], strides = [1, 1]} : vector<2x32xf32> to vector<2x8xf32>
      %cst_192 = arith.constant 5.000000e-01 : f32
      %387 = vector.broadcast %cst_192 : f32 to vector<2x8xf32>
      %388 = arith.mulf %387, %386 : vector<2x8xf32>
      %389 = math.tanh %388 : vector<2x8xf32>
      %cst_193 = arith.constant 1.000000e+00 : f32
      %390 = vector.broadcast %cst_193 : f32 to vector<2x8xf32>
      %391 = arith.addf %389, %390 : vector<2x8xf32>
      %cst_194 = arith.constant 5.000000e-01 : f32
      %392 = vector.broadcast %cst_194 : f32 to vector<2x8xf32>
      %393 = arith.mulf %392, %391 : vector<2x8xf32>
      %394 = arith.mulf %383, %362 : vector<2x8xf32>
      %395 = arith.mulf %375, %385 : vector<2x8xf32>
      %396 = arith.addf %394, %395 : vector<2x8xf32>
      %397 = math.tanh %396 : vector<2x8xf32>
      %398 = arith.mulf %393, %397 : vector<2x8xf32>
      %399 = vector.extract_strided_slice %0 {offsets = [5, 0], sizes = [1, 64], strides = [1, 1]} : vector<8x128xf32> to vector<1x64xf32>
      %400 = tpu.concatenate %224, %398 in 1 : vector<2x8xf32>, vector<2x8xf32> -> vector<2x16xf32>
      %c1_195 = arith.constant 1 : index
      %c0_196 = arith.constant 0 : index
      %c0_197 = arith.constant 0 : index
      %401 = vector.load %arg8[%c1_195, %c0_196, %c0_197] : memref<2x16x64xf32, #tpu.memory_space<vmem>>, vector<1x16x64xf32>
      %402 = vector.shape_cast %401 : vector<1x16x64xf32> to vector<16x64xf32>
      %cst_198 = arith.constant dense<0.000000e+00> : vector<2x64xf32>
      %403 = tpu.matmul %400, %402, %cst_198 {dimension_numbers = #tpu.dot_dimension_numbers<[1], [0], [0], [1], [0, 0, 1, 1], [], []>} : vector<2x16xf32>, vector<16x64xf32>, vector<2x64xf32> -> vector<2x64xf32>
      %404 = vector.broadcast %399 : vector<1x64xf32> to vector<2x64xf32>
      %405 = arith.addf %403, %404 : vector<2x64xf32>
      %406 = tpu.concatenate %258, %364 in 1 : vector<2x8xf32>, vector<2x8xf32> -> vector<2x16xf32>
      %c1_199 = arith.constant 1 : index
      %c0_200 = arith.constant 0 : index
      %c0_201 = arith.constant 0 : index
      %407 = vector.load %arg8[%c1_199, %c0_200, %c0_201] : memref<2x16x64xf32, #tpu.memory_space<vmem>>, vector<1x16x64xf32>
      %408 = vector.shape_cast %407 : vector<1x16x64xf32> to vector<16x64xf32>
      %cst_202 = arith.constant dense<0.000000e+00> : vector<2x64xf32>
      %409 = tpu.matmul %406, %408, %cst_202 {dimension_numbers = #tpu.dot_dimension_numbers<[1], [0], [0], [1], [0, 0, 1, 1], [], []>} : vector<2x16xf32>, vector<16x64xf32>, vector<2x64xf32> -> vector<2x64xf32>
      %410 = vector.broadcast %399 : vector<1x64xf32> to vector<2x64xf32>
      %411 = arith.addf %409, %410 : vector<2x64xf32>
      %412 = tpu.concatenate %292, %330 in 1 : vector<2x8xf32>, vector<2x8xf32> -> vector<2x16xf32>
      %c1_203 = arith.constant 1 : index
      %c0_204 = arith.constant 0 : index
      %c0_205 = arith.constant 0 : index
      %413 = vector.load %arg8[%c1_203, %c0_204, %c0_205] : memref<2x16x64xf32, #tpu.memory_space<vmem>>, vector<1x16x64xf32>
      %414 = vector.shape_cast %413 : vector<1x16x64xf32> to vector<16x64xf32>
      %cst_206 = arith.constant dense<0.000000e+00> : vector<2x64xf32>
      %415 = tpu.matmul %412, %414, %cst_206 {dimension_numbers = #tpu.dot_dimension_numbers<[1], [0], [0], [1], [0, 0, 1, 1], [], []>} : vector<2x16xf32>, vector<16x64xf32>, vector<2x64xf32> -> vector<2x64xf32>
      %416 = vector.broadcast %399 : vector<1x64xf32> to vector<2x64xf32>
      %417 = arith.addf %415, %416 : vector<2x64xf32>
      %c1_207 = arith.constant 1 : index
      %c0_208 = arith.constant 0 : index
      %c0_209 = arith.constant 0 : index
      %c0_210 = arith.constant 0 : index
      %418 = vector.load %arg9[%c1_207, %c0_208, %c0_209, %c0_210] : memref<2x2x8x32xf32, #tpu.memory_space<vmem>>, vector<1x2x8x32xf32>
      %419 = vector.shape_cast %418 : vector<1x2x8x32xf32> to vector<2x8x32xf32>
      %420 = vector.extract_strided_slice %419 {offsets = [0, 0, 0], sizes = [1, 8, 32], strides = [1, 1, 1]} : vector<2x8x32xf32> to vector<1x8x32xf32>
      %421 = vector.shape_cast %420 : vector<1x8x32xf32> to vector<8x32xf32>
      %cst_211 = arith.constant 0.000000e+00 : f32
      %422 = vector.broadcast %cst_211 : f32 to vector<2x8xf32>
      %cst_212 = arith.constant 0.000000e+00 : f32
      %423 = vector.broadcast %cst_212 : f32 to vector<2x8xf32>
      %424 = vector.extract_strided_slice %405 {offsets = [0, 0], sizes = [2, 32], strides = [1, 1]} : vector<2x64xf32> to vector<2x32xf32>
      %cst_213 = arith.constant dense<0.000000e+00> : vector<2x32xf32>
      %425 = tpu.matmul %422, %421, %cst_213 {dimension_numbers = #tpu.dot_dimension_numbers<[1], [0], [0], [1], [0, 0, 1, 1], [], []>} : vector<2x8xf32>, vector<8x32xf32>, vector<2x32xf32> -> vector<2x32xf32>
      %426 = arith.addf %424, %425 : vector<2x32xf32>
      %427 = vector.extract_strided_slice %426 {offsets = [0, 0], sizes = [2, 8], strides = [1, 1]} : vector<2x32xf32> to vector<2x8xf32>
      %cst_214 = arith.constant 5.000000e-01 : f32
      %428 = vector.broadcast %cst_214 : f32 to vector<2x8xf32>
      %429 = arith.mulf %428, %427 : vector<2x8xf32>
      %430 = math.tanh %429 : vector<2x8xf32>
      %cst_215 = arith.constant 1.000000e+00 : f32
      %431 = vector.broadcast %cst_215 : f32 to vector<2x8xf32>
      %432 = arith.addf %430, %431 : vector<2x8xf32>
      %cst_216 = arith.constant 5.000000e-01 : f32
      %433 = vector.broadcast %cst_216 : f32 to vector<2x8xf32>
      %434 = arith.mulf %433, %432 : vector<2x8xf32>
      %435 = vector.extract_strided_slice %426 {offsets = [0, 8], sizes = [2, 8], strides = [1, 1]} : vector<2x32xf32> to vector<2x8xf32>
      %cst_217 = arith.constant 5.000000e-01 : f32
      %436 = vector.broadcast %cst_217 : f32 to vector<2x8xf32>
      %437 = arith.mulf %436, %435 : vector<2x8xf32>
      %438 = math.tanh %437 : vector<2x8xf32>
      %cst_218 = arith.constant 1.000000e+00 : f32
      %439 = vector.broadcast %cst_218 : f32 to vector<2x8xf32>
      %440 = arith.addf %438, %439 : vector<2x8xf32>
      %cst_219 = arith.constant 5.000000e-01 : f32
      %441 = vector.broadcast %cst_219 : f32 to vector<2x8xf32>
      %442 = arith.mulf %441, %440 : vector<2x8xf32>
      %443 = vector.extract_strided_slice %426 {offsets = [0, 16], sizes = [2, 8], strides = [1, 1]} : vector<2x32xf32> to vector<2x8xf32>
      %444 = math.tanh %443 : vector<2x8xf32>
      %445 = vector.extract_strided_slice %426 {offsets = [0, 24], sizes = [2, 8], strides = [1, 1]} : vector<2x32xf32> to vector<2x8xf32>
      %cst_220 = arith.constant 5.000000e-01 : f32
      %446 = vector.broadcast %cst_220 : f32 to vector<2x8xf32>
      %447 = arith.mulf %446, %445 : vector<2x8xf32>
      %448 = math.tanh %447 : vector<2x8xf32>
      %cst_221 = arith.constant 1.000000e+00 : f32
      %449 = vector.broadcast %cst_221 : f32 to vector<2x8xf32>
      %450 = arith.addf %448, %449 : vector<2x8xf32>
      %cst_222 = arith.constant 5.000000e-01 : f32
      %451 = vector.broadcast %cst_222 : f32 to vector<2x8xf32>
      %452 = arith.mulf %451, %450 : vector<2x8xf32>
      %453 = arith.mulf %442, %423 : vector<2x8xf32>
      %454 = arith.mulf %434, %444 : vector<2x8xf32>
      %455 = arith.addf %453, %454 : vector<2x8xf32>
      %456 = math.tanh %455 : vector<2x8xf32>
      %457 = arith.mulf %452, %456 : vector<2x8xf32>
      %458 = vector.extract_strided_slice %411 {offsets = [0, 0], sizes = [2, 32], strides = [1, 1]} : vector<2x64xf32> to vector<2x32xf32>
      %cst_223 = arith.constant dense<0.000000e+00> : vector<2x32xf32>
      %459 = tpu.matmul %457, %421, %cst_223 {dimension_numbers = #tpu.dot_dimension_numbers<[1], [0], [0], [1], [0, 0, 1, 1], [], []>} : vector<2x8xf32>, vector<8x32xf32>, vector<2x32xf32> -> vector<2x32xf32>
      %460 = arith.addf %458, %459 : vector<2x32xf32>
      %461 = vector.extract_strided_slice %460 {offsets = [0, 0], sizes = [2, 8], strides = [1, 1]} : vector<2x32xf32> to vector<2x8xf32>
      %cst_224 = arith.constant 5.000000e-01 : f32
      %462 = vector.broadcast %cst_224 : f32 to vector<2x8xf32>
      %463 = arith.mulf %462, %461 : vector<2x8xf32>
      %464 = math.tanh %463 : vector<2x8xf32>
      %cst_225 = arith.constant 1.000000e+00 : f32
      %465 = vector.broadcast %cst_225 : f32 to vector<2x8xf32>
      %466 = arith.addf %464, %465 : vector<2x8xf32>
      %cst_226 = arith.constant 5.000000e-01 : f32
      %467 = vector.broadcast %cst_226 : f32 to vector<2x8xf32>
      %468 = arith.mulf %467, %466 : vector<2x8xf32>
      %469 = vector.extract_strided_slice %460 {offsets = [0, 8], sizes = [2, 8], strides = [1, 1]} : vector<2x32xf32> to vector<2x8xf32>
      %cst_227 = arith.constant 5.000000e-01 : f32
      %470 = vector.broadcast %cst_227 : f32 to vector<2x8xf32>
      %471 = arith.mulf %470, %469 : vector<2x8xf32>
      %472 = math.tanh %471 : vector<2x8xf32>
      %cst_228 = arith.constant 1.000000e+00 : f32
      %473 = vector.broadcast %cst_228 : f32 to vector<2x8xf32>
      %474 = arith.addf %472, %473 : vector<2x8xf32>
      %cst_229 = arith.constant 5.000000e-01 : f32
      %475 = vector.broadcast %cst_229 : f32 to vector<2x8xf32>
      %476 = arith.mulf %475, %474 : vector<2x8xf32>
      %477 = vector.extract_strided_slice %460 {offsets = [0, 16], sizes = [2, 8], strides = [1, 1]} : vector<2x32xf32> to vector<2x8xf32>
      %478 = math.tanh %477 : vector<2x8xf32>
      %479 = vector.extract_strided_slice %460 {offsets = [0, 24], sizes = [2, 8], strides = [1, 1]} : vector<2x32xf32> to vector<2x8xf32>
      %cst_230 = arith.constant 5.000000e-01 : f32
      %480 = vector.broadcast %cst_230 : f32 to vector<2x8xf32>
      %481 = arith.mulf %480, %479 : vector<2x8xf32>
      %482 = math.tanh %481 : vector<2x8xf32>
      %cst_231 = arith.constant 1.000000e+00 : f32
      %483 = vector.broadcast %cst_231 : f32 to vector<2x8xf32>
      %484 = arith.addf %482, %483 : vector<2x8xf32>
      %cst_232 = arith.constant 5.000000e-01 : f32
      %485 = vector.broadcast %cst_232 : f32 to vector<2x8xf32>
      %486 = arith.mulf %485, %484 : vector<2x8xf32>
      %487 = arith.mulf %476, %455 : vector<2x8xf32>
      %488 = arith.mulf %468, %478 : vector<2x8xf32>
      %489 = arith.addf %487, %488 : vector<2x8xf32>
      %490 = math.tanh %489 : vector<2x8xf32>
      %491 = arith.mulf %486, %490 : vector<2x8xf32>
      %492 = vector.extract_strided_slice %417 {offsets = [0, 0], sizes = [2, 32], strides = [1, 1]} : vector<2x64xf32> to vector<2x32xf32>
      %cst_233 = arith.constant dense<0.000000e+00> : vector<2x32xf32>
      %493 = tpu.matmul %491, %421, %cst_233 {dimension_numbers = #tpu.dot_dimension_numbers<[1], [0], [0], [1], [0, 0, 1, 1], [], []>} : vector<2x8xf32>, vector<8x32xf32>, vector<2x32xf32> -> vector<2x32xf32>
      %494 = arith.addf %492, %493 : vector<2x32xf32>
      %495 = vector.extract_strided_slice %494 {offsets = [0, 0], sizes = [2, 8], strides = [1, 1]} : vector<2x32xf32> to vector<2x8xf32>
      %cst_234 = arith.constant 5.000000e-01 : f32
      %496 = vector.broadcast %cst_234 : f32 to vector<2x8xf32>
      %497 = arith.mulf %496, %495 : vector<2x8xf32>
      %498 = math.tanh %497 : vector<2x8xf32>
      %cst_235 = arith.constant 1.000000e+00 : f32
      %499 = vector.broadcast %cst_235 : f32 to vector<2x8xf32>
      %500 = arith.addf %498, %499 : vector<2x8xf32>
      %cst_236 = arith.constant 5.000000e-01 : f32
      %501 = vector.broadcast %cst_236 : f32 to vector<2x8xf32>
      %502 = arith.mulf %501, %500 : vector<2x8xf32>
      %503 = vector.extract_strided_slice %494 {offsets = [0, 8], sizes = [2, 8], strides = [1, 1]} : vector<2x32xf32> to vector<2x8xf32>
      %cst_237 = arith.constant 5.000000e-01 : f32
      %504 = vector.broadcast %cst_237 : f32 to vector<2x8xf32>
      %505 = arith.mulf %504, %503 : vector<2x8xf32>
      %506 = math.tanh %505 : vector<2x8xf32>
      %cst_238 = arith.constant 1.000000e+00 : f32
      %507 = vector.broadcast %cst_238 : f32 to vector<2x8xf32>
      %508 = arith.addf %506, %507 : vector<2x8xf32>
      %cst_239 = arith.constant 5.000000e-01 : f32
      %509 = vector.broadcast %cst_239 : f32 to vector<2x8xf32>
      %510 = arith.mulf %509, %508 : vector<2x8xf32>
      %511 = vector.extract_strided_slice %494 {offsets = [0, 16], sizes = [2, 8], strides = [1, 1]} : vector<2x32xf32> to vector<2x8xf32>
      %512 = math.tanh %511 : vector<2x8xf32>
      %513 = vector.extract_strided_slice %494 {offsets = [0, 24], sizes = [2, 8], strides = [1, 1]} : vector<2x32xf32> to vector<2x8xf32>
      %cst_240 = arith.constant 5.000000e-01 : f32
      %514 = vector.broadcast %cst_240 : f32 to vector<2x8xf32>
      %515 = arith.mulf %514, %513 : vector<2x8xf32>
      %516 = math.tanh %515 : vector<2x8xf32>
      %cst_241 = arith.constant 1.000000e+00 : f32
      %517 = vector.broadcast %cst_241 : f32 to vector<2x8xf32>
      %518 = arith.addf %516, %517 : vector<2x8xf32>
      %cst_242 = arith.constant 5.000000e-01 : f32
      %519 = vector.broadcast %cst_242 : f32 to vector<2x8xf32>
      %520 = arith.mulf %519, %518 : vector<2x8xf32>
      %521 = arith.mulf %510, %489 : vector<2x8xf32>
      %522 = arith.mulf %502, %512 : vector<2x8xf32>
      %523 = arith.addf %521, %522 : vector<2x8xf32>
      %524 = math.tanh %523 : vector<2x8xf32>
      %525 = arith.mulf %520, %524 : vector<2x8xf32>
      %526 = vector.extract_strided_slice %419 {offsets = [1, 0, 0], sizes = [1, 8, 32], strides = [1, 1, 1]} : vector<2x8x32xf32> to vector<1x8x32xf32>
      %527 = vector.shape_cast %526 : vector<1x8x32xf32> to vector<8x32xf32>
      %cst_243 = arith.constant 0.000000e+00 : f32
      %528 = vector.broadcast %cst_243 : f32 to vector<2x8xf32>
      %cst_244 = arith.constant 0.000000e+00 : f32
      %529 = vector.broadcast %cst_244 : f32 to vector<2x8xf32>
      %530 = vector.extract_strided_slice %417 {offsets = [0, 32], sizes = [2, 32], strides = [1, 1]} : vector<2x64xf32> to vector<2x32xf32>
      %cst_245 = arith.constant dense<0.000000e+00> : vector<2x32xf32>
      %531 = tpu.matmul %528, %527, %cst_245 {dimension_numbers = #tpu.dot_dimension_numbers<[1], [0], [0], [1], [0, 0, 1, 1], [], []>} : vector<2x8xf32>, vector<8x32xf32>, vector<2x32xf32> -> vector<2x32xf32>
      %532 = arith.addf %530, %531 : vector<2x32xf32>
      %533 = vector.extract_strided_slice %532 {offsets = [0, 0], sizes = [2, 8], strides = [1, 1]} : vector<2x32xf32> to vector<2x8xf32>
      %cst_246 = arith.constant 5.000000e-01 : f32
      %534 = vector.broadcast %cst_246 : f32 to vector<2x8xf32>
      %535 = arith.mulf %534, %533 : vector<2x8xf32>
      %536 = math.tanh %535 : vector<2x8xf32>
      %cst_247 = arith.constant 1.000000e+00 : f32
      %537 = vector.broadcast %cst_247 : f32 to vector<2x8xf32>
      %538 = arith.addf %536, %537 : vector<2x8xf32>
      %cst_248 = arith.constant 5.000000e-01 : f32
      %539 = vector.broadcast %cst_248 : f32 to vector<2x8xf32>
      %540 = arith.mulf %539, %538 : vector<2x8xf32>
      %541 = vector.extract_strided_slice %532 {offsets = [0, 8], sizes = [2, 8], strides = [1, 1]} : vector<2x32xf32> to vector<2x8xf32>
      %cst_249 = arith.constant 5.000000e-01 : f32
      %542 = vector.broadcast %cst_249 : f32 to vector<2x8xf32>
      %543 = arith.mulf %542, %541 : vector<2x8xf32>
      %544 = math.tanh %543 : vector<2x8xf32>
      %cst_250 = arith.constant 1.000000e+00 : f32
      %545 = vector.broadcast %cst_250 : f32 to vector<2x8xf32>
      %546 = arith.addf %544, %545 : vector<2x8xf32>
      %cst_251 = arith.constant 5.000000e-01 : f32
      %547 = vector.broadcast %cst_251 : f32 to vector<2x8xf32>
      %548 = arith.mulf %547, %546 : vector<2x8xf32>
      %549 = vector.extract_strided_slice %532 {offsets = [0, 16], sizes = [2, 8], strides = [1, 1]} : vector<2x32xf32> to vector<2x8xf32>
      %550 = math.tanh %549 : vector<2x8xf32>
      %551 = vector.extract_strided_slice %532 {offsets = [0, 24], sizes = [2, 8], strides = [1, 1]} : vector<2x32xf32> to vector<2x8xf32>
      %cst_252 = arith.constant 5.000000e-01 : f32
      %552 = vector.broadcast %cst_252 : f32 to vector<2x8xf32>
      %553 = arith.mulf %552, %551 : vector<2x8xf32>
      %554 = math.tanh %553 : vector<2x8xf32>
      %cst_253 = arith.constant 1.000000e+00 : f32
      %555 = vector.broadcast %cst_253 : f32 to vector<2x8xf32>
      %556 = arith.addf %554, %555 : vector<2x8xf32>
      %cst_254 = arith.constant 5.000000e-01 : f32
      %557 = vector.broadcast %cst_254 : f32 to vector<2x8xf32>
      %558 = arith.mulf %557, %556 : vector<2x8xf32>
      %559 = arith.mulf %548, %529 : vector<2x8xf32>
      %560 = arith.mulf %540, %550 : vector<2x8xf32>
      %561 = arith.addf %559, %560 : vector<2x8xf32>
      %562 = math.tanh %561 : vector<2x8xf32>
      %563 = arith.mulf %558, %562 : vector<2x8xf32>
      %564 = tpu.concatenate %525, %563 in 1 : vector<2x8xf32>, vector<2x8xf32> -> vector<2x16xf32>
      %565 = vector.extract_strided_slice %0 {offsets = [6, 0], sizes = [1, 16], strides = [1, 1]} : vector<8x128xf32> to vector<1x16xf32>
      %566 = vector.extract_strided_slice %0 {offsets = [6, 16], sizes = [1, 1], strides = [1, 1]} : vector<8x128xf32> to vector<1x1xf32>
      %567 = vector.broadcast %565 : vector<1x16xf32> to vector<2x16xf32>
      %568 = arith.mulf %564, %567 : vector<2x16xf32>
      %cst_255 = arith.constant dense<0.000000e+00> : vector<2xf32>
      %569 = vector.multi_reduction <add>, %568, %cst_255 [1] : vector<2x16xf32> to vector<2xf32>
      %570 = vector.shape_cast %569 : vector<2xf32> to vector<2x1xf32>
      %571 = vector.broadcast %566 : vector<1x1xf32> to vector<2x1xf32>
      %572 = arith.addf %570, %571 : vector<2x1xf32>
      %c0_256 = arith.constant 0 : index
      %c0_257 = arith.constant 0 : index
      %573 = vector.load %arg11[%c0_256, %c0_257] : memref<2x1xf32, #tpu.memory_space<vmem>>, vector<2x1xf32>
      tpu.vector_store %arg11[%c0_256, %c0_257], %572 {strides = array<i32>} : memref<2x1xf32, #tpu.memory_space<vmem>>, vector<2x1xf32>,
    } else {
    }
    return
  }
  func.func @transform_0(%arg0: i32) -> (i32, i32, i32) {
    %c0_i32 = arith.constant 0 : i32
    %c0_i32_0 = arith.constant 0 : i32
    %c0_i32_1 = arith.constant 0 : i32
    return %arg0, %c0_i32, %c0_i32_0 : i32, i32, i32
  }
  func.func @transform_1(%arg0: i32) -> (i32, i32, i32) {
    %c0_i32 = arith.constant 0 : i32
    %c0_i32_0 = arith.constant 0 : i32
    %c0_i32_1 = arith.constant 0 : i32
    return %arg0, %c0_i32, %c0_i32_0 : i32, i32, i32
  }
  func.func @transform_2(%arg0: i32) -> (i32, i32, i32) {
    %c0_i32 = arith.constant 0 : i32
    %c0_i32_0 = arith.constant 0 : i32
    %c0_i32_1 = arith.constant 0 : i32
    %c0_i32_2 = arith.constant 0 : i32
    return %c0_i32, %c0_i32_0, %c0_i32_1 : i32, i32, i32
  }
  func.func @transform_3(%arg0: i32) -> (i32, i32, i32) {
    %c0_i32 = arith.constant 0 : i32
    %c0_i32_0 = arith.constant 0 : i32
    %c0_i32_1 = arith.constant 0 : i32
    %c0_i32_2 = arith.constant 0 : i32
    return %c0_i32, %c0_i32_0, %c0_i32_1 : i32, i32, i32
  }
  func.func @transform_4(%arg0: i32) -> (i32, i32, i32) {
    %c0_i32 = arith.constant 0 : i32
    %c0_i32_0 = arith.constant 0 : i32
    %c0_i32_1 = arith.constant 0 : i32
    %c0_i32_2 = arith.constant 0 : i32
    return %c0_i32, %c0_i32_0, %c0_i32_1 : i32, i32, i32
  }
  func.func @transform_5(%arg0: i32) -> (i32, i32, i32) {
    %c0_i32 = arith.constant 0 : i32
    %c0_i32_0 = arith.constant 0 : i32
    %c0_i32_1 = arith.constant 0 : i32
    %c0_i32_2 = arith.constant 0 : i32
    return %c0_i32, %c0_i32_0, %c0_i32_1 : i32, i32, i32
  }
  func.func @transform_6(%arg0: i32) -> (i32, i32, i32) {
    %c0_i32 = arith.constant 0 : i32
    %c0_i32_0 = arith.constant 0 : i32
    %c0_i32_1 = arith.constant 0 : i32
    %c0_i32_2 = arith.constant 0 : i32
    return %c0_i32, %c0_i32_0, %c0_i32_1 : i32, i32, i32
  }
  func.func @transform_7(%arg0: i32) -> (i32, i32, i32) {
    %c0_i32 = arith.constant 0 : i32
    %c0_i32_0 = arith.constant 0 : i32
    %c0_i32_1 = arith.constant 0 : i32
    %c0_i32_2 = arith.constant 0 : i32
    return %c0_i32, %c0_i32_0, %c0_i32_1 : i32, i32, i32
  }
  func.func @transform_8(%arg0: i32) -> (i32, i32, i32, i32) {
    %c0_i32 = arith.constant 0 : i32
    %c0_i32_0 = arith.constant 0 : i32
    %c0_i32_1 = arith.constant 0 : i32
    %c0_i32_2 = arith.constant 0 : i32
    %c0_i32_3 = arith.constant 0 : i32
    return %c0_i32, %c0_i32_0, %c0_i32_1, %c0_i32_2 : i32, i32, i32, i32
  }
  func.func @transform_9(%arg0: i32) -> (i32, i32) {
    %c0_i32 = arith.constant 0 : i32
    %c0_i32_0 = arith.constant 0 : i32
    %c0_i32_1 = arith.constant 0 : i32
    return %c0_i32, %c0_i32_0 : i32, i32
  }
  func.func @transform_10(%arg0: i32) -> (i32, i32) {
    %c0_i32 = arith.constant 0 : i32
    %c0_i32_0 = arith.constant 0 : i32
    %c0_i32_1 = arith.constant 0 : i32
    return %c0_i32, %c0_i32_0 : i32, i32
  }
}

</mosaic_0001>

<llo_original>
// kernel: tile.18
$region0: #{tile.18}
  #allocation0 [shape = 's32[1]{0}', space=sflag, size = 0x4, scoped, tag = 'scoped memory for tile.18']
  %s0 = inlined_call_operand.vmem [shape: f32[6], index: 0, kind: input, shape index: {}]
  %s1 = inlined_call_operand.vmem [shape: f32[13,6], index: 1, kind: output, shape index: {}]
  // Predicated region
  $region2: #{tile.18} parent=0 // pred_check
    _
  $region3: #{tile.18} parent=0 // pred_check_branch
    %3 = sbr.rel (0) target = $region5
  $region4: #{tile.18} parent=0 // pred_region
    _
  $region5: #{tile.18} parent=0 // pred_fallthru
    _
  %v4 = vld [vmem:[%s0] ss:$0 sm:$0xff]
  %5 = vst [vmem:[%s1] sm:$0xff] %v4
  %s6 = scalar_lea.vmem %s1, 8
  %7 = vst [vmem:[%s6] sm:$0xff] %v4

// kernel: tile.19
$region0: #{tile.19}
  %s0 = inlined_call_operand.vmem [shape: f32[13,6], index: 0, kind: input, shape index: {}]
  %s1 = inlined_call_operand.vmem [shape: f32[78], index: 1, kind: output, shape index: {}]
  $region1: #{tile.19} parent=0
    #allocation0 [shape = 'u8[4096]{0}', space=vmem, size = 0x1000, scoped, tag = 'scoped mem for output reshape']
    %v2 = vld [vmem:[%s0] sm:$0x1]
    %vm3 = vcmask 48128
    %4 = vst.msk [vmem:[#allocation0] sm:$0x1] %vm3, %v2
    %s5 = scalar_lea.vmem %s0, 12
    %v6 = vld [vmem:[%s5] sm:$0x1]
    %7 = vrot.lane.b32.xlu0 %v6, 72
    %v8 = vpop.permute.xlu0 %7
    %vm9 = vcmask 638528
    %10 = vst.msk [vmem:[#allocation0] sm:$0x1] %vm9, %v8
    %s11 = scalar_lea.vmem %s0, 11
    %v12 = vld [vmem:[%s11] sm:$0x1]
    %13 = vrot.lane.b32.xlu0 %v12, 66
    %v14 = vpop.permute.xlu0 %13
    %vm15 = vcmask 589328
    %16 = vst.msk [vmem:[#allocation0] sm:$0x1] %vm15, %v14
    %s17 = scalar_lea.vmem %s0, 10
    %v18 = vld [vmem:[%s17] sm:$0x1]
    %19 = vrot.lane.b32.xlu0 %v18, 60
    %v20 = vpop.permute.xlu0 %19
    %vm21 = vcmask 540128
    %22 = vst.msk [vmem:[#allocation0] sm:$0x1] %vm21, %v20
    %s23 = scalar_lea.vmem %s0, 9
    %v24 = vld [vmem:[%s23] sm:$0x1]
    %25 = vrot.lane.b32.xlu0 %v24, 54
    %v26 = vpop.permute.xlu0 %25
    %vm27 = vcmask 490928
    %28 = vst.msk [vmem:[#allocation0] sm:$0x1] %vm27, %v26
    %s29 = scalar_lea.vmem %s0, 8
    %v30 = vld [vmem:[%s29] sm:$0x1]
    %31 = vrot.lane.b32.xlu0 %v30, 48
    %v32 = vpop.permute.xlu0 %31
    %vm33 = vcmask 441728
    %34 = vst.msk [vmem:[#allocation0] sm:$0x1] %vm33, %v32
    %s35 = scalar_lea.vmem %s0, 7
    %v36 = vld [vmem:[%s35] sm:$0x1]
    %37 = vrot.lane.b32.xlu0 %v36, 42
    %v38 = vpop.permute.xlu0 %37
    %vm39 = vcmask 392528
    %40 = vst.msk [vmem:[#allocation0] sm:$0x1] %vm39, %v38
    %s41 = scalar_lea.vmem %s0, 6
    %v42 = vld [vmem:[%s41] sm:$0x1]
    %43 = vrot.lane.b32.xlu0 %v42, 36
    %v44 = vpop.permute.xlu0 %43
    %vm45 = vcmask 343328
    %46 = vst.msk [vmem:[#allocation0] sm:$0x1] %vm45, %v44
    %s47 = scalar_lea.vmem %s0, 5
    %v48 = vld [vmem:[%s47] sm:$0x1]
    %49 = vrot.lane.b32.xlu0 %v48, 30
    %v50 = vpop.permute.xlu0 %49
    %vm51 = vcmask 294128
    %52 = vst.msk [vmem:[#allocation0] sm:$0x1] %vm51, %v50
    %s53 = scalar_lea.vmem %s0, 4
    %v54 = vld [vmem:[%s53] sm:$0x1]
    %55 = vrot.lane.b32.xlu0 %v54, 24
    %v56 = vpop.permute.xlu0 %55
    %vm57 = vcmask 244928
    %58 = vst.msk [vmem:[#allocation0] sm:$0x1] %vm57, %v56
    %s59 = scalar_lea.vmem %s0, 3
    %v60 = vld [vmem:[%s59] sm:$0x1]
    %61 = vrot.lane.b32.xlu0 %v60, 18
    %v62 = vpop.permute.xlu0 %61
    %vm63 = vcmask 195728
    %64 = vst.msk [vmem:[#allocation0] sm:$0x1] %vm63, %v62
    %s65 = scalar_lea.vmem %s0, 2
    %v66 = vld [vmem:[%s65] sm:$0x1]
    %67 = vrot.lane.b32.xlu0 %v66, 12
    %v68 = vpop.permute.xlu0 %67
    %vm69 = vcmask 146528
    %70 = vst.msk [vmem:[#allocation0] sm:$0x1] %vm69, %v68
    %s71 = scalar_lea.vmem %s0, 1
    %v72 = vld [vmem:[%s71] sm:$0x1]
    %73 = vrot.lane.b32.xlu0 %v72, 6
    %v74 = vpop.permute.xlu0 %73
    %vm75 = vcmask 97328
    %76 = vst.msk [vmem:[#allocation0] sm:$0x1] %vm75, %v74
    %s78 = sshll.u32 1, 1
    %s79 = ssub.s32 %s78, 1
    %v81 = vld [vmem:[#allocation0] sm:%s79]
    %s82 = sshll.u32 1, 1
    %s83 = ssub.s32 %s82, 1
    %84 = vst [vmem:[%s1] sm:%s83] %v81

// kernel: tile.28
$region0: #{tile.28}
  #allocation0 [shape = 's32[1]{0}', space=sflag, size = 0x4, scoped, tag = 'scoped memory for tile.28']
  %s0 = inlined_call_operand.vmem [shape: f32[32], index: 0, kind: input, shape index: {}]
  %s1 = inlined_call_operand.vmem [shape: f32[3,32], index: 1, kind: output, shape index: {}]
  // Predicated region
  $region2: #{tile.28} parent=0 // pred_check
    _
  $region3: #{tile.28} parent=0 // pred_check_branch
    %3 = sbr.rel (0) target = $region5
  $region4: #{tile.28} parent=0 // pred_region
    _
  $region5: #{tile.28} parent=0 // pred_fallthru
    _
  %v4 = vld [vmem:[%s0] ss:$0 sm:$0xff]
  %5 = vst [vmem:[%s1] sm:$0xf] %v4

// kernel: tile.29
$region0: #{tile.29}
  %s0 = inlined_call_operand.vmem [shape: f32[3,32], index: 0, kind: input, shape index: {}]
  %s1 = inlined_call_operand.vmem [shape: f32[96], index: 1, kind: output, shape index: {}]
  $region1: #{tile.29} parent=0
    #allocation0 [shape = 'u8[4096]{0}', space=vmem, size = 0x1000, scoped, tag = 'scoped mem for output reshape']
    #allocation1 [shape = 'u8[4096]{0}', space=vmem, size = 0x1000, scoped, tag = 'scoped mem for input reshape']
    %s3 = sshll.u32 1, 4
    %s4 = ssub.s32 %s3, 1
    %v5 = vld [vmem:[%s0] sm:%s4]
    %6 = vst [vmem:[#allocation1] sm:%s4] %v5
    %v7 = vld [vmem:[#allocation1] sm:$0x1]
    %vm8 = vcmask 261120
    %9 = vst.msk [vmem:[#allocation0] sm:$0x1] %vm8, %v7
    %s10 = scalar_lea.vmem [#allocation1], 2
    %v11 = vld [vmem:[%s10] sm:$0x1]
    %12 = vrot.lane.b32.xlu0 %v11, 64
    %v13 = vpop.permute.xlu0 %12
    %vm14 = vcmask 785920
    %15 = vst.msk [vmem:[#allocation0] sm:$0x1] %vm14, %v13
    %s16 = scalar_lea.vmem [#allocation1], 1
    %v17 = vld [vmem:[%s16] sm:$0x1]
    %18 = vrot.lane.b32.xlu0 %v17, 32
    %v19 = vpop.permute.xlu0 %18
    %vm20 = vcmask 523520
    %21 = vst.msk [vmem:[#allocation0] sm:$0x1] %vm20, %v19
    %s23 = sshll.u32 1, 1
    %s24 = ssub.s32 %s23, 1
    %v26 = vld [vmem:[#allocation0] sm:%s24]
    %s27 = sshll.u32 1, 1
    %s28 = ssub.s32 %s27, 1
    %29 = vst [vmem:[%s1] sm:%s28] %v26

// kernel: tile.23
$region0: #{tile.23}
  #allocation0 [shape = 's32[1]{0}', space=sflag, size = 0x4, scoped, tag = 'scoped memory for tile.23']
  %s0 = inlined_call_operand.vmem [shape: f32[6], index: 0, kind: input, shape index: {}]
  %s1 = inlined_call_operand.vmem [shape: f32[5,6], index: 1, kind: output, shape index: {}]
  // Predicated region
  $region2: #{tile.23} parent=0 // pred_check
    _
  $region3: #{tile.23} parent=0 // pred_check_branch
    %3 = sbr.rel (0) target = $region5
  $region4: #{tile.23} parent=0 // pred_region
    _
  $region5: #{tile.23} parent=0 // pred_fallthru
    _
  %v4 = vld [vmem:[%s0] ss:$0 sm:$0xff]
  %5 = vst [vmem:[%s1] sm:$0xff] %v4

// kernel: tile.24
$region0: #{tile.24}
  %s0 = inlined_call_operand.vmem [shape: f32[5,6], index: 0, kind: input, shape index: {}]
  %s1 = inlined_call_operand.vmem [shape: f32[30], index: 1, kind: output, shape index: {}]
  $region1: #{tile.24} parent=0
    #allocation0 [shape = 'u8[4096]{0}', space=vmem, size = 0x1000, scoped, tag = 'scoped mem for output reshape']
    %v2 = vld [vmem:[%s0] sm:$0x1]
    %vm3 = vcmask 48128
    %4 = vst.msk [vmem:[#allocation0] sm:$0x1] %vm3, %v2
    %s5 = scalar_lea.vmem %s0, 4
    %v6 = vld [vmem:[%s5] sm:$0x1]
    %7 = vrot.lane.b32.xlu0 %v6, 24
    %v8 = vpop.permute.xlu0 %7
    %vm9 = vcmask 244928
    %10 = vst.msk [vmem:[#allocation0] sm:$0x1] %vm9, %v8
    %s11 = scalar_lea.vmem %s0, 3
    %v12 = vld [vmem:[%s11] sm:$0x1]
    %13 = vrot.lane.b32.xlu0 %v12, 18
    %v14 = vpop.permute.xlu0 %13
    %vm15 = vcmask 195728
    %16 = vst.msk [vmem:[#allocation0] sm:$0x1] %vm15, %v14
    %s17 = scalar_lea.vmem %s0, 2
    %v18 = vld [vmem:[%s17] sm:$0x1]
    %19 = vrot.lane.b32.xlu0 %v18, 12
    %v20 = vpop.permute.xlu0 %19
    %vm21 = vcmask 146528
    %22 = vst.msk [vmem:[#allocation0] sm:$0x1] %vm21, %v20
    %s23 = scalar_lea.vmem %s0, 1
    %v24 = vld [vmem:[%s23] sm:$0x1]
    %25 = vrot.lane.b32.xlu0 %v24, 6
    %v26 = vpop.permute.xlu0 %25
    %vm27 = vcmask 97328
    %28 = vst.msk [vmem:[#allocation0] sm:$0x1] %vm27, %v26
    %s30 = sshll.u32 1, 1
    %s31 = ssub.s32 %s30, 1
    %v33 = vld [vmem:[#allocation0] sm:%s31]
    %s34 = sshll.u32 1, 1
    %s35 = ssub.s32 %s34, 1
    %36 = vst [vmem:[%s1] sm:%s35] %v33

// kernel: cnn_lstm_forward.1
$region0: #{cnn_lstm_forward.1}
  #allocation0 [shape = 'u32[]', space=smem, size = 0x4, offset = 0x4, fixed_abs, tag = 'smem constant byte address 0x4 - core index']
  #allocation1 [shape = 'u32[144,128]{1,0:T(1,128)}', space=vmem, size = 0x12000, scoped, tag = 'internal scratch']
  #allocation2 [shape = 'f32[6,1,16]{2,1,0:T(1,128)}', space=vmem, size = 0xc00, scoped, tag = 'scratch operand']
  %s0 = inlined_call_operand.vmem [shape: f32[6,5,70], index: 0, kind: input, shape index: {}]
  %s1 = inlined_call_operand.vmem [shape: f32[6,21,126], index: 1, kind: input, shape index: {}]
  %s2 = inlined_call_operand.vmem [shape: f32[9,126,78], index: 2, kind: input, shape index: {}]
  %s3 = inlined_call_operand.vmem [shape: f32[9,78,30], index: 3, kind: input, shape index: {}]
  %s4 = inlined_call_operand.vmem [shape: f32[3,70,96], index: 4, kind: input, shape index: {}]
  %s5 = inlined_call_operand.vmem [shape: f32[3,30,96], index: 5, kind: input, shape index: {}]
  %s6 = inlined_call_operand.vmem [shape: f32[3,96,16], index: 6, kind: input, shape index: {}]
  %s7 = inlined_call_operand.vmem [shape: f32[2,16,64], index: 7, kind: input, shape index: {}]
  %s8 = inlined_call_operand.vmem [shape: f32[2,2,8,32], index: 8, kind: input, shape index: {}]
  %s9 = inlined_call_operand.vmem [shape: f32[8,128], index: 9, kind: input, shape index: {}]
  %s10 = inlined_call_operand.vmem [shape: f32[2,1], index: 10, kind: output, shape index: {}]
  %s11 = sld [smem:[#allocation0]]
  $region77: #{cnn_lstm_forward.1} parent=0
    _
  %s13 = ssub.s32 1, %s11
  %s14 = scalar_select 0, %s13, %s11
  loop: start=0, step=1, limit=8
  $region2: #{cnn_lstm_forward.1} parent=0 // loop_pre_header
    _
  $region3: #{cnn_lstm_forward.1} parent=0 // loop_header
    %s16 = sphi 0, %s20
    %p17 = scmp.ge.s32.totalorder %s16, 8
    %s26 = sphi 0, %s28
    %s29 = sphi 0, %s26
    %s30 = sphi 0, %s29
    %s46 = sphi 0, %s30
    %s52 = sphi 0, %s54
    %s55 = sphi 0, %s52
    %s56 = sphi 0, %s55
    %s72 = sphi 0, %s56
    %s76 = sphi 0, %s76
    %s78 = sphi 0, %s76
    %s79 = sphi 0, %s78
    %s93 = sphi 0, %s79
    %s97 = sphi 0, %s97
    %s99 = sphi 0, %s97
    %s100 = sphi 0, %s99
    %s114 = sphi 0, %s100
    %s118 = sphi 0, %s118
    %s120 = sphi 0, %s118
    %s121 = sphi 0, %s120
    %s135 = sphi 0, %s121
    %s139 = sphi 0, %s139
    %s141 = sphi 0, %s139
    %s142 = sphi 0, %s141
    %s156 = sphi 0, %s142
    %s160 = sphi 0, %s160
    %s162 = sphi 0, %s160
    %s163 = sphi 0, %s162
    %s177 = sphi 0, %s163
    %s181 = sphi 0, %s181
    %s183 = sphi 0, %s181
    %s184 = sphi 0, %s183
    %s198 = sphi 0, %s184
    %s202 = sphi 0, %s202
    %s204 = sphi 0, %s202
    %s205 = sphi 0, %s204
    %s219 = sphi 0, %s205
    %s223 = sphi 0, %s223
    %s225 = sphi 0, %s223
    %s226 = sphi 0, %s225
    %s240 = sphi 0, %s226
    %s244 = sphi 0, %s244
    %s246 = sphi 0, %s244
    %s247 = sphi 0, %s246
    %s261 = sphi 0, %s247
  $region4: #{cnn_lstm_forward.1} parent=0 // loop_header_branch
    %19 = sbr.rel (%p17) target = $region8
  $region5: #{cnn_lstm_forward.1} parent=0 // loop_body
    %s21 = ssub.s32 %s16, 1
    %s22 = ssub.s32 %s16, 2
    %s23 = sadd.s32 %s16, 1
    %s24 = ssub.s32 %s16, %s23
    %p25 = scmp.eq.s32.totalorder %s24, 0
    %s27 = sadd.s32 %s26, 1
    %s28 = scalar_select %p25, %s26, %s27
    %p31 = pneg %p25
    %p32 = scmp.eq.s32.totalorder %s16, 5
    %p33 = por %p31, %p32
    %p34 = scmp.ne.s32.totalorder %s26, %s29
    %p35 = scmp.eq.s32.totalorder %s16, 0
    %p36 = por %p34, %p35
    %p37 = scmp.ne.s32.totalorder %s26, %s29
    %p38 = scmp.eq.s32.totalorder %s21, 5
    %p39 = por %p37, %p38
    %p40 = scmp.ne.s32.totalorder %s29, %s30
    %p41 = scmp.eq.s32.totalorder %s21, 0
    %p42 = por %p40, %p41
    %p43 = scmp.ne.s32.totalorder %s29, %s30
    %p44 = scmp.eq.s32.totalorder %s22, 5
    %p45 = por %p43, %p44
    %p47 = scmp.ne.s32.totalorder %s30, %s46
    %p48 = scmp.eq.s32.totalorder %s22, 0
    %p49 = por %p47, %p48
    %s50 = ssub.s32 %s16, %s23
    %p51 = scmp.eq.s32.totalorder %s50, 0
    %s53 = sadd.s32 %s52, 1
    %s54 = scalar_select %p51, %s52, %s53
    %p57 = pneg %p51
    %p58 = scmp.eq.s32.totalorder %s16, 5
    %p59 = por %p57, %p58
    %p60 = scmp.ne.s32.totalorder %s52, %s55
    %p61 = scmp.eq.s32.totalorder %s16, 0
    %p62 = por %p60, %p61
    %p63 = scmp.ne.s32.totalorder %s52, %s55
    %p64 = scmp.eq.s32.totalorder %s21, 5
    %p65 = por %p63, %p64
    %p66 = scmp.ne.s32.totalorder %s55, %s56
    %p67 = scmp.eq.s32.totalorder %s21, 0
    %p68 = por %p66, %p67
    %p69 = scmp.ne.s32.totalorder %s55, %s56
    %p70 = scmp.eq.s32.totalorder %s22, 5
    %p71 = por %p69, %p70
    %p73 = scmp.ne.s32.totalorder %s56, %s72
    %p74 = scmp.eq.s32.totalorder %s22, 0
    %p75 = por %p73, %p74
    %s77 = sadd.s32 %s76, 1
    %p80 = scmp.eq.s32.totalorder %s16, 5
    %p81 = scmp.ne.s32.totalorder %s76, %s78
    %p82 = scmp.eq.s32.totalorder %s16, 0
    %p83 = por %p81, %p82
    %p84 = scmp.ne.s32.totalorder %s76, %s78
    %p85 = scmp.eq.s32.totalorder %s21, 5
    %p86 = por %p84, %p85
    %p87 = scmp.ne.s32.totalorder %s78, %s79
    %p88 = scmp.eq.s32.totalorder %s21, 0
    %p89 = por %p87, %p88
    %p90 = scmp.ne.s32.totalorder %s78, %s79
    %p91 = scmp.eq.s32.totalorder %s22, 5
    %p92 = por %p90, %p91
    %p94 = scmp.ne.s32.totalorder %s79, %s93
    %p95 = scmp.eq.s32.totalorder %s22, 0
    %p96 = por %p94, %p95
    %s98 = sadd.s32 %s97, 1
    %p101 = scmp.eq.s32.totalorder %s16, 5
    %p102 = scmp.ne.s32.totalorder %s97, %s99
    %p103 = scmp.eq.s32.totalorder %s16, 0
    %p104 = por %p102, %p103
    %p105 = scmp.ne.s32.totalorder %s97, %s99
    %p106 = scmp.eq.s32.totalorder %s21, 5
    %p107 = por %p105, %p106
    %p108 = scmp.ne.s32.totalorder %s99, %s100
    %p109 = scmp.eq.s32.totalorder %s21, 0
    %p110 = por %p108, %p109
    %p111 = scmp.ne.s32.totalorder %s99, %s100
    %p112 = scmp.eq.s32.totalorder %s22, 5
    %p113 = por %p111, %p112
    %p115 = scmp.ne.s32.totalorder %s100, %s114
    %p116 = scmp.eq.s32.totalorder %s22, 0
    %p117 = por %p115, %p116
    %s119 = sadd.s32 %s118, 1
    %p122 = scmp.eq.s32.totalorder %s16, 5
    %p123 = scmp.ne.s32.totalorder %s118, %s120
    %p124 = scmp.eq.s32.totalorder %s16, 0
    %p125 = por %p123, %p124
    %p126 = scmp.ne.s32.totalorder %s118, %s120
    %p127 = scmp.eq.s32.totalorder %s21, 5
    %p128 = por %p126, %p127
    %p129 = scmp.ne.s32.totalorder %s120, %s121
    %p130 = scmp.eq.s32.totalorder %s21, 0
    %p131 = por %p129, %p130
    %p132 = scmp.ne.s32.totalorder %s120, %s121
    %p133 = scmp.eq.s32.totalorder %s22, 5
    %p134 = por %p132, %p133
    %p136 = scmp.ne.s32.totalorder %s121, %s135
    %p137 = scmp.eq.s32.totalorder %s22, 0
    %p138 = por %p136, %p137
    %s140 = sadd.s32 %s139, 1
    %p143 = scmp.eq.s32.totalorder %s16, 5
    %p144 = scmp.ne.s32.totalorder %s139, %s141
    %p145 = scmp.eq.s32.totalorder %s16, 0
    %p146 = por %p144, %p145
    %p147 = scmp.ne.s32.totalorder %s139, %s141
    %p148 = scmp.eq.s32.totalorder %s21, 5
    %p149 = por %p147, %p148
    %p150 = scmp.ne.s32.totalorder %s141, %s142
    %p151 = scmp.eq.s32.totalorder %s21, 0
    %p152 = por %p150, %p151
    %p153 = scmp.ne.s32.totalorder %s141, %s142
    %p154 = scmp.eq.s32.totalorder %s22, 5
    %p155 = por %p153, %p154
    %p157 = scmp.ne.s32.totalorder %s142, %s156
    %p158 = scmp.eq.s32.totalorder %s22, 0
    %p159 = por %p157, %p158
    %s161 = sadd.s32 %s160, 1
    %p164 = scmp.eq.s32.totalorder %s16, 5
    %p165 = scmp.ne.s32.totalorder %s160, %s162
    %p166 = scmp.eq.s32.totalorder %s16, 0
    %p167 = por %p165, %p166
    %p168 = scmp.ne.s32.totalorder %s160, %s162
    %p169 = scmp.eq.s32.totalorder %s21, 5
    %p170 = por %p168, %p169
    %p171 = scmp.ne.s32.totalorder %s162, %s163
    %p172 = scmp.eq.s32.totalorder %s21, 0
    %p173 = por %p171, %p172
    %p174 = scmp.ne.s32.totalorder %s162, %s163
    %p175 = scmp.eq.s32.totalorder %s22, 5
    %p176 = por %p174, %p175
    %p178 = scmp.ne.s32.totalorder %s163, %s177
    %p179 = scmp.eq.s32.totalorder %s22, 0
    %p180 = por %p178, %p179
    %s182 = sadd.s32 %s181, 1
    %p185 = scmp.eq.s32.totalorder %s16, 5
    %p186 = scmp.ne.s32.totalorder %s181, %s183
    %p187 = scmp.eq.s32.totalorder %s16, 0
    %p188 = por %p186, %p187
    %p189 = scmp.ne.s32.totalorder %s181, %s183
    %p190 = scmp.eq.s32.totalorder %s21, 5
    %p191 = por %p189, %p190
    %p192 = scmp.ne.s32.totalorder %s183, %s184
    %p193 = scmp.eq.s32.totalorder %s21, 0
    %p194 = por %p192, %p193
    %p195 = scmp.ne.s32.totalorder %s183, %s184
    %p196 = scmp.eq.s32.totalorder %s22, 5
    %p197 = por %p195, %p196
    %p199 = scmp.ne.s32.totalorder %s184, %s198
    %p200 = scmp.eq.s32.totalorder %s22, 0
    %p201 = por %p199, %p200
    %s203 = sadd.s32 %s202, 1
    %p206 = scmp.eq.s32.totalorder %s16, 5
    %p207 = scmp.ne.s32.totalorder %s202, %s204
    %p208 = scmp.eq.s32.totalorder %s16, 0
    %p209 = por %p207, %p208
    %p210 = scmp.ne.s32.totalorder %s202, %s204
    %p211 = scmp.eq.s32.totalorder %s21, 5
    %p212 = por %p210, %p211
    %p213 = scmp.ne.s32.totalorder %s204, %s205
    %p214 = scmp.eq.s32.totalorder %s21, 0
    %p215 = por %p213, %p214
    %p216 = scmp.ne.s32.totalorder %s204, %s205
    %p217 = scmp.eq.s32.totalorder %s22, 5
    %p218 = por %p216, %p217
    %p220 = scmp.ne.s32.totalorder %s205, %s219
    %p221 = scmp.eq.s32.totalorder %s22, 0
    %p222 = por %p220, %p221
    %s224 = sadd.s32 %s223, 1
    %p227 = scmp.eq.s32.totalorder %s16, 5
    %p228 = scmp.ne.s32.totalorder %s223, %s225
    %p229 = scmp.eq.s32.totalorder %s16, 0
    %p230 = por %p228, %p229
    %p231 = scmp.ne.s32.totalorder %s223, %s225
    %p232 = scmp.eq.s32.totalorder %s21, 5
    %p233 = por %p231, %p232
    %p234 = scmp.ne.s32.totalorder %s225, %s226
    %p235 = scmp.eq.s32.totalorder %s21, 0
    %p236 = por %p234, %p235
    %p237 = scmp.ne.s32.totalorder %s225, %s226
    %p238 = scmp.eq.s32.totalorder %s22, 5
    %p239 = por %p237, %p238
    %p241 = scmp.ne.s32.totalorder %s226, %s240
    %p242 = scmp.eq.s32.totalorder %s22, 0
    %p243 = por %p241, %p242
    %s245 = sadd.s32 %s244, 1
    %p248 = scmp.eq.s32.totalorder %s16, 5
    %p249 = scmp.ne.s32.totalorder %s244, %s246
    %p250 = scmp.eq.s32.totalorder %s16, 0
    %p251 = por %p249, %p250
    %p252 = scmp.ne.s32.totalorder %s244, %s246
    %p253 = scmp.eq.s32.totalorder %s21, 5
    %p254 = por %p252, %p253
    %p255 = scmp.ne.s32.totalorder %s246, %s247
    %p256 = scmp.eq.s32.totalorder %s21, 0
    %p257 = por %p255, %p256
    %p258 = scmp.ne.s32.totalorder %s246, %s247
    %p259 = scmp.eq.s32.totalorder %s22, 5
    %p260 = por %p258, %p259
    %p262 = scmp.ne.s32.totalorder %s247, %s261
    %p263 = scmp.eq.s32.totalorder %s22, 0
    %p264 = por %p262, %p263
    %p265 = scmp.le.s32.totalorder 1, %s16
    %p266 = scmp.lt.s32.totalorder %s16, 7
    %p267 = pnand %p265, %p266
    %p268 = pneg %p267
    // Predicated region
    $region9: #{cnn_lstm_forward.1} parent=5 // pred_check
      _
    $region10: #{cnn_lstm_forward.1} parent=5 // pred_check_branch
      %270 = sbr.rel (%p267) target = $region12
    $region11: #{cnn_lstm_forward.1} parent=5 // pred_region
      %s271 = ssub.s32 %s16, 1
      // Predicated region
      $region13: #{cnn_lstm_forward.1} parent=11 // pred_check
        %p272 = pneg %p89
      $region14: #{cnn_lstm_forward.1} parent=11 // pred_check_branch
        %274 = sbr.rel (%p272) target = $region16
      $region15: #{cnn_lstm_forward.1} parent=11 // pred_region
        _
      $region16: #{cnn_lstm_forward.1} parent=11 // pred_fallthru
        _
      // Predicated region
      $region17: #{cnn_lstm_forward.1} parent=11 // pred_check
        %p275 = pneg %p110
      $region18: #{cnn_lstm_forward.1} parent=11 // pred_check_branch
        %277 = sbr.rel (%p275) target = $region20
      $region19: #{cnn_lstm_forward.1} parent=11 // pred_region
        _
      $region20: #{cnn_lstm_forward.1} parent=11 // pred_fallthru
        _
      // Predicated region
      $region21: #{cnn_lstm_forward.1} parent=11 // pred_check
        %p278 = pneg %p131
      $region22: #{cnn_lstm_forward.1} parent=11 // pred_check_branch
        %280 = sbr.rel (%p278) target = $region24
      $region23: #{cnn_lstm_forward.1} parent=11 // pred_region
        _
      $region24: #{cnn_lstm_forward.1} parent=11 // pred_fallthru
        _
      // Predicated region
      $region25: #{cnn_lstm_forward.1} parent=11 // pred_check
        %p281 = pneg %p152
      $region26: #{cnn_lstm_forward.1} parent=11 // pred_check_branch
        %283 = sbr.rel (%p281) target = $region28
      $region27: #{cnn_lstm_forward.1} parent=11 // pred_region
        _
      $region28: #{cnn_lstm_forward.1} parent=11 // pred_fallthru
        _
      // Predicated region
      $region29: #{cnn_lstm_forward.1} parent=11 // pred_check
        %p284 = pneg %p173
      $region30: #{cnn_lstm_forward.1} parent=11 // pred_check_branch
        %286 = sbr.rel (%p284) target = $region32
      $region31: #{cnn_lstm_forward.1} parent=11 // pred_region
        _
      $region32: #{cnn_lstm_forward.1} parent=11 // pred_fallthru
        _
      // Predicated region
      $region33: #{cnn_lstm_forward.1} parent=11 // pred_check
        %p287 = pneg %p194
      $region34: #{cnn_lstm_forward.1} parent=11 // pred_check_branch
        %289 = sbr.rel (%p287) target = $region36
      $region35: #{cnn_lstm_forward.1} parent=11 // pred_region
        _
      $region36: #{cnn_lstm_forward.1} parent=11 // pred_fallthru
        _
      // Predicated region
      $region37: #{cnn_lstm_forward.1} parent=11 // pred_check
        %p290 = pneg %p215
      $region38: #{cnn_lstm_forward.1} parent=11 // pred_check_branch
        %292 = sbr.rel (%p290) target = $region40
      $region39: #{cnn_lstm_forward.1} parent=11 // pred_region
        _
      $region40: #{cnn_lstm_forward.1} parent=11 // pred_fallthru
        _
      // Predicated region
      $region41: #{cnn_lstm_forward.1} parent=11 // pred_check
        %p293 = pneg %p236
      $region42: #{cnn_lstm_forward.1} parent=11 // pred_check_branch
        %295 = sbr.rel (%p293) target = $region44
      $region43: #{cnn_lstm_forward.1} parent=11 // pred_region
        _
      $region44: #{cnn_lstm_forward.1} parent=11 // pred_fallthru
        _
    $region12: #{cnn_lstm_forward.1} parent=5 // pred_fallthru
      _
    %p296 = scmp.lt.s32.totalorder %s16, 6
    // Predicated region
    $region45: #{cnn_lstm_forward.1} parent=5 // pred_check
      %p297 = pneg %p296
    $region46: #{cnn_lstm_forward.1} parent=5 // pred_check_branch
      %299 = sbr.rel (%p297) target = $region48
    $region47: #{cnn_lstm_forward.1} parent=5 // pred_region
      // Predicated region
      $region49: #{cnn_lstm_forward.1} parent=47 // pred_check
        %p300 = pneg %p36
      $region50: #{cnn_lstm_forward.1} parent=47 // pred_check_branch
        %302 = sbr.rel (%p300) target = $region52
      $region51: #{cnn_lstm_forward.1} parent=47 // pred_region
        %p303 = scmp.lt.s32.totalorder %s16, 5
        %s304 = scalar_select %p303, %s16, 5
        %s305 = smul.addr %s304, 8
        %s306 = scalar_lea.vmem %s0, %s305
      $region52: #{cnn_lstm_forward.1} parent=47 // pred_fallthru
        _
      // Predicated region
      $region53: #{cnn_lstm_forward.1} parent=47 // pred_check
        %p307 = pneg %p62
      $region54: #{cnn_lstm_forward.1} parent=47 // pred_check_branch
        %309 = sbr.rel (%p307) target = $region56
      $region55: #{cnn_lstm_forward.1} parent=47 // pred_region
        %p310 = scmp.lt.s32.totalorder %s16, 5
        %s311 = scalar_select %p310, %s16, 5
        %s312 = smul.addr %s311, 3
        %s313 = smul.addr %s312, 8
        %s314 = scalar_lea.vmem %s1, %s313
      $region56: #{cnn_lstm_forward.1} parent=47 // pred_fallthru
        _
    $region48: #{cnn_lstm_forward.1} parent=5 // pred_fallthru
      _
    %p315 = scmp.le.s32.totalorder 1, %s16
    %p316 = scmp.lt.s32.totalorder %s16, 7
    %p317 = pnand %p315, %p316
    %p318 = pneg %p317
    // Predicated region
    $region57: #{cnn_lstm_forward.1} parent=5 // pred_check
      _
    $region58: #{cnn_lstm_forward.1} parent=5 // pred_check_branch
      %320 = sbr.rel (%p317) target = $region60
    $region59: #{cnn_lstm_forward.1} parent=5 // pred_region
      %s321 = ssub.s32 %s16, 1
      %p322 = scmp.lt.s32.totalorder %s21, 5
      %s323 = scalar_select %p322, %s21, 5
      %s324 = smul.addr %s323, 8
      %s325 = scalar_lea.vmem %s0, %s324
      %p326 = pneg %p42
      %p327 = pneg %p39
      %p328 = scmp.lt.s32.totalorder %s21, 5
      %s329 = scalar_select %p328, %s21, 5
      %s330 = smul.addr %s329, 3
      %s331 = smul.addr %s330, 8
      %s332 = scalar_lea.vmem %s1, %s331
      %p333 = pneg %p68
      %p334 = pneg %p65
      %p335 = pneg %p89
      %p336 = pneg %p86
      %p337 = pneg %p110
      %p338 = pneg %p107
      %p339 = pneg %p131
      %p340 = pneg %p128
      %p341 = pneg %p152
      %p342 = pneg %p149
      %p343 = pneg %p173
      %p344 = pneg %p170
      %p345 = pneg %p194
      %p346 = pneg %p191
      %p347 = pneg %p215
      %p348 = pneg %p212
      %p349 = pneg %p236
      %p350 = pneg %p233
      %p351 = pneg %p257
      %p352 = pneg %p254
      %p353 = scmp.lt.s32.totalorder %s21, 5
      %s354 = scalar_select %p353, %s21, 5
      %s355 = smul.addr %s354, 8
      %s356 = scalar_lea.vmem %s0, %s355
      %p357 = scmp.lt.s32.totalorder %s21, 5
      %s358 = scalar_select %p357, %s21, 5
      %s359 = smul.addr %s358, 3
      %s360 = smul.addr %s359, 8
      %s361 = scalar_lea.vmem %s1, %s360
      %v362 = vld [vmem:[%s9] sm:$0xff]
      %v363 = vld [vmem:[%s356] sm:$0x1f]
      %v364 = vld [vmem:[%s361] sm:$0xff]
      %v365 = vld [vmem:[%s361 + $0x8] sm:$0xff]
      %v366 = vld [vmem:[%s361 + $0x10] sm:$0x1f]
      %v367 = vld [vmem:[%s2] sm:$0xff]
      %v368 = vld [vmem:[%s2 + $0x8] sm:$0xff]
      %v369 = vld [vmem:[%s2 + $0x10] sm:$0xff]
      %v370 = vld [vmem:[%s2 + $0x18] sm:$0xff]
      %v371 = vld [vmem:[%s2 + $0x20] sm:$0xff]
      %v372 = vld [vmem:[%s2 + $0x28] sm:$0xff]
      %v373 = vld [vmem:[%s2 + $0x30] sm:$0xff]
      %v374 = vld [vmem:[%s2 + $0x38] sm:$0xff]
      %v375 = vld [vmem:[%s2 + $0x40] sm:$0xff]
      %v376 = vld [vmem:[%s2 + $0x48] sm:$0xff]
      %v377 = vld [vmem:[%s2 + $0x50] sm:$0xff]
      %v378 = vld [vmem:[%s2 + $0x58] sm:$0xff]
      %v379 = vld [vmem:[%s2 + $0x60] sm:$0xff]
      %v380 = vld [vmem:[%s2 + $0x68] sm:$0xff]
      %v381 = vld [vmem:[%s2 + $0x70] sm:$0xff]
      %v382 = vld [vmem:[%s2 + $0x78] sm:$0x3f]
      %s383 = scalar_lea.vmem %s2, 128
      %v384 = vld [vmem:[%s383] sm:$0xff]
      %v385 = vld [vmem:[%s383 + $0x8] sm:$0xff]
      %v386 = vld [vmem:[%s383 + $0x10] sm:$0xff]
      %v387 = vld [vmem:[%s383 + $0x18] sm:$0xff]
      %v388 = vld [vmem:[%s383 + $0x20] sm:$0xff]
      %v389 = vld [vmem:[%s383 + $0x28] sm:$0xff]
      %v390 = vld [vmem:[%s383 + $0x30] sm:$0xff]
      %v391 = vld [vmem:[%s383 + $0x38] sm:$0xff]
      %v392 = vld [vmem:[%s383 + $0x40] sm:$0xff]
      %v393 = vld [vmem:[%s383 + $0x48] sm:$0xff]
      %v394 = vld [vmem:[%s383 + $0x50] sm:$0xff]
      %v395 = vld [vmem:[%s383 + $0x58] sm:$0xff]
      %v396 = vld [vmem:[%s383 + $0x60] sm:$0xff]
      %v397 = vld [vmem:[%s383 + $0x68] sm:$0xff]
      %v398 = vld [vmem:[%s383 + $0x70] sm:$0xff]
      %v399 = vld [vmem:[%s383 + $0x78] sm:$0x3f]
      %vm402 = vcmask 1046528
      %v403 = vrot.slane %v364, 1
      %v404 = vrot.slane %v365, 1
      %v405 = vsel %vm402, %v403, %v404
      %vm406 = vcmask 1031168
      %v407 = vsel %vm406, %v405, 0
      %v409 = vsel %vm406, %v404, 0
      %vm411 = vcmask 1045504
      %v413 = vsel %vm411, %v399, 0
      %415 = vmatprep.subr.mxu0 0.0
      %416 = vmatpush1.msra.mxu0 %v413
      %417 = vmatprep.subr.mxu0 0.0
      %418 = vmatpush1.msra.mxu0 %v398
      %419 = vmatprep.subr.mxu0 0.0
      %420 = vmatpush1.msra.mxu0 %v397
      %421 = vmatprep.subr.mxu0 0.0
      %422 = vmatpush1.msra.mxu0 %v396
      %423 = vmatprep.subr.mxu0 0.0
      %424 = vmatpush1.msra.mxu0 %v395
      %425 = vmatprep.subr.mxu0 0.0
      %426 = vmatpush1.msra.mxu0 %v394
      %427 = vmatprep.subr.mxu0 0.0
      %428 = vmatpush1.msra.mxu0 %v393
      %429 = vmatprep.subr.mxu0 0.0
      %430 = vmatpush1.msra.mxu0 %v392
      %431 = vmatprep.subr.mxu0 0.0
      %432 = vmatpush1.msra.mxu0 %v391
      %433 = vmatprep.subr.mxu0 0.0
      %434 = vmatpush1.msra.mxu0 %v390
      %435 = vmatprep.subr.mxu0 0.0
      %436 = vmatpush1.msra.mxu0 %v389
      %437 = vmatprep.subr.mxu0 0.0
      %438 = vmatpush1.msra.mxu0 %v388
      %439 = vmatprep.subr.mxu0 0.0
      %440 = vmatpush1.msra.mxu0 %v387
      %441 = vmatprep.subr.mxu0 0.0
      %442 = vmatpush1.msra.mxu0 %v386
      %443 = vmatprep.subr.mxu0 0.0
      %444 = vmatpush1.msra.mxu0 %v385
      %445 = vmatprep.subr.mxu0 0.0
      %446 = vmatpush1.msra.mxu0 %v384
      %447 = vmatprep.subr.mxu0 0.0
      %448 = vmatpush2.msra.mxu0 0.0
      %449 = vmatprep.subr.mxu0 0.0
      %450 = vmatpush2.msra.mxu0 0.0
      %451 = vmatprep.subr.mxu0 0.0
      %452 = vmatpush2.msra.mxu0 0.0
      %453 = vmatprep.subr.mxu0 0.0
      %454 = vmatpush2.msra.mxu0 0.0
      %455 = vmatprep.subr.mxu0 0.0
      %456 = vmatpush2.msra.mxu0 0.0
      %457 = vmatprep.subr.mxu0 0.0
      %458 = vmatpush2.msra.mxu0 0.0
      %459 = vmatprep.subr.mxu0 0.0
      %460 = vmatpush2.msra.mxu0 0.0
      %461 = vmatprep.subr.mxu0 0.0
      %462 = vmatpush2.msra.mxu0 0.0
      %463 = vmatprep.subr.mxu0 0.0
      %464 = vmatpush2.msra.mxu0 0.0
      %465 = vmatprep.subr.mxu0 0.0
      %466 = vmatpush2.msra.mxu0 0.0
      %467 = vmatprep.subr.mxu0 0.0
      %468 = vmatpush2.msra.mxu0 0.0
      %469 = vmatprep.subr.mxu0 0.0
      %470 = vmatpush2.msra.mxu0 0.0
      %471 = vmatprep.subr.mxu0 0.0
      %472 = vmatpush2.msra.mxu0 0.0
      %473 = vmatprep.subr.mxu0 0.0
      %474 = vmatpush2.msra.mxu0 0.0
      %475 = vmatprep.subr.mxu0 0.0
      %476 = vmatpush2.msra.mxu0 0.0
      %477 = vmatprep.subr.mxu0 0.0
      %478 = vmatpush2.msra.mxu0 0.0
      %479 = vmatprep.mubr.f32.mxu0 0.0
      %480 = vmatmul.mubr.f32.gmra.mxu0 %v407
      %v481 = vpop.f32.mrf.mxu0
      %v482 = vadd.f32 0.0, %v481
      %v483 = vpop.f32.mrf.mxu0
      %484 = vmatprep.mubr.f32.mxu0 0.0
      %485 = vmatmul.mubr.f32.gmra.mxu0 %v409
      %v486 = vpop.f32.mrf.mxu0
      %v487 = vadd.f32 0.0, %v486
      %v488 = vpop.f32.mrf.mxu0
      %489 = vdwg.mxu0
      %v490 = vsel %vm406, %v364, 0
      %v492 = vsel %vm406, %v365, 0
      %v495 = vsel %vm411, %v382, 0
      %497 = vmatprep.subr.mxu0 0.0
      %498 = vmatpush1.msra.mxu0 %v495
      %499 = vmatprep.subr.mxu0 0.0
      %500 = vmatpush1.msra.mxu0 %v381
      %501 = vmatprep.subr.mxu0 0.0
      %502 = vmatpush1.msra.mxu0 %v380
      %503 = vmatprep.subr.mxu0 0.0
      %504 = vmatpush1.msra.mxu0 %v379
      %505 = vmatprep.subr.mxu0 0.0
      %506 = vmatpush1.msra.mxu0 %v378
      %507 = vmatprep.subr.mxu0 0.0
      %508 = vmatpush1.msra.mxu0 %v377
      %509 = vmatprep.subr.mxu0 0.0
      %510 = vmatpush1.msra.mxu0 %v376
      %511 = vmatprep.subr.mxu0 0.0
      %512 = vmatpush1.msra.mxu0 %v375
      %513 = vmatprep.subr.mxu0 0.0
      %514 = vmatpush1.msra.mxu0 %v374
      %515 = vmatprep.subr.mxu0 0.0
      %516 = vmatpush1.msra.mxu0 %v373
      %517 = vmatprep.subr.mxu0 0.0
      %518 = vmatpush1.msra.mxu0 %v372
      %519 = vmatprep.subr.mxu0 0.0
      %520 = vmatpush1.msra.mxu0 %v371
      %521 = vmatprep.subr.mxu0 0.0
      %522 = vmatpush1.msra.mxu0 %v370
      %523 = vmatprep.subr.mxu0 0.0
      %524 = vmatpush1.msra.mxu0 %v369
      %525 = vmatprep.subr.mxu0 0.0
      %526 = vmatpush1.msra.mxu0 %v368
      %527 = vmatprep.subr.mxu0 0.0
      %528 = vmatpush1.msra.mxu0 %v367
      %529 = vmatprep.subr.mxu0 0.0
      %530 = vmatpush2.msra.mxu0 0.0
      %531 = vmatprep.subr.mxu0 0.0
      %532 = vmatpush2.msra.mxu0 0.0
      %533 = vmatprep.subr.mxu0 0.0
      %534 = vmatpush2.msra.mxu0 0.0
      %535 = vmatprep.subr.mxu0 0.0
      %536 = vmatpush2.msra.mxu0 0.0
      %537 = vmatprep.subr.mxu0 0.0
      %538 = vmatpush2.msra.mxu0 0.0
      %539 = vmatprep.subr.mxu0 0.0
      %540 = vmatpush2.msra.mxu0 0.0
      %541 = vmatprep.subr.mxu0 0.0
      %542 = vmatpush2.msra.mxu0 0.0
      %543 = vmatprep.subr.mxu0 0.0
      %544 = vmatpush2.msra.mxu0 0.0
      %545 = vmatprep.subr.mxu0 0.0
      %546 = vmatpush2.msra.mxu0 0.0
      %547 = vmatprep.subr.mxu0 0.0
      %548 = vmatpush2.msra.mxu0 0.0
      %549 = vmatprep.subr.mxu0 0.0
      %550 = vmatpush2.msra.mxu0 0.0
      %551 = vmatprep.subr.mxu0 0.0
      %552 = vmatpush2.msra.mxu0 0.0
      %553 = vmatprep.subr.mxu0 0.0
      %554 = vmatpush2.msra.mxu0 0.0
      %555 = vmatprep.subr.mxu0 0.0
      %556 = vmatpush2.msra.mxu0 0.0
      %557 = vmatprep.subr.mxu0 0.0
      %558 = vmatpush2.msra.mxu0 0.0
      %559 = vmatprep.subr.mxu0 0.0
      %560 = vmatpush2.msra.mxu0 0.0
      %561 = vmatprep.mubr.f32.mxu0 0.0
      %562 = vmatmul.mubr.f32.gmra.mxu0 %v490
      %v563 = vpop.f32.mrf.mxu0
      %v564 = vadd.f32 %v482, %v563
      %v565 = vpop.f32.mrf.mxu0
      %566 = vmatprep.mubr.f32.mxu0 0.0
      %567 = vmatmul.mubr.f32.gmra.mxu0 %v492
      %v568 = vpop.f32.mrf.mxu0
      %v569 = vadd.f32 %v487, %v568
      %v570 = vpop.f32.mrf.mxu0
      %571 = vdwg.mxu0
      %s572 = scalar_lea.vmem %s2, 256
      %v573 = vld [vmem:[%s572] sm:$0xff]
      %v574 = vld [vmem:[%s572 + $0x8] sm:$0xff]
      %v575 = vld [vmem:[%s572 + $0x10] sm:$0xff]
      %v576 = vld [vmem:[%s572 + $0x18] sm:$0xff]
      %v577 = vld [vmem:[%s572 + $0x20] sm:$0xff]
      %v578 = vld [vmem:[%s572 + $0x28] sm:$0xff]
      %v579 = vld [vmem:[%s572 + $0x30] sm:$0xff]
      %v580 = vld [vmem:[%s572 + $0x38] sm:$0xff]
      %v581 = vld [vmem:[%s572 + $0x40] sm:$0xff]
      %v582 = vld [vmem:[%s572 + $0x48] sm:$0xff]
      %v583 = vld [vmem:[%s572 + $0x50] sm:$0xff]
      %v584 = vld [vmem:[%s572 + $0x58] sm:$0xff]
      %v585 = vld [vmem:[%s572 + $0x60] sm:$0xff]
      %v586 = vld [vmem:[%s572 + $0x68] sm:$0xff]
      %v587 = vld [vmem:[%s572 + $0x70] sm:$0xff]
      %v588 = vld [vmem:[%s572 + $0x78] sm:$0x3f]
      %v589 = vrot.slane %v364, 2
      %v590 = vrot.slane %v365, 2
      %v591 = vsel %vm411, %v589, %v590
      %v592 = vsel %vm406, %v591, 0
      %v594 = vsel %vm406, %v590, 0
      %v597 = vsel %vm411, %v588, 0
      %599 = vmatprep.subr.mxu0 0.0
      %600 = vmatpush1.msra.mxu0 %v597
      %601 = vmatprep.subr.mxu0 0.0
      %602 = vmatpush1.msra.mxu0 %v587
      %603 = vmatprep.subr.mxu0 0.0
      %604 = vmatpush1.msra.mxu0 %v586
      %605 = vmatprep.subr.mxu0 0.0
      %606 = vmatpush1.msra.mxu0 %v585
      %607 = vmatprep.subr.mxu0 0.0
      %608 = vmatpush1.msra.mxu0 %v584
      %609 = vmatprep.subr.mxu0 0.0
      %610 = vmatpush1.msra.mxu0 %v583
      %611 = vmatprep.subr.mxu0 0.0
      %612 = vmatpush1.msra.mxu0 %v582
      %613 = vmatprep.subr.mxu0 0.0
      %614 = vmatpush1.msra.mxu0 %v581
      %615 = vmatprep.subr.mxu0 0.0
      %616 = vmatpush1.msra.mxu0 %v580
      %617 = vmatprep.subr.mxu0 0.0
      %618 = vmatpush1.msra.mxu0 %v579
      %619 = vmatprep.subr.mxu0 0.0
      %620 = vmatpush1.msra.mxu0 %v578
      %621 = vmatprep.subr.mxu0 0.0
      %622 = vmatpush1.msra.mxu0 %v577
      %623 = vmatprep.subr.mxu0 0.0
      %624 = vmatpush1.msra.mxu0 %v576
      %625 = vmatprep.subr.mxu0 0.0
      %626 = vmatpush1.msra.mxu0 %v575
      %627 = vmatprep.subr.mxu0 0.0
      %628 = vmatpush1.msra.mxu0 %v574
      %629 = vmatprep.subr.mxu0 0.0
      %630 = vmatpush1.msra.mxu0 %v573
      %631 = vmatprep.subr.mxu0 0.0
      %632 = vmatpush2.msra.mxu0 0.0
      %633 = vmatprep.subr.mxu0 0.0
      %634 = vmatpush2.msra.mxu0 0.0
      %635 = vmatprep.subr.mxu0 0.0
      %636 = vmatpush2.msra.mxu0 0.0
      %637 = vmatprep.subr.mxu0 0.0
      %638 = vmatpush2.msra.mxu0 0.0
      %639 = vmatprep.subr.mxu0 0.0
      %640 = vmatpush2.msra.mxu0 0.0
      %641 = vmatprep.subr.mxu0 0.0
      %642 = vmatpush2.msra.mxu0 0.0
      %643 = vmatprep.subr.mxu0 0.0
      %644 = vmatpush2.msra.mxu0 0.0
      %645 = vmatprep.subr.mxu0 0.0
      %646 = vmatpush2.msra.mxu0 0.0
      %647 = vmatprep.subr.mxu0 0.0
      %648 = vmatpush2.msra.mxu0 0.0
      %649 = vmatprep.subr.mxu0 0.0
      %650 = vmatpush2.msra.mxu0 0.0
      %651 = vmatprep.subr.mxu0 0.0
      %652 = vmatpush2.msra.mxu0 0.0
      %653 = vmatprep.subr.mxu0 0.0
      %654 = vmatpush2.msra.mxu0 0.0
      %655 = vmatprep.subr.mxu0 0.0
      %656 = vmatpush2.msra.mxu0 0.0
      %657 = vmatprep.subr.mxu0 0.0
      %658 = vmatpush2.msra.mxu0 0.0
      %659 = vmatprep.subr.mxu0 0.0
      %660 = vmatpush2.msra.mxu0 0.0
      %661 = vmatprep.subr.mxu0 0.0
      %662 = vmatpush2.msra.mxu0 0.0
      %663 = vmatprep.mubr.f32.mxu0 0.0
      %664 = vmatmul.mubr.f32.gmra.mxu0 %v592
      %v665 = vpop.f32.mrf.mxu0
      %v666 = vadd.f32 0.0, %v665
      %v667 = vpop.f32.mrf.mxu0
      %668 = vmatprep.mubr.f32.mxu0 0.0
      %669 = vmatmul.mubr.f32.gmra.mxu0 %v594
      %v670 = vpop.f32.mrf.mxu0
      %v671 = vadd.f32 0.0, %v670
      %v672 = vpop.f32.mrf.mxu0
      %673 = vdwg.mxu0
      %v674 = vadd.f32 %v564, %v666
      %v675 = vadd.f32 %v569, %v671
      %s676 = scalar_lea.vmem %s2, 384
      %v677 = vld [vmem:[%s676] sm:$0xff]
      %v678 = vld [vmem:[%s676 + $0x8] sm:$0xff]
      %v679 = vld [vmem:[%s676 + $0x10] sm:$0xff]
      %v680 = vld [vmem:[%s676 + $0x18] sm:$0xff]
      %v681 = vld [vmem:[%s676 + $0x20] sm:$0xff]
      %v682 = vld [vmem:[%s676 + $0x28] sm:$0xff]
      %v683 = vld [vmem:[%s676 + $0x30] sm:$0xff]
      %v684 = vld [vmem:[%s676 + $0x38] sm:$0xff]
      %v685 = vld [vmem:[%s676 + $0x40] sm:$0xff]
      %v686 = vld [vmem:[%s676 + $0x48] sm:$0xff]
      %v687 = vld [vmem:[%s676 + $0x50] sm:$0xff]
      %v688 = vld [vmem:[%s676 + $0x58] sm:$0xff]
      %v689 = vld [vmem:[%s676 + $0x60] sm:$0xff]
      %v690 = vld [vmem:[%s676 + $0x68] sm:$0xff]
      %v691 = vld [vmem:[%s676 + $0x70] sm:$0xff]
      %v692 = vld [vmem:[%s676 + $0x78] sm:$0x3f]
      %vm693 = vcmask 1044480
      %v694 = vrot.slane %v364, 3
      %v695 = vrot.slane %v365, 3
      %v696 = vsel %vm693, %v694, %v695
      %v697 = vsel %vm406, %v696, 0
      %v699 = vsel %vm406, %v695, 0
      %v702 = vsel %vm411, %v692, 0
      %704 = vmatprep.subr.mxu0 0.0
      %705 = vmatpush1.msra.mxu0 %v702
      %706 = vmatprep.subr.mxu0 0.0
      %707 = vmatpush1.msra.mxu0 %v691
      %708 = vmatprep.subr.mxu0 0.0
      %709 = vmatpush1.msra.mxu0 %v690
      %710 = vmatprep.subr.mxu0 0.0
      %711 = vmatpush1.msra.mxu0 %v689
      %712 = vmatprep.subr.mxu0 0.0
      %713 = vmatpush1.msra.mxu0 %v688
      %714 = vmatprep.subr.mxu0 0.0
      %715 = vmatpush1.msra.mxu0 %v687
      %716 = vmatprep.subr.mxu0 0.0
      %717 = vmatpush1.msra.mxu0 %v686
      %718 = vmatprep.subr.mxu0 0.0
      %719 = vmatpush1.msra.mxu0 %v685
      %720 = vmatprep.subr.mxu0 0.0
      %721 = vmatpush1.msra.mxu0 %v684
      %722 = vmatprep.subr.mxu0 0.0
      %723 = vmatpush1.msra.mxu0 %v683
      %724 = vmatprep.subr.mxu0 0.0
      %725 = vmatpush1.msra.mxu0 %v682
      %726 = vmatprep.subr.mxu0 0.0
      %727 = vmatpush1.msra.mxu0 %v681
      %728 = vmatprep.subr.mxu0 0.0
      %729 = vmatpush1.msra.mxu0 %v680
      %730 = vmatprep.subr.mxu0 0.0
      %731 = vmatpush1.msra.mxu0 %v679
      %732 = vmatprep.subr.mxu0 0.0
      %733 = vmatpush1.msra.mxu0 %v678
      %734 = vmatprep.subr.mxu0 0.0
      %735 = vmatpush1.msra.mxu0 %v677
      %736 = vmatprep.subr.mxu0 0.0
      %737 = vmatpush2.msra.mxu0 0.0
      %738 = vmatprep.subr.mxu0 0.0
      %739 = vmatpush2.msra.mxu0 0.0
      %740 = vmatprep.subr.mxu0 0.0
      %741 = vmatpush2.msra.mxu0 0.0
      %742 = vmatprep.subr.mxu0 0.0
      %743 = vmatpush2.msra.mxu0 0.0
      %744 = vmatprep.subr.mxu0 0.0
      %745 = vmatpush2.msra.mxu0 0.0
      %746 = vmatprep.subr.mxu0 0.0
      %747 = vmatpush2.msra.mxu0 0.0
      %748 = vmatprep.subr.mxu0 0.0
      %749 = vmatpush2.msra.mxu0 0.0
      %750 = vmatprep.subr.mxu0 0.0
      %751 = vmatpush2.msra.mxu0 0.0
      %752 = vmatprep.subr.mxu0 0.0
      %753 = vmatpush2.msra.mxu0 0.0
      %754 = vmatprep.subr.mxu0 0.0
      %755 = vmatpush2.msra.mxu0 0.0
      %756 = vmatprep.subr.mxu0 0.0
      %757 = vmatpush2.msra.mxu0 0.0
      %758 = vmatprep.subr.mxu0 0.0
      %759 = vmatpush2.msra.mxu0 0.0
      %760 = vmatprep.subr.mxu0 0.0
      %761 = vmatpush2.msra.mxu0 0.0
      %762 = vmatprep.subr.mxu0 0.0
      %763 = vmatpush2.msra.mxu0 0.0
      %764 = vmatprep.subr.mxu0 0.0
      %765 = vmatpush2.msra.mxu0 0.0
      %766 = vmatprep.subr.mxu0 0.0
      %767 = vmatpush2.msra.mxu0 0.0
      %768 = vmatprep.mubr.f32.mxu0 0.0
      %769 = vmatmul.mubr.f32.gmra.mxu0 %v697
      %v770 = vpop.f32.mrf.mxu0
      %v771 = vadd.f32 0.0, %v770
      %v772 = vpop.f32.mrf.mxu0
      %773 = vmatprep.mubr.f32.mxu0 0.0
      %774 = vmatmul.mubr.f32.gmra.mxu0 %v699
      %v775 = vpop.f32.mrf.mxu0
      %v776 = vadd.f32 0.0, %v775
      %v777 = vpop.f32.mrf.mxu0
      %778 = vdwg.mxu0
      %v779 = vadd.f32 %v674, %v771
      %v780 = vadd.f32 %v675, %v776
      %s781 = scalar_lea.vmem %s2, 512
      %v782 = vld [vmem:[%s781] sm:$0xff]
      %v783 = vld [vmem:[%s781 + $0x8] sm:$0xff]
      %v784 = vld [vmem:[%s781 + $0x10] sm:$0xff]
      %v785 = vld [vmem:[%s781 + $0x18] sm:$0xff]
      %v786 = vld [vmem:[%s781 + $0x20] sm:$0xff]
      %v787 = vld [vmem:[%s781 + $0x28] sm:$0xff]
      %v788 = vld [vmem:[%s781 + $0x30] sm:$0xff]
      %v789 = vld [vmem:[%s781 + $0x38] sm:$0xff]
      %v790 = vld [vmem:[%s781 + $0x40] sm:$0xff]
      %v791 = vld [vmem:[%s781 + $0x48] sm:$0xff]
      %v792 = vld [vmem:[%s781 + $0x50] sm:$0xff]
      %v793 = vld [vmem:[%s781 + $0x58] sm:$0xff]
      %v794 = vld [vmem:[%s781 + $0x60] sm:$0xff]
      %v795 = vld [vmem:[%s781 + $0x68] sm:$0xff]
      %v796 = vld [vmem:[%s781 + $0x70] sm:$0xff]
      %v797 = vld [vmem:[%s781 + $0x78] sm:$0x3f]
      %vm799 = vcmask 1043456
      %v800 = vrot.slane %v364, 4
      %v801 = vrot.slane %v365, 4
      %v802 = vsel %vm799, %v800, %v801
      %v803 = vrot.slane %v366, 4
      %v804 = vsel %vm799, %v801, %v803
      %v805 = vsel %vm406, %v802, 0
      %v807 = vsel %vm406, %v804, 0
      %v810 = vsel %vm411, %v797, 0
      %812 = vmatprep.subr.mxu0 0.0
      %813 = vmatpush1.msra.mxu0 %v810
      %814 = vmatprep.subr.mxu0 0.0
      %815 = vmatpush1.msra.mxu0 %v796
      %816 = vmatprep.subr.mxu0 0.0
      %817 = vmatpush1.msra.mxu0 %v795
      %818 = vmatprep.subr.mxu0 0.0
      %819 = vmatpush1.msra.mxu0 %v794
      %820 = vmatprep.subr.mxu0 0.0
      %821 = vmatpush1.msra.mxu0 %v793
      %822 = vmatprep.subr.mxu0 0.0
      %823 = vmatpush1.msra.mxu0 %v792
      %824 = vmatprep.subr.mxu0 0.0
      %825 = vmatpush1.msra.mxu0 %v791
      %826 = vmatprep.subr.mxu0 0.0
      %827 = vmatpush1.msra.mxu0 %v790
      %828 = vmatprep.subr.mxu0 0.0
      %829 = vmatpush1.msra.mxu0 %v789
      %830 = vmatprep.subr.mxu0 0.0
      %831 = vmatpush1.msra.mxu0 %v788
      %832 = vmatprep.subr.mxu0 0.0
      %833 = vmatpush1.msra.mxu0 %v787
      %834 = vmatprep.subr.mxu0 0.0
      %835 = vmatpush1.msra.mxu0 %v786
      %836 = vmatprep.subr.mxu0 0.0
      %837 = vmatpush1.msra.mxu0 %v785
      %838 = vmatprep.subr.mxu0 0.0
      %839 = vmatpush1.msra.mxu0 %v784
      %840 = vmatprep.subr.mxu0 0.0
      %841 = vmatpush1.msra.mxu0 %v783
      %842 = vmatprep.subr.mxu0 0.0
      %843 = vmatpush1.msra.mxu0 %v782
      %844 = vmatprep.subr.mxu0 0.0
      %845 = vmatpush2.msra.mxu0 0.0
      %846 = vmatprep.subr.mxu0 0.0
      %847 = vmatpush2.msra.mxu0 0.0
      %848 = vmatprep.subr.mxu0 0.0
      %849 = vmatpush2.msra.mxu0 0.0
      %850 = vmatprep.subr.mxu0 0.0
      %851 = vmatpush2.msra.mxu0 0.0
      %852 = vmatprep.subr.mxu0 0.0
      %853 = vmatpush2.msra.mxu0 0.0
      %854 = vmatprep.subr.mxu0 0.0
      %855 = vmatpush2.msra.mxu0 0.0
      %856 = vmatprep.subr.mxu0 0.0
      %857 = vmatpush2.msra.mxu0 0.0
      %858 = vmatprep.subr.mxu0 0.0
      %859 = vmatpush2.msra.mxu0 0.0
      %860 = vmatprep.subr.mxu0 0.0
      %861 = vmatpush2.msra.mxu0 0.0
      %862 = vmatprep.subr.mxu0 0.0
      %863 = vmatpush2.msra.mxu0 0.0
      %864 = vmatprep.subr.mxu0 0.0
      %865 = vmatpush2.msra.mxu0 0.0
      %866 = vmatprep.subr.mxu0 0.0
      %867 = vmatpush2.msra.mxu0 0.0
      %868 = vmatprep.subr.mxu0 0.0
      %869 = vmatpush2.msra.mxu0 0.0
      %870 = vmatprep.subr.mxu0 0.0
      %871 = vmatpush2.msra.mxu0 0.0
      %872 = vmatprep.subr.mxu0 0.0
      %873 = vmatpush2.msra.mxu0 0.0
      %874 = vmatprep.subr.mxu0 0.0
      %875 = vmatpush2.msra.mxu0 0.0
      %876 = vmatprep.mubr.f32.mxu0 0.0
      %877 = vmatmul.mubr.f32.gmra.mxu0 %v805
      %v878 = vpop.f32.mrf.mxu0
      %v879 = vadd.f32 0.0, %v878
      %v880 = vpop.f32.mrf.mxu0
      %881 = vmatprep.mubr.f32.mxu0 0.0
      %882 = vmatmul.mubr.f32.gmra.mxu0 %v807
      %v883 = vpop.f32.mrf.mxu0
      %v884 = vadd.f32 0.0, %v883
      %v885 = vpop.f32.mrf.mxu0
      %886 = vdwg.mxu0
      %v887 = vadd.f32 %v779, %v879
      %v888 = vadd.f32 %v780, %v884
      %s889 = scalar_lea.vmem %s2, 640
      %v890 = vld [vmem:[%s889] sm:$0xff]
      %v891 = vld [vmem:[%s889 + $0x8] sm:$0xff]
      %v892 = vld [vmem:[%s889 + $0x10] sm:$0xff]
      %v893 = vld [vmem:[%s889 + $0x18] sm:$0xff]
      %v894 = vld [vmem:[%s889 + $0x20] sm:$0xff]
      %v895 = vld [vmem:[%s889 + $0x28] sm:$0xff]
      %v896 = vld [vmem:[%s889 + $0x30] sm:$0xff]
      %v897 = vld [vmem:[%s889 + $0x38] sm:$0xff]
      %v898 = vld [vmem:[%s889 + $0x40] sm:$0xff]
      %v899 = vld [vmem:[%s889 + $0x48] sm:$0xff]
      %v900 = vld [vmem:[%s889 + $0x50] sm:$0xff]
      %v901 = vld [vmem:[%s889 + $0x58] sm:$0xff]
      %v902 = vld [vmem:[%s889 + $0x60] sm:$0xff]
      %v903 = vld [vmem:[%s889 + $0x68] sm:$0xff]
      %v904 = vld [vmem:[%s889 + $0x70] sm:$0xff]
      %v905 = vld [vmem:[%s889 + $0x78] sm:$0x3f]
      %vm906 = vcmask 1042432
      %v907 = vrot.slane %v364, 5
      %v908 = vrot.slane %v365, 5
      %v909 = vsel %vm906, %v907, %v908
      %v910 = vrot.slane %v366, 5
      %v911 = vsel %vm906, %v908, %v910
      %v912 = vsel %vm406, %v909, 0
      %v914 = vsel %vm406, %v911, 0
      %v917 = vsel %vm411, %v905, 0
      %919 = vmatprep.subr.mxu0 0.0
      %920 = vmatpush1.msra.mxu0 %v917
      %921 = vmatprep.subr.mxu0 0.0
      %922 = vmatpush1.msra.mxu0 %v904
      %923 = vmatprep.subr.mxu0 0.0
      %924 = vmatpush1.msra.mxu0 %v903
      %925 = vmatprep.subr.mxu0 0.0
      %926 = vmatpush1.msra.mxu0 %v902
      %927 = vmatprep.subr.mxu0 0.0
      %928 = vmatpush1.msra.mxu0 %v901
      %929 = vmatprep.subr.mxu0 0.0
      %930 = vmatpush1.msra.mxu0 %v900
      %931 = vmatprep.subr.mxu0 0.0
      %932 = vmatpush1.msra.mxu0 %v899
      %933 = vmatprep.subr.mxu0 0.0
      %934 = vmatpush1.msra.mxu0 %v898
      %935 = vmatprep.subr.mxu0 0.0
      %936 = vmatpush1.msra.mxu0 %v897
      %937 = vmatprep.subr.mxu0 0.0
      %938 = vmatpush1.msra.mxu0 %v896
      %939 = vmatprep.subr.mxu0 0.0
      %940 = vmatpush1.msra.mxu0 %v895
      %941 = vmatprep.subr.mxu0 0.0
      %942 = vmatpush1.msra.mxu0 %v894
      %943 = vmatprep.subr.mxu0 0.0
      %944 = vmatpush1.msra.mxu0 %v893
      %945 = vmatprep.subr.mxu0 0.0
      %946 = vmatpush1.msra.mxu0 %v892
      %947 = vmatprep.subr.mxu0 0.0
      %948 = vmatpush1.msra.mxu0 %v891
      %949 = vmatprep.subr.mxu0 0.0
      %950 = vmatpush1.msra.mxu0 %v890
      %951 = vmatprep.subr.mxu0 0.0
      %952 = vmatpush2.msra.mxu0 0.0
      %953 = vmatprep.subr.mxu0 0.0
      %954 = vmatpush2.msra.mxu0 0.0
      %955 = vmatprep.subr.mxu0 0.0
      %956 = vmatpush2.msra.mxu0 0.0
      %957 = vmatprep.subr.mxu0 0.0
      %958 = vmatpush2.msra.mxu0 0.0
      %959 = vmatprep.subr.mxu0 0.0
      %960 = vmatpush2.msra.mxu0 0.0
      %961 = vmatprep.subr.mxu0 0.0
      %962 = vmatpush2.msra.mxu0 0.0
      %963 = vmatprep.subr.mxu0 0.0
      %964 = vmatpush2.msra.mxu0 0.0
      %965 = vmatprep.subr.mxu0 0.0
      %966 = vmatpush2.msra.mxu0 0.0
      %967 = vmatprep.subr.mxu0 0.0
      %968 = vmatpush2.msra.mxu0 0.0
      %969 = vmatprep.subr.mxu0 0.0
      %970 = vmatpush2.msra.mxu0 0.0
      %971 = vmatprep.subr.mxu0 0.0
      %972 = vmatpush2.msra.mxu0 0.0
      %973 = vmatprep.subr.mxu0 0.0
      %974 = vmatpush2.msra.mxu0 0.0
      %975 = vmatprep.subr.mxu0 0.0
      %976 = vmatpush2.msra.mxu0 0.0
      %977 = vmatprep.subr.mxu0 0.0
      %978 = vmatpush2.msra.mxu0 0.0
      %979 = vmatprep.subr.mxu0 0.0
      %980 = vmatpush2.msra.mxu0 0.0
      %981 = vmatprep.subr.mxu0 0.0
      %982 = vmatpush2.msra.mxu0 0.0
      %983 = vmatprep.mubr.f32.mxu0 0.0
      %984 = vmatmul.mubr.f32.gmra.mxu0 %v912
      %v985 = vpop.f32.mrf.mxu0
      %v986 = vadd.f32 0.0, %v985
      %v987 = vpop.f32.mrf.mxu0
      %988 = vmatprep.mubr.f32.mxu0 0.0
      %989 = vmatmul.mubr.f32.gmra.mxu0 %v914
      %v990 = vpop.f32.mrf.mxu0
      %v991 = vadd.f32 0.0, %v990
      %v992 = vpop.f32.mrf.mxu0
      %993 = vdwg.mxu0
      %v994 = vadd.f32 %v887, %v986
      %v995 = vadd.f32 %v888, %v991
      %s996 = scalar_lea.vmem %s2, 768
      %v997 = vld [vmem:[%s996] sm:$0xff]
      %v998 = vld [vmem:[%s996 + $0x8] sm:$0xff]
      %v999 = vld [vmem:[%s996 + $0x10] sm:$0xff]
      %v1000 = vld [vmem:[%s996 + $0x18] sm:$0xff]
      %v1001 = vld [vmem:[%s996 + $0x20] sm:$0xff]
      %v1002 = vld [vmem:[%s996 + $0x28] sm:$0xff]
      %v1003 = vld [vmem:[%s996 + $0x30] sm:$0xff]
      %v1004 = vld [vmem:[%s996 + $0x38] sm:$0xff]
      %v1005 = vld [vmem:[%s996 + $0x40] sm:$0xff]
      %v1006 = vld [vmem:[%s996 + $0x48] sm:$0xff]
      %v1007 = vld [vmem:[%s996 + $0x50] sm:$0xff]
      %v1008 = vld [vmem:[%s996 + $0x58] sm:$0xff]
      %v1009 = vld [vmem:[%s996 + $0x60] sm:$0xff]
      %v1010 = vld [vmem:[%s996 + $0x68] sm:$0xff]
      %v1011 = vld [vmem:[%s996 + $0x70] sm:$0xff]
      %v1012 = vld [vmem:[%s996 + $0x78] sm:$0x3f]
      %vm1013 = vcmask 1041408
      %v1014 = vrot.slane %v364, 6
      %v1015 = vrot.slane %v365, 6
      %v1016 = vsel %vm1013, %v1014, %v1015
      %v1017 = vrot.slane %v366, 6
      %v1018 = vsel %vm1013, %v1015, %v1017
      %v1019 = vsel %vm406, %v1016, 0
      %v1021 = vsel %vm406, %v1018, 0
      %v1024 = vsel %vm411, %v1012, 0
      %1026 = vmatprep.subr.mxu0 0.0
      %1027 = vmatpush1.msra.mxu0 %v1024
      %1028 = vmatprep.subr.mxu0 0.0
      %1029 = vmatpush1.msra.mxu0 %v1011
      %1030 = vmatprep.subr.mxu0 0.0
      %1031 = vmatpush1.msra.mxu0 %v1010
      %1032 = vmatprep.subr.mxu0 0.0
      %1033 = vmatpush1.msra.mxu0 %v1009
      %1034 = vmatprep.subr.mxu0 0.0
      %1035 = vmatpush1.msra.mxu0 %v1008
      %1036 = vmatprep.subr.mxu0 0.0
      %1037 = vmatpush1.msra.mxu0 %v1007
      %1038 = vmatprep.subr.mxu0 0.0
      %1039 = vmatpush1.msra.mxu0 %v1006
      %1040 = vmatprep.subr.mxu0 0.0
      %1041 = vmatpush1.msra.mxu0 %v1005
      %1042 = vmatprep.subr.mxu0 0.0
      %1043 = vmatpush1.msra.mxu0 %v1004
      %1044 = vmatprep.subr.mxu0 0.0
      %1045 = vmatpush1.msra.mxu0 %v1003
      %1046 = vmatprep.subr.mxu0 0.0
      %1047 = vmatpush1.msra.mxu0 %v1002
      %1048 = vmatprep.subr.mxu0 0.0
      %1049 = vmatpush1.msra.mxu0 %v1001
      %1050 = vmatprep.subr.mxu0 0.0
      %1051 = vmatpush1.msra.mxu0 %v1000
      %1052 = vmatprep.subr.mxu0 0.0
      %1053 = vmatpush1.msra.mxu0 %v999
      %1054 = vmatprep.subr.mxu0 0.0
      %1055 = vmatpush1.msra.mxu0 %v998
      %1056 = vmatprep.subr.mxu0 0.0
      %1057 = vmatpush1.msra.mxu0 %v997
      %1058 = vmatprep.subr.mxu0 0.0
      %1059 = vmatpush2.msra.mxu0 0.0
      %1060 = vmatprep.subr.mxu0 0.0
      %1061 = vmatpush2.msra.mxu0 0.0
      %1062 = vmatprep.subr.mxu0 0.0
      %1063 = vmatpush2.msra.mxu0 0.0
      %1064 = vmatprep.subr.mxu0 0.0
      %1065 = vmatpush2.msra.mxu0 0.0
      %1066 = vmatprep.subr.mxu0 0.0
      %1067 = vmatpush2.msra.mxu0 0.0
      %1068 = vmatprep.subr.mxu0 0.0
      %1069 = vmatpush2.msra.mxu0 0.0
      %1070 = vmatprep.subr.mxu0 0.0
      %1071 = vmatpush2.msra.mxu0 0.0
      %1072 = vmatprep.subr.mxu0 0.0
      %1073 = vmatpush2.msra.mxu0 0.0
      %1074 = vmatprep.subr.mxu0 0.0
      %1075 = vmatpush2.msra.mxu0 0.0
      %1076 = vmatprep.subr.mxu0 0.0
      %1077 = vmatpush2.msra.mxu0 0.0
      %1078 = vmatprep.subr.mxu0 0.0
      %1079 = vmatpush2.msra.mxu0 0.0
      %1080 = vmatprep.subr.mxu0 0.0
      %1081 = vmatpush2.msra.mxu0 0.0
      %1082 = vmatprep.subr.mxu0 0.0
      %1083 = vmatpush2.msra.mxu0 0.0
      %1084 = vmatprep.subr.mxu0 0.0
      %1085 = vmatpush2.msra.mxu0 0.0
      %1086 = vmatprep.subr.mxu0 0.0
      %1087 = vmatpush2.msra.mxu0 0.0
      %1088 = vmatprep.subr.mxu0 0.0
      %1089 = vmatpush2.msra.mxu0 0.0
      %1090 = vmatprep.mubr.f32.mxu0 0.0
      %1091 = vmatmul.mubr.f32.gmra.mxu0 %v1019
      %v1092 = vpop.f32.mrf.mxu0
      %v1093 = vadd.f32 0.0, %v1092
      %v1094 = vpop.f32.mrf.mxu0
      %1095 = vmatprep.mubr.f32.mxu0 0.0
      %1096 = vmatmul.mubr.f32.gmra.mxu0 %v1021
      %v1097 = vpop.f32.mrf.mxu0
      %v1098 = vadd.f32 0.0, %v1097
      %v1099 = vpop.f32.mrf.mxu0
      %1100 = vdwg.mxu0
      %v1101 = vadd.f32 %v994, %v1093
      %v1102 = vadd.f32 %v995, %v1098
      %s1103 = scalar_lea.vmem %s2, 896
      %v1104 = vld [vmem:[%s1103] sm:$0xff]
      %v1105 = vld [vmem:[%s1103 + $0x8] sm:$0xff]
      %v1106 = vld [vmem:[%s1103 + $0x10] sm:$0xff]
      %v1107 = vld [vmem:[%s1103 + $0x18] sm:$0xff]
      %v1108 = vld [vmem:[%s1103 + $0x20] sm:$0xff]
      %v1109 = vld [vmem:[%s1103 + $0x28] sm:$0xff]
      %v1110 = vld [vmem:[%s1103 + $0x30] sm:$0xff]
      %v1111 = vld [vmem:[%s1103 + $0x38] sm:$0xff]
      %v1112 = vld [vmem:[%s1103 + $0x40] sm:$0xff]
      %v1113 = vld [vmem:[%s1103 + $0x48] sm:$0xff]
      %v1114 = vld [vmem:[%s1103 + $0x50] sm:$0xff]
      %v1115 = vld [vmem:[%s1103 + $0x58] sm:$0xff]
      %v1116 = vld [vmem:[%s1103 + $0x60] sm:$0xff]
      %v1117 = vld [vmem:[%s1103 + $0x68] sm:$0xff]
      %v1118 = vld [vmem:[%s1103 + $0x70] sm:$0xff]
      %v1119 = vld [vmem:[%s1103 + $0x78] sm:$0x3f]
      %vm1120 = vcmask 1040384
      %v1121 = vrot.slane %v364, 7
      %v1122 = vrot.slane %v365, 7
      %v1123 = vsel %vm1120, %v1121, %v1122
      %v1124 = vrot.slane %v366, 7
      %v1125 = vsel %vm1120, %v1122, %v1124
      %v1126 = vsel %vm406, %v1123, 0
      %v1128 = vsel %vm406, %v1125, 0
      %v1131 = vsel %vm411, %v1119, 0
      %1133 = vmatprep.subr.mxu0 0.0
      %1134 = vmatpush1.msra.mxu0 %v1131
      %1135 = vmatprep.subr.mxu0 0.0
      %1136 = vmatpush1.msra.mxu0 %v1118
      %1137 = vmatprep.subr.mxu0 0.0
      %1138 = vmatpush1.msra.mxu0 %v1117
      %1139 = vmatprep.subr.mxu0 0.0
      %1140 = vmatpush1.msra.mxu0 %v1116
      %1141 = vmatprep.subr.mxu0 0.0
      %1142 = vmatpush1.msra.mxu0 %v1115
      %1143 = vmatprep.subr.mxu0 0.0
      %1144 = vmatpush1.msra.mxu0 %v1114
      %1145 = vmatprep.subr.mxu0 0.0
      %1146 = vmatpush1.msra.mxu0 %v1113
      %1147 = vmatprep.subr.mxu0 0.0
      %1148 = vmatpush1.msra.mxu0 %v1112
      %1149 = vmatprep.subr.mxu0 0.0
      %1150 = vmatpush1.msra.mxu0 %v1111
      %1151 = vmatprep.subr.mxu0 0.0
      %1152 = vmatpush1.msra.mxu0 %v1110
      %1153 = vmatprep.subr.mxu0 0.0
      %1154 = vmatpush1.msra.mxu0 %v1109
      %1155 = vmatprep.subr.mxu0 0.0
      %1156 = vmatpush1.msra.mxu0 %v1108
      %1157 = vmatprep.subr.mxu0 0.0
      %1158 = vmatpush1.msra.mxu0 %v1107
      %1159 = vmatprep.subr.mxu0 0.0
      %1160 = vmatpush1.msra.mxu0 %v1106
      %1161 = vmatprep.subr.mxu0 0.0
      %1162 = vmatpush1.msra.mxu0 %v1105
      %1163 = vmatprep.subr.mxu0 0.0
      %1164 = vmatpush1.msra.mxu0 %v1104
      %1165 = vmatprep.subr.mxu0 0.0
      %1166 = vmatpush2.msra.mxu0 0.0
      %1167 = vmatprep.subr.mxu0 0.0
      %1168 = vmatpush2.msra.mxu0 0.0
      %1169 = vmatprep.subr.mxu0 0.0
      %1170 = vmatpush2.msra.mxu0 0.0
      %1171 = vmatprep.subr.mxu0 0.0
      %1172 = vmatpush2.msra.mxu0 0.0
      %1173 = vmatprep.subr.mxu0 0.0
      %1174 = vmatpush2.msra.mxu0 0.0
      %1175 = vmatprep.subr.mxu0 0.0
      %1176 = vmatpush2.msra.mxu0 0.0
      %1177 = vmatprep.subr.mxu0 0.0
      %1178 = vmatpush2.msra.mxu0 0.0
      %1179 = vmatprep.subr.mxu0 0.0
      %1180 = vmatpush2.msra.mxu0 0.0
      %1181 = vmatprep.subr.mxu0 0.0
      %1182 = vmatpush2.msra.mxu0 0.0
      %1183 = vmatprep.subr.mxu0 0.0
      %1184 = vmatpush2.msra.mxu0 0.0
      %1185 = vmatprep.subr.mxu0 0.0
      %1186 = vmatpush2.msra.mxu0 0.0
      %1187 = vmatprep.subr.mxu0 0.0
      %1188 = vmatpush2.msra.mxu0 0.0
      %1189 = vmatprep.subr.mxu0 0.0
      %1190 = vmatpush2.msra.mxu0 0.0
      %1191 = vmatprep.subr.mxu0 0.0
      %1192 = vmatpush2.msra.mxu0 0.0
      %1193 = vmatprep.subr.mxu0 0.0
      %1194 = vmatpush2.msra.mxu0 0.0
      %1195 = vmatprep.subr.mxu0 0.0
      %1196 = vmatpush2.msra.mxu0 0.0
      %1197 = vmatprep.mubr.f32.mxu0 0.0
      %1198 = vmatmul.mubr.f32.gmra.mxu0 %v1126
      %v1199 = vpop.f32.mrf.mxu0
      %v1200 = vadd.f32 0.0, %v1199
      %v1201 = vpop.f32.mrf.mxu0
      %1202 = vmatprep.mubr.f32.mxu0 0.0
      %1203 = vmatmul.mubr.f32.gmra.mxu0 %v1128
      %v1204 = vpop.f32.mrf.mxu0
      %v1205 = vadd.f32 0.0, %v1204
      %v1206 = vpop.f32.mrf.mxu0
      %1207 = vdwg.mxu0
      %v1208 = vadd.f32 %v1101, %v1200
      %v1209 = vadd.f32 %v1102, %v1205
      %s1210 = scalar_lea.vmem %s2, 1024
      %v1211 = vld [vmem:[%s1210] sm:$0xff]
      %v1212 = vld [vmem:[%s1210 + $0x8] sm:$0xff]
      %v1213 = vld [vmem:[%s1210 + $0x10] sm:$0xff]
      %v1214 = vld [vmem:[%s1210 + $0x18] sm:$0xff]
      %v1215 = vld [vmem:[%s1210 + $0x20] sm:$0xff]
      %v1216 = vld [vmem:[%s1210 + $0x28] sm:$0xff]
      %v1217 = vld [vmem:[%s1210 + $0x30] sm:$0xff]
      %v1218 = vld [vmem:[%s1210 + $0x38] sm:$0xff]
      %v1219 = vld [vmem:[%s1210 + $0x40] sm:$0xff]
      %v1220 = vld [vmem:[%s1210 + $0x48] sm:$0xff]
      %v1221 = vld [vmem:[%s1210 + $0x50] sm:$0xff]
      %v1222 = vld [vmem:[%s1210 + $0x58] sm:$0xff]
      %v1223 = vld [vmem:[%s1210 + $0x60] sm:$0xff]
      %v1224 = vld [vmem:[%s1210 + $0x68] sm:$0xff]
      %v1225 = vld [vmem:[%s1210 + $0x70] sm:$0xff]
      %v1226 = vld [vmem:[%s1210 + $0x78] sm:$0x3f]
      %v1227 = vsel %vm406, %v366, 0
      %v1230 = vsel %vm411, %v1226, 0
      %1232 = vmatprep.subr.mxu0 0.0
      %1233 = vmatpush1.msra.mxu0 %v1230
      %1234 = vmatprep.subr.mxu0 0.0
      %1235 = vmatpush1.msra.mxu0 %v1225
      %1236 = vmatprep.subr.mxu0 0.0
      %1237 = vmatpush1.msra.mxu0 %v1224
      %1238 = vmatprep.subr.mxu0 0.0
      %1239 = vmatpush1.msra.mxu0 %v1223
      %1240 = vmatprep.subr.mxu0 0.0
      %1241 = vmatpush1.msra.mxu0 %v1222
      %1242 = vmatprep.subr.mxu0 0.0
      %1243 = vmatpush1.msra.mxu0 %v1221
      %1244 = vmatprep.subr.mxu0 0.0
      %1245 = vmatpush1.msra.mxu0 %v1220
      %1246 = vmatprep.subr.mxu0 0.0
      %1247 = vmatpush1.msra.mxu0 %v1219
      %1248 = vmatprep.subr.mxu0 0.0
      %1249 = vmatpush1.msra.mxu0 %v1218
      %1250 = vmatprep.subr.mxu0 0.0
      %1251 = vmatpush1.msra.mxu0 %v1217
      %1252 = vmatprep.subr.mxu0 0.0
      %1253 = vmatpush1.msra.mxu0 %v1216
      %1254 = vmatprep.subr.mxu0 0.0
      %1255 = vmatpush1.msra.mxu0 %v1215
      %1256 = vmatprep.subr.mxu0 0.0
      %1257 = vmatpush1.msra.mxu0 %v1214
      %1258 = vmatprep.subr.mxu0 0.0
      %1259 = vmatpush1.msra.mxu0 %v1213
      %1260 = vmatprep.subr.mxu0 0.0
      %1261 = vmatpush1.msra.mxu0 %v1212
      %1262 = vmatprep.subr.mxu0 0.0
      %1263 = vmatpush1.msra.mxu0 %v1211
      %1264 = vmatprep.subr.mxu0 0.0
      %1265 = vmatpush2.msra.mxu0 0.0
      %1266 = vmatprep.subr.mxu0 0.0
      %1267 = vmatpush2.msra.mxu0 0.0
      %1268 = vmatprep.subr.mxu0 0.0
      %1269 = vmatpush2.msra.mxu0 0.0
      %1270 = vmatprep.subr.mxu0 0.0
      %1271 = vmatpush2.msra.mxu0 0.0
      %1272 = vmatprep.subr.mxu0 0.0
      %1273 = vmatpush2.msra.mxu0 0.0
      %1274 = vmatprep.subr.mxu0 0.0
      %1275 = vmatpush2.msra.mxu0 0.0
      %1276 = vmatprep.subr.mxu0 0.0
      %1277 = vmatpush2.msra.mxu0 0.0
      %1278 = vmatprep.subr.mxu0 0.0
      %1279 = vmatpush2.msra.mxu0 0.0
      %1280 = vmatprep.subr.mxu0 0.0
      %1281 = vmatpush2.msra.mxu0 0.0
      %1282 = vmatprep.subr.mxu0 0.0
      %1283 = vmatpush2.msra.mxu0 0.0
      %1284 = vmatprep.subr.mxu0 0.0
      %1285 = vmatpush2.msra.mxu0 0.0
      %1286 = vmatprep.subr.mxu0 0.0
      %1287 = vmatpush2.msra.mxu0 0.0
      %1288 = vmatprep.subr.mxu0 0.0
      %1289 = vmatpush2.msra.mxu0 0.0
      %1290 = vmatprep.subr.mxu0 0.0
      %1291 = vmatpush2.msra.mxu0 0.0
      %1292 = vmatprep.subr.mxu0 0.0
      %1293 = vmatpush2.msra.mxu0 0.0
      %1294 = vmatprep.subr.mxu0 0.0
      %1295 = vmatpush2.msra.mxu0 0.0
      %1296 = vmatprep.mubr.f32.mxu0 0.0
      %1297 = vmatmul.mubr.f32.gmra.mxu0 %v492
      %v1298 = vpop.f32.mrf.mxu0
      %v1299 = vadd.f32 0.0, %v1298
      %v1300 = vpop.f32.mrf.mxu0
      %1301 = vmatprep.mubr.f32.mxu0 0.0
      %1302 = vmatmul.mubr.f32.gmra.mxu0 %v1227
      %v1303 = vpop.f32.mrf.mxu0
      %v1304 = vadd.f32 0.0, %v1303
      %v1305 = vpop.f32.mrf.mxu0
      %1306 = vdwg.mxu0
      %v1307 = vadd.f32 %v1208, %v1299
      %v1308 = vadd.f32 %v1209, %v1304
      %v1309 = vlaneseq
      %v1310 = vshrl.u32 %v1309, 7
      %v1311 = vsub.s32 0, %v1310
      %v1312 = vrot.slane %v362, %v1311
      %v1313 = vadd.f32 %v1307, %v1312
      %v1314 = vadd.f32 %v1308, %v1312
      %v1315 = vld [vmem:[%s3] sm:$0xff]
      %v1316 = vld [vmem:[%s3 + $0x8] sm:$0xff]
      %v1317 = vld [vmem:[%s3 + $0x10] sm:$0xff]
      %v1318 = vld [vmem:[%s3 + $0x18] sm:$0xff]
      %v1319 = vld [vmem:[%s3 + $0x20] sm:$0xff]
      %v1320 = vld [vmem:[%s3 + $0x28] sm:$0xff]
      %v1321 = vld [vmem:[%s3 + $0x30] sm:$0xff]
      %v1322 = vld [vmem:[%s3 + $0x38] sm:$0xff]
      %v1323 = vld [vmem:[%s3 + $0x40] sm:$0xff]
      %v1324 = vld [vmem:[%s3 + $0x48] sm:$0x3f]
      %s1325 = scalar_lea.vmem %s3, 80
      %v1326 = vld [vmem:[%s1325] sm:$0xff]
      %v1327 = vld [vmem:[%s1325 + $0x8] sm:$0xff]
      %v1328 = vld [vmem:[%s1325 + $0x10] sm:$0xff]
      %v1329 = vld [vmem:[%s1325 + $0x18] sm:$0xff]
      %v1330 = vld [vmem:[%s1325 + $0x20] sm:$0xff]
      %v1331 = vld [vmem:[%s1325 + $0x28] sm:$0xff]
      %v1332 = vld [vmem:[%s1325 + $0x30] sm:$0xff]
      %v1333 = vld [vmem:[%s1325 + $0x38] sm:$0xff]
      %v1334 = vld [vmem:[%s1325 + $0x40] sm:$0xff]
      %v1335 = vld [vmem:[%s1325 + $0x48] sm:$0x3f]
      %v1337 = vrot.slane %v1313, 1
      %vm1338 = vcmask 637952
      %v1339 = vsel %vm1338, %v1337, 0
      %v1342 = vsel %vm411, %v1335, 0
      %1344 = vmatprep.subr.mxu0 0.0
      %1345 = vmatpush1.msra.mxu0 0.0
      %1346 = vmatprep.subr.mxu0 0.0
      %1347 = vmatpush1.msra.mxu0 0.0
      %1348 = vmatprep.subr.mxu0 0.0
      %1349 = vmatpush1.msra.mxu0 0.0
      %1350 = vmatprep.subr.mxu0 0.0
      %1351 = vmatpush1.msra.mxu0 0.0
      %1352 = vmatprep.subr.mxu0 0.0
      %1353 = vmatpush1.msra.mxu0 0.0
      %1354 = vmatprep.subr.mxu0 0.0
      %1355 = vmatpush1.msra.mxu0 0.0
      %1356 = vmatprep.subr.mxu0 0.0
      %1357 = vmatpush1.msra.mxu0 %v1342
      %1358 = vmatprep.subr.mxu0 0.0
      %1359 = vmatpush1.msra.mxu0 %v1334
      %1360 = vmatprep.subr.mxu0 0.0
      %1361 = vmatpush1.msra.mxu0 %v1333
      %1362 = vmatprep.subr.mxu0 0.0
      %1363 = vmatpush1.msra.mxu0 %v1332
      %1364 = vmatprep.subr.mxu0 0.0
      %1365 = vmatpush1.msra.mxu0 %v1331
      %1366 = vmatprep.subr.mxu0 0.0
      %1367 = vmatpush1.msra.mxu0 %v1330
      %1368 = vmatprep.subr.mxu0 0.0
      %1369 = vmatpush1.msra.mxu0 %v1329
      %1370 = vmatprep.subr.mxu0 0.0
      %1371 = vmatpush1.msra.mxu0 %v1328
      %1372 = vmatprep.subr.mxu0 0.0
      %1373 = vmatpush1.msra.mxu0 %v1327
      %1374 = vmatprep.subr.mxu0 0.0
      %1375 = vmatpush1.msra.mxu0 %v1326
      %1376 = vmatprep.subr.mxu0 0.0
      %1377 = vmatpush2.msra.mxu0 0.0
      %1378 = vmatprep.subr.mxu0 0.0
      %1379 = vmatpush2.msra.mxu0 0.0
      %1380 = vmatprep.subr.mxu0 0.0
      %1381 = vmatpush2.msra.mxu0 0.0
      %1382 = vmatprep.subr.mxu0 0.0
      %1383 = vmatpush2.msra.mxu0 0.0
      %1384 = vmatprep.subr.mxu0 0.0
      %1385 = vmatpush2.msra.mxu0 0.0
      %1386 = vmatprep.subr.mxu0 0.0
      %1387 = vmatpush2.msra.mxu0 0.0
      %1388 = vmatprep.subr.mxu0 0.0
      %1389 = vmatpush2.msra.mxu0 0.0
      %1390 = vmatprep.subr.mxu0 0.0
      %1391 = vmatpush2.msra.mxu0 0.0
      %1392 = vmatprep.subr.mxu0 0.0
      %1393 = vmatpush2.msra.mxu0 0.0
      %1394 = vmatprep.subr.mxu0 0.0
      %1395 = vmatpush2.msra.mxu0 0.0
      %1396 = vmatprep.subr.mxu0 0.0
      %1397 = vmatpush2.msra.mxu0 0.0
      %1398 = vmatprep.subr.mxu0 0.0
      %1399 = vmatpush2.msra.mxu0 0.0
      %1400 = vmatprep.subr.mxu0 0.0
      %1401 = vmatpush2.msra.mxu0 0.0
      %1402 = vmatprep.subr.mxu0 0.0
      %1403 = vmatpush2.msra.mxu0 0.0
      %1404 = vmatprep.subr.mxu0 0.0
      %1405 = vmatpush2.msra.mxu0 0.0
      %1406 = vmatprep.subr.mxu0 0.0
      %1407 = vmatpush2.msra.mxu0 0.0
      %1408 = vmatprep.mubr.f32.mxu0 0.0
      %1409 = vmatmul.mubr.f32.gmra.mxu0 %v1339
      %v1410 = vpop.f32.mrf.mxu0
      %v1411 = vadd.f32 0.0, %v1410
      %v1412 = vpop.f32.mrf.mxu0
      %1413 = vdwg.mxu0
      %v1414 = vsel %vm1338, %v1313, 0
      %v1417 = vsel %vm411, %v1324, 0
      %1419 = vmatprep.subr.mxu0 0.0
      %1420 = vmatpush1.msra.mxu0 0.0
      %1421 = vmatprep.subr.mxu0 0.0
      %1422 = vmatpush1.msra.mxu0 0.0
      %1423 = vmatprep.subr.mxu0 0.0
      %1424 = vmatpush1.msra.mxu0 0.0
      %1425 = vmatprep.subr.mxu0 0.0
      %1426 = vmatpush1.msra.mxu0 0.0
      %1427 = vmatprep.subr.mxu0 0.0
      %1428 = vmatpush1.msra.mxu0 0.0
      %1429 = vmatprep.subr.mxu0 0.0
      %1430 = vmatpush1.msra.mxu0 0.0
      %1431 = vmatprep.subr.mxu0 0.0
      %1432 = vmatpush1.msra.mxu0 %v1417
      %1433 = vmatprep.subr.mxu0 0.0
      %1434 = vmatpush1.msra.mxu0 %v1323
      %1435 = vmatprep.subr.mxu0 0.0
      %1436 = vmatpush1.msra.mxu0 %v1322
      %1437 = vmatprep.subr.mxu0 0.0
      %1438 = vmatpush1.msra.mxu0 %v1321
      %1439 = vmatprep.subr.mxu0 0.0
      %1440 = vmatpush1.msra.mxu0 %v1320
      %1441 = vmatprep.subr.mxu0 0.0
      %1442 = vmatpush1.msra.mxu0 %v1319
      %1443 = vmatprep.subr.mxu0 0.0
      %1444 = vmatpush1.msra.mxu0 %v1318
      %1445 = vmatprep.subr.mxu0 0.0
      %1446 = vmatpush1.msra.mxu0 %v1317
      %1447 = vmatprep.subr.mxu0 0.0
      %1448 = vmatpush1.msra.mxu0 %v1316
      %1449 = vmatprep.subr.mxu0 0.0
      %1450 = vmatpush1.msra.mxu0 %v1315
      %1451 = vmatprep.subr.mxu0 0.0
      %1452 = vmatpush2.msra.mxu0 0.0
      %1453 = vmatprep.subr.mxu0 0.0
      %1454 = vmatpush2.msra.mxu0 0.0
      %1455 = vmatprep.subr.mxu0 0.0
      %1456 = vmatpush2.msra.mxu0 0.0
      %1457 = vmatprep.subr.mxu0 0.0
      %1458 = vmatpush2.msra.mxu0 0.0
      %1459 = vmatprep.subr.mxu0 0.0
      %1460 = vmatpush2.msra.mxu0 0.0
      %1461 = vmatprep.subr.mxu0 0.0
      %1462 = vmatpush2.msra.mxu0 0.0
      %1463 = vmatprep.subr.mxu0 0.0
      %1464 = vmatpush2.msra.mxu0 0.0
      %1465 = vmatprep.subr.mxu0 0.0
      %1466 = vmatpush2.msra.mxu0 0.0
      %1467 = vmatprep.subr.mxu0 0.0
      %1468 = vmatpush2.msra.mxu0 0.0
      %1469 = vmatprep.subr.mxu0 0.0
      %1470 = vmatpush2.msra.mxu0 0.0
      %1471 = vmatprep.subr.mxu0 0.0
      %1472 = vmatpush2.msra.mxu0 0.0
      %1473 = vmatprep.subr.mxu0 0.0
      %1474 = vmatpush2.msra.mxu0 0.0
      %1475 = vmatprep.subr.mxu0 0.0
      %1476 = vmatpush2.msra.mxu0 0.0
      %1477 = vmatprep.subr.mxu0 0.0
      %1478 = vmatpush2.msra.mxu0 0.0
      %1479 = vmatprep.subr.mxu0 0.0
      %1480 = vmatpush2.msra.mxu0 0.0
      %1481 = vmatprep.subr.mxu0 0.0
      %1482 = vmatpush2.msra.mxu0 0.0
      %1483 = vmatprep.mubr.f32.mxu0 0.0
      %1484 = vmatmul.mubr.f32.gmra.mxu0 %v1414
      %v1485 = vpop.f32.mrf.mxu0
      %v1486 = vadd.f32 %v1411, %v1485
      %v1487 = vpop.f32.mrf.mxu0
      %1488 = vdwg.mxu0
      %s1489 = scalar_lea.vmem %s3, 160
      %v1490 = vld [vmem:[%s1489] sm:$0xff]
      %v1491 = vld [vmem:[%s1489 + $0x8] sm:$0xff]
      %v1492 = vld [vmem:[%s1489 + $0x10] sm:$0xff]
      %v1493 = vld [vmem:[%s1489 + $0x18] sm:$0xff]
      %v1494 = vld [vmem:[%s1489 + $0x20] sm:$0xff]
      %v1495 = vld [vmem:[%s1489 + $0x28] sm:$0xff]
      %v1496 = vld [vmem:[%s1489 + $0x30] sm:$0xff]
      %v1497 = vld [vmem:[%s1489 + $0x38] sm:$0xff]
      %v1498 = vld [vmem:[%s1489 + $0x40] sm:$0xff]
      %v1499 = vld [vmem:[%s1489 + $0x48] sm:$0x3f]
      %v1500 = vrot.slane %v1313, 2
      %v1501 = vsel %vm1338, %v1500, 0
      %v1504 = vsel %vm411, %v1499, 0
      %1506 = vmatprep.subr.mxu0 0.0
      %1507 = vmatpush1.msra.mxu0 0.0
      %1508 = vmatprep.subr.mxu0 0.0
      %1509 = vmatpush1.msra.mxu0 0.0
      %1510 = vmatprep.subr.mxu0 0.0
      %1511 = vmatpush1.msra.mxu0 0.0
      %1512 = vmatprep.subr.mxu0 0.0
      %1513 = vmatpush1.msra.mxu0 0.0
      %1514 = vmatprep.subr.mxu0 0.0
      %1515 = vmatpush1.msra.mxu0 0.0
      %1516 = vmatprep.subr.mxu0 0.0
      %1517 = vmatpush1.msra.mxu0 0.0
      %1518 = vmatprep.subr.mxu0 0.0
      %1519 = vmatpush1.msra.mxu0 %v1504
      %1520 = vmatprep.subr.mxu0 0.0
      %1521 = vmatpush1.msra.mxu0 %v1498
      %1522 = vmatprep.subr.mxu0 0.0
      %1523 = vmatpush1.msra.mxu0 %v1497
      %1524 = vmatprep.subr.mxu0 0.0
      %1525 = vmatpush1.msra.mxu0 %v1496
      %1526 = vmatprep.subr.mxu0 0.0
      %1527 = vmatpush1.msra.mxu0 %v1495
      %1528 = vmatprep.subr.mxu0 0.0
      %1529 = vmatpush1.msra.mxu0 %v1494
      %1530 = vmatprep.subr.mxu0 0.0
      %1531 = vmatpush1.msra.mxu0 %v1493
      %1532 = vmatprep.subr.mxu0 0.0
      %1533 = vmatpush1.msra.mxu0 %v1492
      %1534 = vmatprep.subr.mxu0 0.0
      %1535 = vmatpush1.msra.mxu0 %v1491
      %1536 = vmatprep.subr.mxu0 0.0
      %1537 = vmatpush1.msra.mxu0 %v1490
      %1538 = vmatprep.subr.mxu0 0.0
      %1539 = vmatpush2.msra.mxu0 0.0
      %1540 = vmatprep.subr.mxu0 0.0
      %1541 = vmatpush2.msra.mxu0 0.0
      %1542 = vmatprep.subr.mxu0 0.0
      %1543 = vmatpush2.msra.mxu0 0.0
      %1544 = vmatprep.subr.mxu0 0.0
      %1545 = vmatpush2.msra.mxu0 0.0
      %1546 = vmatprep.subr.mxu0 0.0
      %1547 = vmatpush2.msra.mxu0 0.0
      %1548 = vmatprep.subr.mxu0 0.0
      %1549 = vmatpush2.msra.mxu0 0.0
      %1550 = vmatprep.subr.mxu0 0.0
      %1551 = vmatpush2.msra.mxu0 0.0
      %1552 = vmatprep.subr.mxu0 0.0
      %1553 = vmatpush2.msra.mxu0 0.0
      %1554 = vmatprep.subr.mxu0 0.0
      %1555 = vmatpush2.msra.mxu0 0.0
      %1556 = vmatprep.subr.mxu0 0.0
      %1557 = vmatpush2.msra.mxu0 0.0
      %1558 = vmatprep.subr.mxu0 0.0
      %1559 = vmatpush2.msra.mxu0 0.0
      %1560 = vmatprep.subr.mxu0 0.0
      %1561 = vmatpush2.msra.mxu0 0.0
      %1562 = vmatprep.subr.mxu0 0.0
      %1563 = vmatpush2.msra.mxu0 0.0
      %1564 = vmatprep.subr.mxu0 0.0
      %1565 = vmatpush2.msra.mxu0 0.0
      %1566 = vmatprep.subr.mxu0 0.0
      %1567 = vmatpush2.msra.mxu0 0.0
      %1568 = vmatprep.subr.mxu0 0.0
      %1569 = vmatpush2.msra.mxu0 0.0
      %1570 = vmatprep.mubr.f32.mxu0 0.0
      %1571 = vmatmul.mubr.f32.gmra.mxu0 %v1501
      %v1572 = vpop.f32.mrf.mxu0
      %v1573 = vadd.f32 0.0, %v1572
      %v1574 = vpop.f32.mrf.mxu0
      %1575 = vdwg.mxu0
      %v1576 = vadd.f32 %v1486, %v1573
      %s1577 = scalar_lea.vmem %s3, 240
      %v1578 = vld [vmem:[%s1577] sm:$0xff]
      %v1579 = vld [vmem:[%s1577 + $0x8] sm:$0xff]
      %v1580 = vld [vmem:[%s1577 + $0x10] sm:$0xff]
      %v1581 = vld [vmem:[%s1577 + $0x18] sm:$0xff]
      %v1582 = vld [vmem:[%s1577 + $0x20] sm:$0xff]
      %v1583 = vld [vmem:[%s1577 + $0x28] sm:$0xff]
      %v1584 = vld [vmem:[%s1577 + $0x30] sm:$0xff]
      %v1585 = vld [vmem:[%s1577 + $0x38] sm:$0xff]
      %v1586 = vld [vmem:[%s1577 + $0x40] sm:$0xff]
      %v1587 = vld [vmem:[%s1577 + $0x48] sm:$0x3f]
      %v1588 = vrot.slane %v1313, 3
      %v1589 = vsel %vm1338, %v1588, 0
      %v1592 = vsel %vm411, %v1587, 0
      %1594 = vmatprep.subr.mxu0 0.0
      %1595 = vmatpush1.msra.mxu0 0.0
      %1596 = vmatprep.subr.mxu0 0.0
      %1597 = vmatpush1.msra.mxu0 0.0
      %1598 = vmatprep.subr.mxu0 0.0
      %1599 = vmatpush1.msra.mxu0 0.0
      %1600 = vmatprep.subr.mxu0 0.0
      %1601 = vmatpush1.msra.mxu0 0.0
      %1602 = vmatprep.subr.mxu0 0.0
      %1603 = vmatpush1.msra.mxu0 0.0
      %1604 = vmatprep.subr.mxu0 0.0
      %1605 = vmatpush1.msra.mxu0 0.0
      %1606 = vmatprep.subr.mxu0 0.0
      %1607 = vmatpush1.msra.mxu0 %v1592
      %1608 = vmatprep.subr.mxu0 0.0
      %1609 = vmatpush1.msra.mxu0 %v1586
      %1610 = vmatprep.subr.mxu0 0.0
      %1611 = vmatpush1.msra.mxu0 %v1585
      %1612 = vmatprep.subr.mxu0 0.0
      %1613 = vmatpush1.msra.mxu0 %v1584
      %1614 = vmatprep.subr.mxu0 0.0
      %1615 = vmatpush1.msra.mxu0 %v1583
      %1616 = vmatprep.subr.mxu0 0.0
      %1617 = vmatpush1.msra.mxu0 %v1582
      %1618 = vmatprep.subr.mxu0 0.0
      %1619 = vmatpush1.msra.mxu0 %v1581
      %1620 = vmatprep.subr.mxu0 0.0
      %1621 = vmatpush1.msra.mxu0 %v1580
      %1622 = vmatprep.subr.mxu0 0.0
      %1623 = vmatpush1.msra.mxu0 %v1579
      %1624 = vmatprep.subr.mxu0 0.0
      %1625 = vmatpush1.msra.mxu0 %v1578
      %1626 = vmatprep.subr.mxu0 0.0
      %1627 = vmatpush2.msra.mxu0 0.0
      %1628 = vmatprep.subr.mxu0 0.0
      %1629 = vmatpush2.msra.mxu0 0.0
      %1630 = vmatprep.subr.mxu0 0.0
      %1631 = vmatpush2.msra.mxu0 0.0
      %1632 = vmatprep.subr.mxu0 0.0
      %1633 = vmatpush2.msra.mxu0 0.0
      %1634 = vmatprep.subr.mxu0 0.0
      %1635 = vmatpush2.msra.mxu0 0.0
      %1636 = vmatprep.subr.mxu0 0.0
      %1637 = vmatpush2.msra.mxu0 0.0
      %1638 = vmatprep.subr.mxu0 0.0
      %1639 = vmatpush2.msra.mxu0 0.0
      %1640 = vmatprep.subr.mxu0 0.0
      %1641 = vmatpush2.msra.mxu0 0.0
      %1642 = vmatprep.subr.mxu0 0.0
      %1643 = vmatpush2.msra.mxu0 0.0
      %1644 = vmatprep.subr.mxu0 0.0
      %1645 = vmatpush2.msra.mxu0 0.0
      %1646 = vmatprep.subr.mxu0 0.0
      %1647 = vmatpush2.msra.mxu0 0.0
      %1648 = vmatprep.subr.mxu0 0.0
      %1649 = vmatpush2.msra.mxu0 0.0
      %1650 = vmatprep.subr.mxu0 0.0
      %1651 = vmatpush2.msra.mxu0 0.0
      %1652 = vmatprep.subr.mxu0 0.0
      %1653 = vmatpush2.msra.mxu0 0.0
      %1654 = vmatprep.subr.mxu0 0.0
      %1655 = vmatpush2.msra.mxu0 0.0
      %1656 = vmatprep.subr.mxu0 0.0
      %1657 = vmatpush2.msra.mxu0 0.0
      %1658 = vmatprep.mubr.f32.mxu0 0.0
      %1659 = vmatmul.mubr.f32.gmra.mxu0 %v1589
      %v1660 = vpop.f32.mrf.mxu0
      %v1661 = vadd.f32 0.0, %v1660
      %v1662 = vpop.f32.mrf.mxu0
      %1663 = vdwg.mxu0
      %v1664 = vadd.f32 %v1576, %v1661
      %s1665 = scalar_lea.vmem %s3, 320
      %v1666 = vld [vmem:[%s1665] sm:$0xff]
      %v1667 = vld [vmem:[%s1665 + $0x8] sm:$0xff]
      %v1668 = vld [vmem:[%s1665 + $0x10] sm:$0xff]
      %v1669 = vld [vmem:[%s1665 + $0x18] sm:$0xff]
      %v1670 = vld [vmem:[%s1665 + $0x20] sm:$0xff]
      %v1671 = vld [vmem:[%s1665 + $0x28] sm:$0xff]
      %v1672 = vld [vmem:[%s1665 + $0x30] sm:$0xff]
      %v1673 = vld [vmem:[%s1665 + $0x38] sm:$0xff]
      %v1674 = vld [vmem:[%s1665 + $0x40] sm:$0xff]
      %v1675 = vld [vmem:[%s1665 + $0x48] sm:$0x3f]
      %v1677 = vrot.slane %v1313, 4
      %v1678 = vrot.slane %v1314, 4
      %v1679 = vsel %vm799, %v1677, %v1678
      %v1680 = vsel %vm1338, %v1679, 0
      %v1683 = vsel %vm411, %v1675, 0
      %1685 = vmatprep.subr.mxu0 0.0
      %1686 = vmatpush1.msra.mxu0 0.0
      %1687 = vmatprep.subr.mxu0 0.0
      %1688 = vmatpush1.msra.mxu0 0.0
      %1689 = vmatprep.subr.mxu0 0.0
      %1690 = vmatpush1.msra.mxu0 0.0
      %1691 = vmatprep.subr.mxu0 0.0
      %1692 = vmatpush1.msra.mxu0 0.0
      %1693 = vmatprep.subr.mxu0 0.0
      %1694 = vmatpush1.msra.mxu0 0.0
      %1695 = vmatprep.subr.mxu0 0.0
      %1696 = vmatpush1.msra.mxu0 0.0
      %1697 = vmatprep.subr.mxu0 0.0
      %1698 = vmatpush1.msra.mxu0 %v1683
      %1699 = vmatprep.subr.mxu0 0.0
      %1700 = vmatpush1.msra.mxu0 %v1674
      %1701 = vmatprep.subr.mxu0 0.0
      %1702 = vmatpush1.msra.mxu0 %v1673
      %1703 = vmatprep.subr.mxu0 0.0
      %1704 = vmatpush1.msra.mxu0 %v1672
      %1705 = vmatprep.subr.mxu0 0.0
      %1706 = vmatpush1.msra.mxu0 %v1671
      %1707 = vmatprep.subr.mxu0 0.0
      %1708 = vmatpush1.msra.mxu0 %v1670
      %1709 = vmatprep.subr.mxu0 0.0
      %1710 = vmatpush1.msra.mxu0 %v1669
      %1711 = vmatprep.subr.mxu0 0.0
      %1712 = vmatpush1.msra.mxu0 %v1668
      %1713 = vmatprep.subr.mxu0 0.0
      %1714 = vmatpush1.msra.mxu0 %v1667
      %1715 = vmatprep.subr.mxu0 0.0
      %1716 = vmatpush1.msra.mxu0 %v1666
      %1717 = vmatprep.subr.mxu0 0.0
      %1718 = vmatpush2.msra.mxu0 0.0
      %1719 = vmatprep.subr.mxu0 0.0
      %1720 = vmatpush2.msra.mxu0 0.0
      %1721 = vmatprep.subr.mxu0 0.0
      %1722 = vmatpush2.msra.mxu0 0.0
      %1723 = vmatprep.subr.mxu0 0.0
      %1724 = vmatpush2.msra.mxu0 0.0
      %1725 = vmatprep.subr.mxu0 0.0
      %1726 = vmatpush2.msra.mxu0 0.0
      %1727 = vmatprep.subr.mxu0 0.0
      %1728 = vmatpush2.msra.mxu0 0.0
      %1729 = vmatprep.subr.mxu0 0.0
      %1730 = vmatpush2.msra.mxu0 0.0
      %1731 = vmatprep.subr.mxu0 0.0
      %1732 = vmatpush2.msra.mxu0 0.0
      %1733 = vmatprep.subr.mxu0 0.0
      %1734 = vmatpush2.msra.mxu0 0.0
      %1735 = vmatprep.subr.mxu0 0.0
      %1736 = vmatpush2.msra.mxu0 0.0
      %1737 = vmatprep.subr.mxu0 0.0
      %1738 = vmatpush2.msra.mxu0 0.0
      %1739 = vmatprep.subr.mxu0 0.0
      %1740 = vmatpush2.msra.mxu0 0.0
      %1741 = vmatprep.subr.mxu0 0.0
      %1742 = vmatpush2.msra.mxu0 0.0
      %1743 = vmatprep.subr.mxu0 0.0
      %1744 = vmatpush2.msra.mxu0 0.0
      %1745 = vmatprep.subr.mxu0 0.0
      %1746 = vmatpush2.msra.mxu0 0.0
      %1747 = vmatprep.subr.mxu0 0.0
      %1748 = vmatpush2.msra.mxu0 0.0
      %1749 = vmatprep.mubr.f32.mxu0 0.0
      %1750 = vmatmul.mubr.f32.gmra.mxu0 %v1680
      %v1751 = vpop.f32.mrf.mxu0
      %v1752 = vadd.f32 0.0, %v1751
      %v1753 = vpop.f32.mrf.mxu0
      %1754 = vdwg.mxu0
      %v1755 = vadd.f32 %v1664, %v1752
      %s1756 = scalar_lea.vmem %s3, 400
      %v1757 = vld [vmem:[%s1756] sm:$0xff]
      %v1758 = vld [vmem:[%s1756 + $0x8] sm:$0xff]
      %v1759 = vld [vmem:[%s1756 + $0x10] sm:$0xff]
      %v1760 = vld [vmem:[%s1756 + $0x18] sm:$0xff]
      %v1761 = vld [vmem:[%s1756 + $0x20] sm:$0xff]
      %v1762 = vld [vmem:[%s1756 + $0x28] sm:$0xff]
      %v1763 = vld [vmem:[%s1756 + $0x30] sm:$0xff]
      %v1764 = vld [vmem:[%s1756 + $0x38] sm:$0xff]
      %v1765 = vld [vmem:[%s1756 + $0x40] sm:$0xff]
      %v1766 = vld [vmem:[%s1756 + $0x48] sm:$0x3f]
      %v1767 = vrot.slane %v1313, 5
      %v1768 = vrot.slane %v1314, 5
      %v1769 = vsel %vm906, %v1767, %v1768
      %v1770 = vsel %vm1338, %v1769, 0
      %v1773 = vsel %vm411, %v1766, 0
      %1775 = vmatprep.subr.mxu0 0.0
      %1776 = vmatpush1.msra.mxu0 0.0
      %1777 = vmatprep.subr.mxu0 0.0
      %1778 = vmatpush1.msra.mxu0 0.0
      %1779 = vmatprep.subr.mxu0 0.0
      %1780 = vmatpush1.msra.mxu0 0.0
      %1781 = vmatprep.subr.mxu0 0.0
      %1782 = vmatpush1.msra.mxu0 0.0
      %1783 = vmatprep.subr.mxu0 0.0
      %1784 = vmatpush1.msra.mxu0 0.0
      %1785 = vmatprep.subr.mxu0 0.0
      %1786 = vmatpush1.msra.mxu0 0.0
      %1787 = vmatprep.subr.mxu0 0.0
      %1788 = vmatpush1.msra.mxu0 %v1773
      %1789 = vmatprep.subr.mxu0 0.0
      %1790 = vmatpush1.msra.mxu0 %v1765
      %1791 = vmatprep.subr.mxu0 0.0
      %1792 = vmatpush1.msra.mxu0 %v1764
      %1793 = vmatprep.subr.mxu0 0.0
      %1794 = vmatpush1.msra.mxu0 %v1763
      %1795 = vmatprep.subr.mxu0 0.0
      %1796 = vmatpush1.msra.mxu0 %v1762
      %1797 = vmatprep.subr.mxu0 0.0
      %1798 = vmatpush1.msra.mxu0 %v1761
      %1799 = vmatprep.subr.mxu0 0.0
      %1800 = vmatpush1.msra.mxu0 %v1760
      %1801 = vmatprep.subr.mxu0 0.0
      %1802 = vmatpush1.msra.mxu0 %v1759
      %1803 = vmatprep.subr.mxu0 0.0
      %1804 = vmatpush1.msra.mxu0 %v1758
      %1805 = vmatprep.subr.mxu0 0.0
      %1806 = vmatpush1.msra.mxu0 %v1757
      %1807 = vmatprep.subr.mxu0 0.0
      %1808 = vmatpush2.msra.mxu0 0.0
      %1809 = vmatprep.subr.mxu0 0.0
      %1810 = vmatpush2.msra.mxu0 0.0
      %1811 = vmatprep.subr.mxu0 0.0
      %1812 = vmatpush2.msra.mxu0 0.0
      %1813 = vmatprep.subr.mxu0 0.0
      %1814 = vmatpush2.msra.mxu0 0.0
      %1815 = vmatprep.subr.mxu0 0.0
      %1816 = vmatpush2.msra.mxu0 0.0
      %1817 = vmatprep.subr.mxu0 0.0
      %1818 = vmatpush2.msra.mxu0 0.0
      %1819 = vmatprep.subr.mxu0 0.0
      %1820 = vmatpush2.msra.mxu0 0.0
      %1821 = vmatprep.subr.mxu0 0.0
      %1822 = vmatpush2.msra.mxu0 0.0
      %1823 = vmatprep.subr.mxu0 0.0
      %1824 = vmatpush2.msra.mxu0 0.0
      %1825 = vmatprep.subr.mxu0 0.0
      %1826 = vmatpush2.msra.mxu0 0.0
      %1827 = vmatprep.subr.mxu0 0.0
      %1828 = vmatpush2.msra.mxu0 0.0
      %1829 = vmatprep.subr.mxu0 0.0
      %1830 = vmatpush2.msra.mxu0 0.0
      %1831 = vmatprep.subr.mxu0 0.0
      %1832 = vmatpush2.msra.mxu0 0.0
      %1833 = vmatprep.subr.mxu0 0.0
      %1834 = vmatpush2.msra.mxu0 0.0
      %1835 = vmatprep.subr.mxu0 0.0
      %1836 = vmatpush2.msra.mxu0 0.0
      %1837 = vmatprep.subr.mxu0 0.0
      %1838 = vmatpush2.msra.mxu0 0.0
      %1839 = vmatprep.mubr.f32.mxu0 0.0
      %1840 = vmatmul.mubr.f32.gmra.mxu0 %v1770
      %v1841 = vpop.f32.mrf.mxu0
      %v1842 = vadd.f32 0.0, %v1841
      %v1843 = vpop.f32.mrf.mxu0
      %1844 = vdwg.mxu0
      %v1845 = vadd.f32 %v1755, %v1842
      %s1846 = scalar_lea.vmem %s3, 480
      %v1847 = vld [vmem:[%s1846] sm:$0xff]
      %v1848 = vld [vmem:[%s1846 + $0x8] sm:$0xff]
      %v1849 = vld [vmem:[%s1846 + $0x10] sm:$0xff]
      %v1850 = vld [vmem:[%s1846 + $0x18] sm:$0xff]
      %v1851 = vld [vmem:[%s1846 + $0x20] sm:$0xff]
      %v1852 = vld [vmem:[%s1846 + $0x28] sm:$0xff]
      %v1853 = vld [vmem:[%s1846 + $0x30] sm:$0xff]
      %v1854 = vld [vmem:[%s1846 + $0x38] sm:$0xff]
      %v1855 = vld [vmem:[%s1846 + $0x40] sm:$0xff]
      %v1856 = vld [vmem:[%s1846 + $0x48] sm:$0x3f]
      %v1857 = vrot.slane %v1313, 6
      %v1858 = vrot.slane %v1314, 6
      %v1859 = vsel %vm1013, %v1857, %v1858
      %v1860 = vsel %vm1338, %v1859, 0
      %v1863 = vsel %vm411, %v1856, 0
      %1865 = vmatprep.subr.mxu0 0.0
      %1866 = vmatpush1.msra.mxu0 0.0
      %1867 = vmatprep.subr.mxu0 0.0
      %1868 = vmatpush1.msra.mxu0 0.0
      %1869 = vmatprep.subr.mxu0 0.0
      %1870 = vmatpush1.msra.mxu0 0.0
      %1871 = vmatprep.subr.mxu0 0.0
      %1872 = vmatpush1.msra.mxu0 0.0
      %1873 = vmatprep.subr.mxu0 0.0
      %1874 = vmatpush1.msra.mxu0 0.0
      %1875 = vmatprep.subr.mxu0 0.0
      %1876 = vmatpush1.msra.mxu0 0.0
      %1877 = vmatprep.subr.mxu0 0.0
      %1878 = vmatpush1.msra.mxu0 %v1863
      %1879 = vmatprep.subr.mxu0 0.0
      %1880 = vmatpush1.msra.mxu0 %v1855
      %1881 = vmatprep.subr.mxu0 0.0
      %1882 = vmatpush1.msra.mxu0 %v1854
      %1883 = vmatprep.subr.mxu0 0.0
      %1884 = vmatpush1.msra.mxu0 %v1853
      %1885 = vmatprep.subr.mxu0 0.0
      %1886 = vmatpush1.msra.mxu0 %v1852
      %1887 = vmatprep.subr.mxu0 0.0
      %1888 = vmatpush1.msra.mxu0 %v1851
      %1889 = vmatprep.subr.mxu0 0.0
      %1890 = vmatpush1.msra.mxu0 %v1850
      %1891 = vmatprep.subr.mxu0 0.0
      %1892 = vmatpush1.msra.mxu0 %v1849
      %1893 = vmatprep.subr.mxu0 0.0
      %1894 = vmatpush1.msra.mxu0 %v1848
      %1895 = vmatprep.subr.mxu0 0.0
      %1896 = vmatpush1.msra.mxu0 %v1847
      %1897 = vmatprep.subr.mxu0 0.0
      %1898 = vmatpush2.msra.mxu0 0.0
      %1899 = vmatprep.subr.mxu0 0.0
      %1900 = vmatpush2.msra.mxu0 0.0
      %1901 = vmatprep.subr.mxu0 0.0
      %1902 = vmatpush2.msra.mxu0 0.0
      %1903 = vmatprep.subr.mxu0 0.0
      %1904 = vmatpush2.msra.mxu0 0.0
      %1905 = vmatprep.subr.mxu0 0.0
      %1906 = vmatpush2.msra.mxu0 0.0
      %1907 = vmatprep.subr.mxu0 0.0
      %1908 = vmatpush2.msra.mxu0 0.0
      %1909 = vmatprep.subr.mxu0 0.0
      %1910 = vmatpush2.msra.mxu0 0.0
      %1911 = vmatprep.subr.mxu0 0.0
      %1912 = vmatpush2.msra.mxu0 0.0
      %1913 = vmatprep.subr.mxu0 0.0
      %1914 = vmatpush2.msra.mxu0 0.0
      %1915 = vmatprep.subr.mxu0 0.0
      %1916 = vmatpush2.msra.mxu0 0.0
      %1917 = vmatprep.subr.mxu0 0.0
      %1918 = vmatpush2.msra.mxu0 0.0
      %1919 = vmatprep.subr.mxu0 0.0
      %1920 = vmatpush2.msra.mxu0 0.0
      %1921 = vmatprep.subr.mxu0 0.0
      %1922 = vmatpush2.msra.mxu0 0.0
      %1923 = vmatprep.subr.mxu0 0.0
      %1924 = vmatpush2.msra.mxu0 0.0
      %1925 = vmatprep.subr.mxu0 0.0
      %1926 = vmatpush2.msra.mxu0 0.0
      %1927 = vmatprep.subr.mxu0 0.0
      %1928 = vmatpush2.msra.mxu0 0.0
      %1929 = vmatprep.mubr.f32.mxu0 0.0
      %1930 = vmatmul.mubr.f32.gmra.mxu0 %v1860
      %v1931 = vpop.f32.mrf.mxu0
      %v1932 = vadd.f32 0.0, %v1931
      %v1933 = vpop.f32.mrf.mxu0
      %1934 = vdwg.mxu0
      %v1935 = vadd.f32 %v1845, %v1932
      %s1936 = scalar_lea.vmem %s3, 560
      %v1937 = vld [vmem:[%s1936] sm:$0xff]
      %v1938 = vld [vmem:[%s1936 + $0x8] sm:$0xff]
      %v1939 = vld [vmem:[%s1936 + $0x10] sm:$0xff]
      %v1940 = vld [vmem:[%s1936 + $0x18] sm:$0xff]
      %v1941 = vld [vmem:[%s1936 + $0x20] sm:$0xff]
      %v1942 = vld [vmem:[%s1936 + $0x28] sm:$0xff]
      %v1943 = vld [vmem:[%s1936 + $0x30] sm:$0xff]
      %v1944 = vld [vmem:[%s1936 + $0x38] sm:$0xff]
      %v1945 = vld [vmem:[%s1936 + $0x40] sm:$0xff]
      %v1946 = vld [vmem:[%s1936 + $0x48] sm:$0x3f]
      %v1947 = vrot.slane %v1313, 7
      %v1948 = vrot.slane %v1314, 7
      %v1949 = vsel %vm1120, %v1947, %v1948
      %v1950 = vsel %vm1338, %v1949, 0
      %v1953 = vsel %vm411, %v1946, 0
      %1955 = vmatprep.subr.mxu0 0.0
      %1956 = vmatpush1.msra.mxu0 0.0
      %1957 = vmatprep.subr.mxu0 0.0
      %1958 = vmatpush1.msra.mxu0 0.0
      %1959 = vmatprep.subr.mxu0 0.0
      %1960 = vmatpush1.msra.mxu0 0.0
      %1961 = vmatprep.subr.mxu0 0.0
      %1962 = vmatpush1.msra.mxu0 0.0
      %1963 = vmatprep.subr.mxu0 0.0
      %1964 = vmatpush1.msra.mxu0 0.0
      %1965 = vmatprep.subr.mxu0 0.0
      %1966 = vmatpush1.msra.mxu0 0.0
      %1967 = vmatprep.subr.mxu0 0.0
      %1968 = vmatpush1.msra.mxu0 %v1953
      %1969 = vmatprep.subr.mxu0 0.0
      %1970 = vmatpush1.msra.mxu0 %v1945
      %1971 = vmatprep.subr.mxu0 0.0
      %1972 = vmatpush1.msra.mxu0 %v1944
      %1973 = vmatprep.subr.mxu0 0.0
      %1974 = vmatpush1.msra.mxu0 %v1943
      %1975 = vmatprep.subr.mxu0 0.0
      %1976 = vmatpush1.msra.mxu0 %v1942
      %1977 = vmatprep.subr.mxu0 0.0
      %1978 = vmatpush1.msra.mxu0 %v1941
      %1979 = vmatprep.subr.mxu0 0.0
      %1980 = vmatpush1.msra.mxu0 %v1940
      %1981 = vmatprep.subr.mxu0 0.0
      %1982 = vmatpush1.msra.mxu0 %v1939
      %1983 = vmatprep.subr.mxu0 0.0
      %1984 = vmatpush1.msra.mxu0 %v1938
      %1985 = vmatprep.subr.mxu0 0.0
      %1986 = vmatpush1.msra.mxu0 %v1937
      %1987 = vmatprep.subr.mxu0 0.0
      %1988 = vmatpush2.msra.mxu0 0.0
      %1989 = vmatprep.subr.mxu0 0.0
      %1990 = vmatpush2.msra.mxu0 0.0
      %1991 = vmatprep.subr.mxu0 0.0
      %1992 = vmatpush2.msra.mxu0 0.0
      %1993 = vmatprep.subr.mxu0 0.0
      %1994 = vmatpush2.msra.mxu0 0.0
      %1995 = vmatprep.subr.mxu0 0.0
      %1996 = vmatpush2.msra.mxu0 0.0
      %1997 = vmatprep.subr.mxu0 0.0
      %1998 = vmatpush2.msra.mxu0 0.0
      %1999 = vmatprep.subr.mxu0 0.0
      %2000 = vmatpush2.msra.mxu0 0.0
      %2001 = vmatprep.subr.mxu0 0.0
      %2002 = vmatpush2.msra.mxu0 0.0
      %2003 = vmatprep.subr.mxu0 0.0
      %2004 = vmatpush2.msra.mxu0 0.0
      %2005 = vmatprep.subr.mxu0 0.0
      %2006 = vmatpush2.msra.mxu0 0.0
      %2007 = vmatprep.subr.mxu0 0.0
      %2008 = vmatpush2.msra.mxu0 0.0
      %2009 = vmatprep.subr.mxu0 0.0
      %2010 = vmatpush2.msra.mxu0 0.0
      %2011 = vmatprep.subr.mxu0 0.0
      %2012 = vmatpush2.msra.mxu0 0.0
      %2013 = vmatprep.subr.mxu0 0.0
      %2014 = vmatpush2.msra.mxu0 0.0
      %2015 = vmatprep.subr.mxu0 0.0
      %2016 = vmatpush2.msra.mxu0 0.0
      %2017 = vmatprep.subr.mxu0 0.0
      %2018 = vmatpush2.msra.mxu0 0.0
      %2019 = vmatprep.mubr.f32.mxu0 0.0
      %2020 = vmatmul.mubr.f32.gmra.mxu0 %v1950
      %v2021 = vpop.f32.mrf.mxu0
      %v2022 = vadd.f32 0.0, %v2021
      %v2023 = vpop.f32.mrf.mxu0
      %2024 = vdwg.mxu0
      %v2025 = vadd.f32 %v1935, %v2022
      %s2026 = scalar_lea.vmem %s3, 640
      %v2027 = vld [vmem:[%s2026] sm:$0xff]
      %v2028 = vld [vmem:[%s2026 + $0x8] sm:$0xff]
      %v2029 = vld [vmem:[%s2026 + $0x10] sm:$0xff]
      %v2030 = vld [vmem:[%s2026 + $0x18] sm:$0xff]
      %v2031 = vld [vmem:[%s2026 + $0x20] sm:$0xff]
      %v2032 = vld [vmem:[%s2026 + $0x28] sm:$0xff]
      %v2033 = vld [vmem:[%s2026 + $0x30] sm:$0xff]
      %v2034 = vld [vmem:[%s2026 + $0x38] sm:$0xff]
      %v2035 = vld [vmem:[%s2026 + $0x40] sm:$0xff]
      %v2036 = vld [vmem:[%s2026 + $0x48] sm:$0x3f]
      %v2037 = vsel %vm1338, %v1314, 0
      %v2040 = vsel %vm411, %v2036, 0
      %2042 = vmatprep.subr.mxu0 0.0
      %2043 = vmatpush1.msra.mxu0 0.0
      %2044 = vmatprep.subr.mxu0 0.0
      %2045 = vmatpush1.msra.mxu0 0.0
      %2046 = vmatprep.subr.mxu0 0.0
      %2047 = vmatpush1.msra.mxu0 0.0
      %2048 = vmatprep.subr.mxu0 0.0
      %2049 = vmatpush1.msra.mxu0 0.0
      %2050 = vmatprep.subr.mxu0 0.0
      %2051 = vmatpush1.msra.mxu0 0.0
      %2052 = vmatprep.subr.mxu0 0.0
      %2053 = vmatpush1.msra.mxu0 0.0
      %2054 = vmatprep.subr.mxu0 0.0
      %2055 = vmatpush1.msra.mxu0 %v2040
      %2056 = vmatprep.subr.mxu0 0.0
      %2057 = vmatpush1.msra.mxu0 %v2035
      %2058 = vmatprep.subr.mxu0 0.0
      %2059 = vmatpush1.msra.mxu0 %v2034
      %2060 = vmatprep.subr.mxu0 0.0
      %2061 = vmatpush1.msra.mxu0 %v2033
      %2062 = vmatprep.subr.mxu0 0.0
      %2063 = vmatpush1.msra.mxu0 %v2032
      %2064 = vmatprep.subr.mxu0 0.0
      %2065 = vmatpush1.msra.mxu0 %v2031
      %2066 = vmatprep.subr.mxu0 0.0
      %2067 = vmatpush1.msra.mxu0 %v2030
      %2068 = vmatprep.subr.mxu0 0.0
      %2069 = vmatpush1.msra.mxu0 %v2029
      %2070 = vmatprep.subr.mxu0 0.0
      %2071 = vmatpush1.msra.mxu0 %v2028
      %2072 = vmatprep.subr.mxu0 0.0
      %2073 = vmatpush1.msra.mxu0 %v2027
      %2074 = vmatprep.subr.mxu0 0.0
      %2075 = vmatpush2.msra.mxu0 0.0
      %2076 = vmatprep.subr.mxu0 0.0
      %2077 = vmatpush2.msra.mxu0 0.0
      %2078 = vmatprep.subr.mxu0 0.0
      %2079 = vmatpush2.msra.mxu0 0.0
      %2080 = vmatprep.subr.mxu0 0.0
      %2081 = vmatpush2.msra.mxu0 0.0
      %2082 = vmatprep.subr.mxu0 0.0
      %2083 = vmatpush2.msra.mxu0 0.0
      %2084 = vmatprep.subr.mxu0 0.0
      %2085 = vmatpush2.msra.mxu0 0.0
      %2086 = vmatprep.subr.mxu0 0.0
      %2087 = vmatpush2.msra.mxu0 0.0
      %2088 = vmatprep.subr.mxu0 0.0
      %2089 = vmatpush2.msra.mxu0 0.0
      %2090 = vmatprep.subr.mxu0 0.0
      %2091 = vmatpush2.msra.mxu0 0.0
      %2092 = vmatprep.subr.mxu0 0.0
      %2093 = vmatpush2.msra.mxu0 0.0
      %2094 = vmatprep.subr.mxu0 0.0
      %2095 = vmatpush2.msra.mxu0 0.0
      %2096 = vmatprep.subr.mxu0 0.0
      %2097 = vmatpush2.msra.mxu0 0.0
      %2098 = vmatprep.subr.mxu0 0.0
      %2099 = vmatpush2.msra.mxu0 0.0
      %2100 = vmatprep.subr.mxu0 0.0
      %2101 = vmatpush2.msra.mxu0 0.0
      %2102 = vmatprep.subr.mxu0 0.0
      %2103 = vmatpush2.msra.mxu0 0.0
      %2104 = vmatprep.subr.mxu0 0.0
      %2105 = vmatpush2.msra.mxu0 0.0
      %2106 = vmatprep.mubr.f32.mxu0 0.0
      %2107 = vmatmul.mubr.f32.gmra.mxu0 %v2037
      %v2108 = vpop.f32.mrf.mxu0
      %v2109 = vadd.f32 0.0, %v2108
      %v2110 = vpop.f32.mrf.mxu0
      %2111 = vdwg.mxu0
      %v2112 = vadd.f32 %v2025, %v2109
      %v2113 = vlaneseq
      %v2114 = vshrl.u32 %v2113, 7
      %v2115 = vsub.s32 1, %v2114
      %v2116 = vrot.slane %v362, %v2115
      %v2117 = vadd.f32 %v2112, %v2116
      %v2118 = vld [vmem:[%s4] sm:$0xff]
      %v2119 = vld [vmem:[%s4 + $0x8] sm:$0xff]
      %v2120 = vld [vmem:[%s4 + $0x10] sm:$0xff]
      %v2121 = vld [vmem:[%s4 + $0x18] sm:$0xff]
      %v2122 = vld [vmem:[%s4 + $0x20] sm:$0xff]
      %v2123 = vld [vmem:[%s4 + $0x28] sm:$0xff]
      %v2124 = vld [vmem:[%s4 + $0x30] sm:$0xff]
      %v2125 = vld [vmem:[%s4 + $0x38] sm:$0xff]
      %v2126 = vld [vmem:[%s4 + $0x40] sm:$0x3f]
      %v2127 = vld [vmem:[%s5] sm:$0xff]
      %v2128 = vld [vmem:[%s5 + $0x8] sm:$0xff]
      %v2129 = vld [vmem:[%s5 + $0x10] sm:$0xff]
      %v2130 = vld [vmem:[%s5 + $0x18] sm:$0x3f]
      %vm2131 = vcmask 244736
      %v2133 = vsel %vm2131, %v2117, 0
      %v2136 = vsel %vm411, %v2130, 0
      %2138 = vmatprep.subr.mxu0 0.0
      %2139 = vmatpush1.msra.mxu0 0.0
      %2140 = vmatprep.subr.mxu0 0.0
      %2141 = vmatpush1.msra.mxu0 0.0
      %2142 = vmatprep.subr.mxu0 0.0
      %2143 = vmatpush1.msra.mxu0 0.0
      %2144 = vmatprep.subr.mxu0 0.0
      %2145 = vmatpush1.msra.mxu0 0.0
      %2146 = vmatprep.subr.mxu0 0.0
      %2147 = vmatpush1.msra.mxu0 0.0
      %2148 = vmatprep.subr.mxu0 0.0
      %2149 = vmatpush1.msra.mxu0 0.0
      %2150 = vmatprep.subr.mxu0 0.0
      %2151 = vmatpush1.msra.mxu0 0.0
      %2152 = vmatprep.subr.mxu0 0.0
      %2153 = vmatpush1.msra.mxu0 0.0
      %2154 = vmatprep.subr.mxu0 0.0
      %2155 = vmatpush1.msra.mxu0 0.0
      %2156 = vmatprep.subr.mxu0 0.0
      %2157 = vmatpush1.msra.mxu0 0.0
      %2158 = vmatprep.subr.mxu0 0.0
      %2159 = vmatpush1.msra.mxu0 0.0
      %2160 = vmatprep.subr.mxu0 0.0
      %2161 = vmatpush1.msra.mxu0 0.0
      %2162 = vmatprep.subr.mxu0 0.0
      %2163 = vmatpush1.msra.mxu0 %v2136
      %2164 = vmatprep.subr.mxu0 0.0
      %2165 = vmatpush1.msra.mxu0 %v2129
      %2166 = vmatprep.subr.mxu0 0.0
      %2167 = vmatpush1.msra.mxu0 %v2128
      %2168 = vmatprep.subr.mxu0 0.0
      %2169 = vmatpush1.msra.mxu0 %v2127
      %2170 = vmatprep.subr.mxu0 0.0
      %2171 = vmatpush2.msra.mxu0 0.0
      %2172 = vmatprep.subr.mxu0 0.0
      %2173 = vmatpush2.msra.mxu0 0.0
      %2174 = vmatprep.subr.mxu0 0.0
      %2175 = vmatpush2.msra.mxu0 0.0
      %2176 = vmatprep.subr.mxu0 0.0
      %2177 = vmatpush2.msra.mxu0 0.0
      %2178 = vmatprep.subr.mxu0 0.0
      %2179 = vmatpush2.msra.mxu0 0.0
      %2180 = vmatprep.subr.mxu0 0.0
      %2181 = vmatpush2.msra.mxu0 0.0
      %2182 = vmatprep.subr.mxu0 0.0
      %2183 = vmatpush2.msra.mxu0 0.0
      %2184 = vmatprep.subr.mxu0 0.0
      %2185 = vmatpush2.msra.mxu0 0.0
      %2186 = vmatprep.subr.mxu0 0.0
      %2187 = vmatpush2.msra.mxu0 0.0
      %2188 = vmatprep.subr.mxu0 0.0
      %2189 = vmatpush2.msra.mxu0 0.0
      %2190 = vmatprep.subr.mxu0 0.0
      %2191 = vmatpush2.msra.mxu0 0.0
      %2192 = vmatprep.subr.mxu0 0.0
      %2193 = vmatpush2.msra.mxu0 0.0
      %2194 = vmatprep.subr.mxu0 0.0
      %2195 = vmatpush2.msra.mxu0 0.0
      %2196 = vmatprep.subr.mxu0 0.0
      %2197 = vmatpush2.msra.mxu0 0.0
      %2198 = vmatprep.subr.mxu0 0.0
      %2199 = vmatpush2.msra.mxu0 0.0
      %2200 = vmatprep.subr.mxu0 0.0
      %2201 = vmatpush2.msra.mxu0 0.0
      %2202 = vmatprep.mubr.f32.mxu0 0.0
      %2203 = vmatmul.mubr.f32.gmra.mxu0 %v2133
      %v2204 = vpop.f32.mrf.mxu0
      %v2205 = vadd.f32 0.0, %v2204
      %v2206 = vpop.f32.mrf.mxu0
      %2207 = vdwg.mxu0
      %vm2208 = vcmask 572416
      %v2210 = vsel %vm2208, %v363, 0
      %v2213 = vsel %vm411, %v2126, 0
      %2215 = vmatprep.subr.mxu0 0.0
      %2216 = vmatpush1.msra.mxu0 0.0
      %2217 = vmatprep.subr.mxu0 0.0
      %2218 = vmatpush1.msra.mxu0 0.0
      %2219 = vmatprep.subr.mxu0 0.0
      %2220 = vmatpush1.msra.mxu0 0.0
      %2221 = vmatprep.subr.mxu0 0.0
      %2222 = vmatpush1.msra.mxu0 0.0
      %2223 = vmatprep.subr.mxu0 0.0
      %2224 = vmatpush1.msra.mxu0 0.0
      %2225 = vmatprep.subr.mxu0 0.0
      %2226 = vmatpush1.msra.mxu0 0.0
      %2227 = vmatprep.subr.mxu0 0.0
      %2228 = vmatpush1.msra.mxu0 0.0
      %2229 = vmatprep.subr.mxu0 0.0
      %2230 = vmatpush1.msra.mxu0 %v2213
      %2231 = vmatprep.subr.mxu0 0.0
      %2232 = vmatpush1.msra.mxu0 %v2125
      %2233 = vmatprep.subr.mxu0 0.0
      %2234 = vmatpush1.msra.mxu0 %v2124
      %2235 = vmatprep.subr.mxu0 0.0
      %2236 = vmatpush1.msra.mxu0 %v2123
      %2237 = vmatprep.subr.mxu0 0.0
      %2238 = vmatpush1.msra.mxu0 %v2122
      %2239 = vmatprep.subr.mxu0 0.0
      %2240 = vmatpush1.msra.mxu0 %v2121
      %2241 = vmatprep.subr.mxu0 0.0
      %2242 = vmatpush1.msra.mxu0 %v2120
      %2243 = vmatprep.subr.mxu0 0.0
      %2244 = vmatpush1.msra.mxu0 %v2119
      %2245 = vmatprep.subr.mxu0 0.0
      %2246 = vmatpush1.msra.mxu0 %v2118
      %2247 = vmatprep.subr.mxu0 0.0
      %2248 = vmatpush2.msra.mxu0 0.0
      %2249 = vmatprep.subr.mxu0 0.0
      %2250 = vmatpush2.msra.mxu0 0.0
      %2251 = vmatprep.subr.mxu0 0.0
      %2252 = vmatpush2.msra.mxu0 0.0
      %2253 = vmatprep.subr.mxu0 0.0
      %2254 = vmatpush2.msra.mxu0 0.0
      %2255 = vmatprep.subr.mxu0 0.0
      %2256 = vmatpush2.msra.mxu0 0.0
      %2257 = vmatprep.subr.mxu0 0.0
      %2258 = vmatpush2.msra.mxu0 0.0
      %2259 = vmatprep.subr.mxu0 0.0
      %2260 = vmatpush2.msra.mxu0 0.0
      %2261 = vmatprep.subr.mxu0 0.0
      %2262 = vmatpush2.msra.mxu0 0.0
      %2263 = vmatprep.subr.mxu0 0.0
      %2264 = vmatpush2.msra.mxu0 0.0
      %2265 = vmatprep.subr.mxu0 0.0
      %2266 = vmatpush2.msra.mxu0 0.0
      %2267 = vmatprep.subr.mxu0 0.0
      %2268 = vmatpush2.msra.mxu0 0.0
      %2269 = vmatprep.subr.mxu0 0.0
      %2270 = vmatpush2.msra.mxu0 0.0
      %2271 = vmatprep.subr.mxu0 0.0
      %2272 = vmatpush2.msra.mxu0 0.0
      %2273 = vmatprep.subr.mxu0 0.0
      %2274 = vmatpush2.msra.mxu0 0.0
      %2275 = vmatprep.subr.mxu0 0.0
      %2276 = vmatpush2.msra.mxu0 0.0
      %2277 = vmatprep.subr.mxu0 0.0
      %2278 = vmatpush2.msra.mxu0 0.0
      %2279 = vmatprep.mubr.f32.mxu0 0.0
      %2280 = vmatmul.mubr.f32.gmra.mxu0 %v2210
      %v2281 = vpop.f32.mrf.mxu0
      %v2282 = vadd.f32 %v2205, %v2281
      %v2283 = vpop.f32.mrf.mxu0
      %2284 = vdwg.mxu0
      %s2285 = scalar_lea.vmem %s4, 72
      %v2286 = vld [vmem:[%s2285] sm:$0xff]
      %v2287 = vld [vmem:[%s2285 + $0x8] sm:$0xff]
      %v2288 = vld [vmem:[%s2285 + $0x10] sm:$0xff]
      %v2289 = vld [vmem:[%s2285 + $0x18] sm:$0xff]
      %v2290 = vld [vmem:[%s2285 + $0x20] sm:$0xff]
      %v2291 = vld [vmem:[%s2285 + $0x28] sm:$0xff]
      %v2292 = vld [vmem:[%s2285 + $0x30] sm:$0xff]
      %v2293 = vld [vmem:[%s2285 + $0x38] sm:$0xff]
      %v2294 = vld [vmem:[%s2285 + $0x40] sm:$0x3f]
      %v2295 = vrot.slane %v363, 1
      %v2296 = vsel %vm2208, %v2295, 0
      %v2299 = vsel %vm411, %v2294, 0
      %2301 = vmatprep.subr.mxu0 0.0
      %2302 = vmatpush1.msra.mxu0 0.0
      %2303 = vmatprep.subr.mxu0 0.0
      %2304 = vmatpush1.msra.mxu0 0.0
      %2305 = vmatprep.subr.mxu0 0.0
      %2306 = vmatpush1.msra.mxu0 0.0
      %2307 = vmatprep.subr.mxu0 0.0
      %2308 = vmatpush1.msra.mxu0 0.0
      %2309 = vmatprep.subr.mxu0 0.0
      %2310 = vmatpush1.msra.mxu0 0.0
      %2311 = vmatprep.subr.mxu0 0.0
      %2312 = vmatpush1.msra.mxu0 0.0
      %2313 = vmatprep.subr.mxu0 0.0
      %2314 = vmatpush1.msra.mxu0 0.0
      %2315 = vmatprep.subr.mxu0 0.0
      %2316 = vmatpush1.msra.mxu0 %v2299
      %2317 = vmatprep.subr.mxu0 0.0
      %2318 = vmatpush1.msra.mxu0 %v2293
      %2319 = vmatprep.subr.mxu0 0.0
      %2320 = vmatpush1.msra.mxu0 %v2292
      %2321 = vmatprep.subr.mxu0 0.0
      %2322 = vmatpush1.msra.mxu0 %v2291
      %2323 = vmatprep.subr.mxu0 0.0
      %2324 = vmatpush1.msra.mxu0 %v2290
      %2325 = vmatprep.subr.mxu0 0.0
      %2326 = vmatpush1.msra.mxu0 %v2289
      %2327 = vmatprep.subr.mxu0 0.0
      %2328 = vmatpush1.msra.mxu0 %v2288
      %2329 = vmatprep.subr.mxu0 0.0
      %2330 = vmatpush1.msra.mxu0 %v2287
      %2331 = vmatprep.subr.mxu0 0.0
      %2332 = vmatpush1.msra.mxu0 %v2286
      %2333 = vmatprep.subr.mxu0 0.0
      %2334 = vmatpush2.msra.mxu0 0.0
      %2335 = vmatprep.subr.mxu0 0.0
      %2336 = vmatpush2.msra.mxu0 0.0
      %2337 = vmatprep.subr.mxu0 0.0
      %2338 = vmatpush2.msra.mxu0 0.0
      %2339 = vmatprep.subr.mxu0 0.0
      %2340 = vmatpush2.msra.mxu0 0.0
      %2341 = vmatprep.subr.mxu0 0.0
      %2342 = vmatpush2.msra.mxu0 0.0
      %2343 = vmatprep.subr.mxu0 0.0
      %2344 = vmatpush2.msra.mxu0 0.0
      %2345 = vmatprep.subr.mxu0 0.0
      %2346 = vmatpush2.msra.mxu0 0.0
      %2347 = vmatprep.subr.mxu0 0.0
      %2348 = vmatpush2.msra.mxu0 0.0
      %2349 = vmatprep.subr.mxu0 0.0
      %2350 = vmatpush2.msra.mxu0 0.0
      %2351 = vmatprep.subr.mxu0 0.0
      %2352 = vmatpush2.msra.mxu0 0.0
      %2353 = vmatprep.subr.mxu0 0.0
      %2354 = vmatpush2.msra.mxu0 0.0
      %2355 = vmatprep.subr.mxu0 0.0
      %2356 = vmatpush2.msra.mxu0 0.0
      %2357 = vmatprep.subr.mxu0 0.0
      %2358 = vmatpush2.msra.mxu0 0.0
      %2359 = vmatprep.subr.mxu0 0.0
      %2360 = vmatpush2.msra.mxu0 0.0
      %2361 = vmatprep.subr.mxu0 0.0
      %2362 = vmatpush2.msra.mxu0 0.0
      %2363 = vmatprep.subr.mxu0 0.0
      %2364 = vmatpush2.msra.mxu0 0.0
      %2365 = vmatprep.mubr.f32.mxu0 0.0
      %2366 = vmatmul.mubr.f32.gmra.mxu0 %v2296
      %v2367 = vpop.f32.mrf.mxu0
      %v2368 = vadd.f32 0.0, %v2367
      %v2369 = vpop.f32.mrf.mxu0
      %2370 = vdwg.mxu0
      %v2371 = vadd.f32 %v2282, %v2368
      %s2372 = scalar_lea.vmem %s5, 32
      %v2373 = vld [vmem:[%s2372] sm:$0xff]
      %v2374 = vld [vmem:[%s2372 + $0x8] sm:$0xff]
      %v2375 = vld [vmem:[%s2372 + $0x10] sm:$0xff]
      %v2376 = vld [vmem:[%s2372 + $0x18] sm:$0x3f]
      %v2377 = vrot.slane %v2117, 1
      %v2378 = vsel %vm2131, %v2377, 0
      %v2381 = vsel %vm411, %v2376, 0
      %2383 = vmatprep.subr.mxu0 0.0
      %2384 = vmatpush1.msra.mxu0 0.0
      %2385 = vmatprep.subr.mxu0 0.0
      %2386 = vmatpush1.msra.mxu0 0.0
      %2387 = vmatprep.subr.mxu0 0.0
      %2388 = vmatpush1.msra.mxu0 0.0
      %2389 = vmatprep.subr.mxu0 0.0
      %2390 = vmatpush1.msra.mxu0 0.0
      %2391 = vmatprep.subr.mxu0 0.0
      %2392 = vmatpush1.msra.mxu0 0.0
      %2393 = vmatprep.subr.mxu0 0.0
      %2394 = vmatpush1.msra.mxu0 0.0
      %2395 = vmatprep.subr.mxu0 0.0
      %2396 = vmatpush1.msra.mxu0 0.0
      %2397 = vmatprep.subr.mxu0 0.0
      %2398 = vmatpush1.msra.mxu0 0.0
      %2399 = vmatprep.subr.mxu0 0.0
      %2400 = vmatpush1.msra.mxu0 0.0
      %2401 = vmatprep.subr.mxu0 0.0
      %2402 = vmatpush1.msra.mxu0 0.0
      %2403 = vmatprep.subr.mxu0 0.0
      %2404 = vmatpush1.msra.mxu0 0.0
      %2405 = vmatprep.subr.mxu0 0.0
      %2406 = vmatpush1.msra.mxu0 0.0
      %2407 = vmatprep.subr.mxu0 0.0
      %2408 = vmatpush1.msra.mxu0 %v2381
      %2409 = vmatprep.subr.mxu0 0.0
      %2410 = vmatpush1.msra.mxu0 %v2375
      %2411 = vmatprep.subr.mxu0 0.0
      %2412 = vmatpush1.msra.mxu0 %v2374
      %2413 = vmatprep.subr.mxu0 0.0
      %2414 = vmatpush1.msra.mxu0 %v2373
      %2415 = vmatprep.subr.mxu0 0.0
      %2416 = vmatpush2.msra.mxu0 0.0
      %2417 = vmatprep.subr.mxu0 0.0
      %2418 = vmatpush2.msra.mxu0 0.0
      %2419 = vmatprep.subr.mxu0 0.0
      %2420 = vmatpush2.msra.mxu0 0.0
      %2421 = vmatprep.subr.mxu0 0.0
      %2422 = vmatpush2.msra.mxu0 0.0
      %2423 = vmatprep.subr.mxu0 0.0
      %2424 = vmatpush2.msra.mxu0 0.0
      %2425 = vmatprep.subr.mxu0 0.0
      %2426 = vmatpush2.msra.mxu0 0.0
      %2427 = vmatprep.subr.mxu0 0.0
      %2428 = vmatpush2.msra.mxu0 0.0
      %2429 = vmatprep.subr.mxu0 0.0
      %2430 = vmatpush2.msra.mxu0 0.0
      %2431 = vmatprep.subr.mxu0 0.0
      %2432 = vmatpush2.msra.mxu0 0.0
      %2433 = vmatprep.subr.mxu0 0.0
      %2434 = vmatpush2.msra.mxu0 0.0
      %2435 = vmatprep.subr.mxu0 0.0
      %2436 = vmatpush2.msra.mxu0 0.0
      %2437 = vmatprep.subr.mxu0 0.0
      %2438 = vmatpush2.msra.mxu0 0.0
      %2439 = vmatprep.subr.mxu0 0.0
      %2440 = vmatpush2.msra.mxu0 0.0
      %2441 = vmatprep.subr.mxu0 0.0
      %2442 = vmatpush2.msra.mxu0 0.0
      %2443 = vmatprep.subr.mxu0 0.0
      %2444 = vmatpush2.msra.mxu0 0.0
      %2445 = vmatprep.subr.mxu0 0.0
      %2446 = vmatpush2.msra.mxu0 0.0
      %2447 = vmatprep.mubr.f32.mxu0 0.0
      %2448 = vmatmul.mubr.f32.gmra.mxu0 %v2378
      %v2449 = vpop.f32.mrf.mxu0
      %v2450 = vadd.f32 0.0, %v2449
      %v2451 = vpop.f32.mrf.mxu0
      %2452 = vdwg.mxu0
      %v2453 = vadd.f32 %v2371, %v2450
      %s2454 = scalar_lea.vmem %s4, 144
      %v2455 = vld [vmem:[%s2454] sm:$0xff]
      %v2456 = vld [vmem:[%s2454 + $0x8] sm:$0xff]
      %v2457 = vld [vmem:[%s2454 + $0x10] sm:$0xff]
      %v2458 = vld [vmem:[%s2454 + $0x18] sm:$0xff]
      %v2459 = vld [vmem:[%s2454 + $0x20] sm:$0xff]
      %v2460 = vld [vmem:[%s2454 + $0x28] sm:$0xff]
      %v2461 = vld [vmem:[%s2454 + $0x30] sm:$0xff]
      %v2462 = vld [vmem:[%s2454 + $0x38] sm:$0xff]
      %v2463 = vld [vmem:[%s2454 + $0x40] sm:$0x3f]
      %v2464 = vrot.slane %v363, 2
      %v2465 = vsel %vm2208, %v2464, 0
      %v2468 = vsel %vm411, %v2463, 0
      %2470 = vmatprep.subr.mxu0 0.0
      %2471 = vmatpush1.msra.mxu0 0.0
      %2472 = vmatprep.subr.mxu0 0.0
      %2473 = vmatpush1.msra.mxu0 0.0
      %2474 = vmatprep.subr.mxu0 0.0
      %2475 = vmatpush1.msra.mxu0 0.0
      %2476 = vmatprep.subr.mxu0 0.0
      %2477 = vmatpush1.msra.mxu0 0.0
      %2478 = vmatprep.subr.mxu0 0.0
      %2479 = vmatpush1.msra.mxu0 0.0
      %2480 = vmatprep.subr.mxu0 0.0
      %2481 = vmatpush1.msra.mxu0 0.0
      %2482 = vmatprep.subr.mxu0 0.0
      %2483 = vmatpush1.msra.mxu0 0.0
      %2484 = vmatprep.subr.mxu0 0.0
      %2485 = vmatpush1.msra.mxu0 %v2468
      %2486 = vmatprep.subr.mxu0 0.0
      %2487 = vmatpush1.msra.mxu0 %v2462
      %2488 = vmatprep.subr.mxu0 0.0
      %2489 = vmatpush1.msra.mxu0 %v2461
      %2490 = vmatprep.subr.mxu0 0.0
      %2491 = vmatpush1.msra.mxu0 %v2460
      %2492 = vmatprep.subr.mxu0 0.0
      %2493 = vmatpush1.msra.mxu0 %v2459
      %2494 = vmatprep.subr.mxu0 0.0
      %2495 = vmatpush1.msra.mxu0 %v2458
      %2496 = vmatprep.subr.mxu0 0.0
      %2497 = vmatpush1.msra.mxu0 %v2457
      %2498 = vmatprep.subr.mxu0 0.0
      %2499 = vmatpush1.msra.mxu0 %v2456
      %2500 = vmatprep.subr.mxu0 0.0
      %2501 = vmatpush1.msra.mxu0 %v2455
      %2502 = vmatprep.subr.mxu0 0.0
      %2503 = vmatpush2.msra.mxu0 0.0
      %2504 = vmatprep.subr.mxu0 0.0
      %2505 = vmatpush2.msra.mxu0 0.0
      %2506 = vmatprep.subr.mxu0 0.0
      %2507 = vmatpush2.msra.mxu0 0.0
      %2508 = vmatprep.subr.mxu0 0.0
      %2509 = vmatpush2.msra.mxu0 0.0
      %2510 = vmatprep.subr.mxu0 0.0
      %2511 = vmatpush2.msra.mxu0 0.0
      %2512 = vmatprep.subr.mxu0 0.0
      %2513 = vmatpush2.msra.mxu0 0.0
      %2514 = vmatprep.subr.mxu0 0.0
      %2515 = vmatpush2.msra.mxu0 0.0
      %2516 = vmatprep.subr.mxu0 0.0
      %2517 = vmatpush2.msra.mxu0 0.0
      %2518 = vmatprep.subr.mxu0 0.0
      %2519 = vmatpush2.msra.mxu0 0.0
      %2520 = vmatprep.subr.mxu0 0.0
      %2521 = vmatpush2.msra.mxu0 0.0
      %2522 = vmatprep.subr.mxu0 0.0
      %2523 = vmatpush2.msra.mxu0 0.0
      %2524 = vmatprep.subr.mxu0 0.0
      %2525 = vmatpush2.msra.mxu0 0.0
      %2526 = vmatprep.subr.mxu0 0.0
      %2527 = vmatpush2.msra.mxu0 0.0
      %2528 = vmatprep.subr.mxu0 0.0
      %2529 = vmatpush2.msra.mxu0 0.0
      %2530 = vmatprep.subr.mxu0 0.0
      %2531 = vmatpush2.msra.mxu0 0.0
      %2532 = vmatprep.subr.mxu0 0.0
      %2533 = vmatpush2.msra.mxu0 0.0
      %2534 = vmatprep.mubr.f32.mxu0 0.0
      %2535 = vmatmul.mubr.f32.gmra.mxu0 %v2465
      %v2536 = vpop.f32.mrf.mxu0
      %v2537 = vadd.f32 0.0, %v2536
      %v2538 = vpop.f32.mrf.mxu0
      %2539 = vdwg.mxu0
      %v2540 = vadd.f32 %v2453, %v2537
      %s2541 = scalar_lea.vmem %s5, 64
      %v2542 = vld [vmem:[%s2541] sm:$0xff]
      %v2543 = vld [vmem:[%s2541 + $0x8] sm:$0xff]
      %v2544 = vld [vmem:[%s2541 + $0x10] sm:$0xff]
      %v2545 = vld [vmem:[%s2541 + $0x18] sm:$0x3f]
      %v2546 = vrot.slane %v2117, 2
      %v2547 = vsel %vm2131, %v2546, 0
      %v2550 = vsel %vm411, %v2545, 0
      %2552 = vmatprep.subr.mxu0 0.0
      %2553 = vmatpush1.msra.mxu0 0.0
      %2554 = vmatprep.subr.mxu0 0.0
      %2555 = vmatpush1.msra.mxu0 0.0
      %2556 = vmatprep.subr.mxu0 0.0
      %2557 = vmatpush1.msra.mxu0 0.0
      %2558 = vmatprep.subr.mxu0 0.0
      %2559 = vmatpush1.msra.mxu0 0.0
      %2560 = vmatprep.subr.mxu0 0.0
      %2561 = vmatpush1.msra.mxu0 0.0
      %2562 = vmatprep.subr.mxu0 0.0
      %2563 = vmatpush1.msra.mxu0 0.0
      %2564 = vmatprep.subr.mxu0 0.0
      %2565 = vmatpush1.msra.mxu0 0.0
      %2566 = vmatprep.subr.mxu0 0.0
      %2567 = vmatpush1.msra.mxu0 0.0
      %2568 = vmatprep.subr.mxu0 0.0
      %2569 = vmatpush1.msra.mxu0 0.0
      %2570 = vmatprep.subr.mxu0 0.0
      %2571 = vmatpush1.msra.mxu0 0.0
      %2572 = vmatprep.subr.mxu0 0.0
      %2573 = vmatpush1.msra.mxu0 0.0
      %2574 = vmatprep.subr.mxu0 0.0
      %2575 = vmatpush1.msra.mxu0 0.0
      %2576 = vmatprep.subr.mxu0 0.0
      %2577 = vmatpush1.msra.mxu0 %v2550
      %2578 = vmatprep.subr.mxu0 0.0
      %2579 = vmatpush1.msra.mxu0 %v2544
      %2580 = vmatprep.subr.mxu0 0.0
      %2581 = vmatpush1.msra.mxu0 %v2543
      %2582 = vmatprep.subr.mxu0 0.0
      %2583 = vmatpush1.msra.mxu0 %v2542
      %2584 = vmatprep.subr.mxu0 0.0
      %2585 = vmatpush2.msra.mxu0 0.0
      %2586 = vmatprep.subr.mxu0 0.0
      %2587 = vmatpush2.msra.mxu0 0.0
      %2588 = vmatprep.subr.mxu0 0.0
      %2589 = vmatpush2.msra.mxu0 0.0
      %2590 = vmatprep.subr.mxu0 0.0
      %2591 = vmatpush2.msra.mxu0 0.0
      %2592 = vmatprep.subr.mxu0 0.0
      %2593 = vmatpush2.msra.mxu0 0.0
      %2594 = vmatprep.subr.mxu0 0.0
      %2595 = vmatpush2.msra.mxu0 0.0
      %2596 = vmatprep.subr.mxu0 0.0
      %2597 = vmatpush2.msra.mxu0 0.0
      %2598 = vmatprep.subr.mxu0 0.0
      %2599 = vmatpush2.msra.mxu0 0.0
      %2600 = vmatprep.subr.mxu0 0.0
      %2601 = vmatpush2.msra.mxu0 0.0
      %2602 = vmatprep.subr.mxu0 0.0
      %2603 = vmatpush2.msra.mxu0 0.0
      %2604 = vmatprep.subr.mxu0 0.0
      %2605 = vmatpush2.msra.mxu0 0.0
      %2606 = vmatprep.subr.mxu0 0.0
      %2607 = vmatpush2.msra.mxu0 0.0
      %2608 = vmatprep.subr.mxu0 0.0
      %2609 = vmatpush2.msra.mxu0 0.0
      %2610 = vmatprep.subr.mxu0 0.0
      %2611 = vmatpush2.msra.mxu0 0.0
      %2612 = vmatprep.subr.mxu0 0.0
      %2613 = vmatpush2.msra.mxu0 0.0
      %2614 = vmatprep.subr.mxu0 0.0
      %2615 = vmatpush2.msra.mxu0 0.0
      %2616 = vmatprep.mubr.f32.mxu0 0.0
      %2617 = vmatmul.mubr.f32.gmra.mxu0 %v2547
      %v2618 = vpop.f32.mrf.mxu0
      %v2619 = vadd.f32 0.0, %v2618
      %v2620 = vpop.f32.mrf.mxu0
      %2621 = vdwg.mxu0
      %v2622 = vadd.f32 %v2540, %v2619
      %v2623 = vlaneseq
      %v2624 = vshrl.u32 %v2623, 7
      %v2625 = vsub.s32 2, %v2624
      %v2626 = vrot.slane %v362, %v2625
      %v2627 = vadd.f32 %v2622, %v2626
      %v2628 = vld [vmem:[%s6] sm:$0xff]
      %v2629 = vld [vmem:[%s6 + $0x8] sm:$0xff]
      %v2630 = vld [vmem:[%s6 + $0x10] sm:$0xff]
      %v2631 = vld [vmem:[%s6 + $0x18] sm:$0xff]
      %v2632 = vld [vmem:[%s6 + $0x20] sm:$0xff]
      %v2633 = vld [vmem:[%s6 + $0x28] sm:$0xff]
      %v2634 = vld [vmem:[%s6 + $0x30] sm:$0xff]
      %v2635 = vld [vmem:[%s6 + $0x38] sm:$0xff]
      %v2636 = vld [vmem:[%s6 + $0x40] sm:$0xff]
      %v2637 = vld [vmem:[%s6 + $0x48] sm:$0xff]
      %v2638 = vld [vmem:[%s6 + $0x50] sm:$0xff]
      %v2639 = vld [vmem:[%s6 + $0x58] sm:$0xff]
      %s2640 = scalar_lea.vmem %s6, 96
      %v2641 = vld [vmem:[%s2640] sm:$0xff]
      %v2642 = vld [vmem:[%s2640 + $0x8] sm:$0xff]
      %v2643 = vld [vmem:[%s2640 + $0x10] sm:$0xff]
      %v2644 = vld [vmem:[%s2640 + $0x18] sm:$0xff]
      %v2645 = vld [vmem:[%s2640 + $0x20] sm:$0xff]
      %v2646 = vld [vmem:[%s2640 + $0x28] sm:$0xff]
      %v2647 = vld [vmem:[%s2640 + $0x30] sm:$0xff]
      %v2648 = vld [vmem:[%s2640 + $0x38] sm:$0xff]
      %v2649 = vld [vmem:[%s2640 + $0x40] sm:$0xff]
      %v2650 = vld [vmem:[%s2640 + $0x48] sm:$0xff]
      %v2651 = vld [vmem:[%s2640 + $0x50] sm:$0xff]
      %v2652 = vld [vmem:[%s2640 + $0x58] sm:$0xff]
      %v2654 = vrot.slane %v2627, 1
      %vm2655 = vcmask 785408
      %v2656 = vsel %vm2655, %v2654, 0
      %2658 = vmatprep.subr.mxu0 0.0
      %2659 = vmatpush1.msra.mxu0 0.0
      %2660 = vmatprep.subr.mxu0 0.0
      %2661 = vmatpush1.msra.mxu0 0.0
      %2662 = vmatprep.subr.mxu0 0.0
      %2663 = vmatpush1.msra.mxu0 0.0
      %2664 = vmatprep.subr.mxu0 0.0
      %2665 = vmatpush1.msra.mxu0 0.0
      %2666 = vmatprep.subr.mxu0 0.0
      %2667 = vmatpush1.msra.mxu0 %v2652
      %2668 = vmatprep.subr.mxu0 0.0
      %2669 = vmatpush1.msra.mxu0 %v2651
      %2670 = vmatprep.subr.mxu0 0.0
      %2671 = vmatpush1.msra.mxu0 %v2650
      %2672 = vmatprep.subr.mxu0 0.0
      %2673 = vmatpush1.msra.mxu0 %v2649
      %2674 = vmatprep.subr.mxu0 0.0
      %2675 = vmatpush1.msra.mxu0 %v2648
      %2676 = vmatprep.subr.mxu0 0.0
      %2677 = vmatpush1.msra.mxu0 %v2647
      %2678 = vmatprep.subr.mxu0 0.0
      %2679 = vmatpush1.msra.mxu0 %v2646
      %2680 = vmatprep.subr.mxu0 0.0
      %2681 = vmatpush1.msra.mxu0 %v2645
      %2682 = vmatprep.subr.mxu0 0.0
      %2683 = vmatpush1.msra.mxu0 %v2644
      %2684 = vmatprep.subr.mxu0 0.0
      %2685 = vmatpush1.msra.mxu0 %v2643
      %2686 = vmatprep.subr.mxu0 0.0
      %2687 = vmatpush1.msra.mxu0 %v2642
      %2688 = vmatprep.subr.mxu0 0.0
      %2689 = vmatpush1.msra.mxu0 %v2641
      %2690 = vmatprep.subr.mxu0 0.0
      %2691 = vmatpush2.msra.mxu0 0.0
      %2692 = vmatprep.subr.mxu0 0.0
      %2693 = vmatpush2.msra.mxu0 0.0
      %2694 = vmatprep.subr.mxu0 0.0
      %2695 = vmatpush2.msra.mxu0 0.0
      %2696 = vmatprep.subr.mxu0 0.0
      %2697 = vmatpush2.msra.mxu0 0.0
      %2698 = vmatprep.subr.mxu0 0.0
      %2699 = vmatpush2.msra.mxu0 0.0
      %2700 = vmatprep.subr.mxu0 0.0
      %2701 = vmatpush2.msra.mxu0 0.0
      %2702 = vmatprep.subr.mxu0 0.0
      %2703 = vmatpush2.msra.mxu0 0.0
      %2704 = vmatprep.subr.mxu0 0.0
      %2705 = vmatpush2.msra.mxu0 0.0
      %2706 = vmatprep.subr.mxu0 0.0
      %2707 = vmatpush2.msra.mxu0 0.0
      %2708 = vmatprep.subr.mxu0 0.0
      %2709 = vmatpush2.msra.mxu0 0.0
      %2710 = vmatprep.subr.mxu0 0.0
      %2711 = vmatpush2.msra.mxu0 0.0
      %2712 = vmatprep.subr.mxu0 0.0
      %2713 = vmatpush2.msra.mxu0 0.0
      %2714 = vmatprep.subr.mxu0 0.0
      %2715 = vmatpush2.msra.mxu0 0.0
      %2716 = vmatprep.subr.mxu0 0.0
      %2717 = vmatpush2.msra.mxu0 0.0
      %2718 = vmatprep.subr.mxu0 0.0
      %2719 = vmatpush2.msra.mxu0 0.0
      %2720 = vmatprep.subr.mxu0 0.0
      %2721 = vmatpush2.msra.mxu0 0.0
      %2722 = vmatprep.mubr.f32.mxu0 0.0
      %2723 = vmatmul.mubr.f32.gmra.mxu0 %v2656
      %v2724 = vpop.f32.mrf.mxu0
      %v2725 = vadd.f32 0.0, %v2724
      %v2726 = vpop.f32.mrf.mxu0
      %2727 = vdwg.mxu0
      %v2728 = vsel %vm2655, %v2627, 0
      %2730 = vmatprep.subr.mxu0 0.0
      %2731 = vmatpush1.msra.mxu0 0.0
      %2732 = vmatprep.subr.mxu0 0.0
      %2733 = vmatpush1.msra.mxu0 0.0
      %2734 = vmatprep.subr.mxu0 0.0
      %2735 = vmatpush1.msra.mxu0 0.0
      %2736 = vmatprep.subr.mxu0 0.0
      %2737 = vmatpush1.msra.mxu0 0.0
      %2738 = vmatprep.subr.mxu0 0.0
      %2739 = vmatpush1.msra.mxu0 %v2639
      %2740 = vmatprep.subr.mxu0 0.0
      %2741 = vmatpush1.msra.mxu0 %v2638
      %2742 = vmatprep.subr.mxu0 0.0
      %2743 = vmatpush1.msra.mxu0 %v2637
      %2744 = vmatprep.subr.mxu0 0.0
      %2745 = vmatpush1.msra.mxu0 %v2636
      %2746 = vmatprep.subr.mxu0 0.0
      %2747 = vmatpush1.msra.mxu0 %v2635
      %2748 = vmatprep.subr.mxu0 0.0
      %2749 = vmatpush1.msra.mxu0 %v2634
      %2750 = vmatprep.subr.mxu0 0.0
      %2751 = vmatpush1.msra.mxu0 %v2633
      %2752 = vmatprep.subr.mxu0 0.0
      %2753 = vmatpush1.msra.mxu0 %v2632
      %2754 = vmatprep.subr.mxu0 0.0
      %2755 = vmatpush1.msra.mxu0 %v2631
      %2756 = vmatprep.subr.mxu0 0.0
      %2757 = vmatpush1.msra.mxu0 %v2630
      %2758 = vmatprep.subr.mxu0 0.0
      %2759 = vmatpush1.msra.mxu0 %v2629
      %2760 = vmatprep.subr.mxu0 0.0
      %2761 = vmatpush1.msra.mxu0 %v2628
      %2762 = vmatprep.subr.mxu0 0.0
      %2763 = vmatpush2.msra.mxu0 0.0
      %2764 = vmatprep.subr.mxu0 0.0
      %2765 = vmatpush2.msra.mxu0 0.0
      %2766 = vmatprep.subr.mxu0 0.0
      %2767 = vmatpush2.msra.mxu0 0.0
      %2768 = vmatprep.subr.mxu0 0.0
      %2769 = vmatpush2.msra.mxu0 0.0
      %2770 = vmatprep.subr.mxu0 0.0
      %2771 = vmatpush2.msra.mxu0 0.0
      %2772 = vmatprep.subr.mxu0 0.0
      %2773 = vmatpush2.msra.mxu0 0.0
      %2774 = vmatprep.subr.mxu0 0.0
      %2775 = vmatpush2.msra.mxu0 0.0
      %2776 = vmatprep.subr.mxu0 0.0
      %2777 = vmatpush2.msra.mxu0 0.0
      %2778 = vmatprep.subr.mxu0 0.0
      %2779 = vmatpush2.msra.mxu0 0.0
      %2780 = vmatprep.subr.mxu0 0.0
      %2781 = vmatpush2.msra.mxu0 0.0
      %2782 = vmatprep.subr.mxu0 0.0
      %2783 = vmatpush2.msra.mxu0 0.0
      %2784 = vmatprep.subr.mxu0 0.0
      %2785 = vmatpush2.msra.mxu0 0.0
      %2786 = vmatprep.subr.mxu0 0.0
      %2787 = vmatpush2.msra.mxu0 0.0
      %2788 = vmatprep.subr.mxu0 0.0
      %2789 = vmatpush2.msra.mxu0 0.0
      %2790 = vmatprep.subr.mxu0 0.0
      %2791 = vmatpush2.msra.mxu0 0.0
      %2792 = vmatprep.subr.mxu0 0.0
      %2793 = vmatpush2.msra.mxu0 0.0
      %2794 = vmatprep.mubr.f32.mxu0 0.0
      %2795 = vmatmul.mubr.f32.gmra.mxu0 %v2728
      %v2796 = vpop.f32.mrf.mxu0
      %v2797 = vadd.f32 %v2725, %v2796
      %v2798 = vpop.f32.mrf.mxu0
      %2799 = vdwg.mxu0
      %s2800 = scalar_lea.vmem %s6, 192
      %v2801 = vld [vmem:[%s2800] sm:$0xff]
      %v2802 = vld [vmem:[%s2800 + $0x8] sm:$0xff]
      %v2803 = vld [vmem:[%s2800 + $0x10] sm:$0xff]
      %v2804 = vld [vmem:[%s2800 + $0x18] sm:$0xff]
      %v2805 = vld [vmem:[%s2800 + $0x20] sm:$0xff]
      %v2806 = vld [vmem:[%s2800 + $0x28] sm:$0xff]
      %v2807 = vld [vmem:[%s2800 + $0x30] sm:$0xff]
      %v2808 = vld [vmem:[%s2800 + $0x38] sm:$0xff]
      %v2809 = vld [vmem:[%s2800 + $0x40] sm:$0xff]
      %v2810 = vld [vmem:[%s2800 + $0x48] sm:$0xff]
      %v2811 = vld [vmem:[%s2800 + $0x50] sm:$0xff]
      %v2812 = vld [vmem:[%s2800 + $0x58] sm:$0xff]
      %v2813 = vrot.slane %v2627, 2
      %v2814 = vsel %vm2655, %v2813, 0
      %2816 = vmatprep.subr.mxu0 0.0
      %2817 = vmatpush1.msra.mxu0 0.0
      %2818 = vmatprep.subr.mxu0 0.0
      %2819 = vmatpush1.msra.mxu0 0.0
      %2820 = vmatprep.subr.mxu0 0.0
      %2821 = vmatpush1.msra.mxu0 0.0
      %2822 = vmatprep.subr.mxu0 0.0
      %2823 = vmatpush1.msra.mxu0 0.0
      %2824 = vmatprep.subr.mxu0 0.0
      %2825 = vmatpush1.msra.mxu0 %v2812
      %2826 = vmatprep.subr.mxu0 0.0
      %2827 = vmatpush1.msra.mxu0 %v2811
      %2828 = vmatprep.subr.mxu0 0.0
      %2829 = vmatpush1.msra.mxu0 %v2810
      %2830 = vmatprep.subr.mxu0 0.0
      %2831 = vmatpush1.msra.mxu0 %v2809
      %2832 = vmatprep.subr.mxu0 0.0
      %2833 = vmatpush1.msra.mxu0 %v2808
      %2834 = vmatprep.subr.mxu0 0.0
      %2835 = vmatpush1.msra.mxu0 %v2807
      %2836 = vmatprep.subr.mxu0 0.0
      %2837 = vmatpush1.msra.mxu0 %v2806
      %2838 = vmatprep.subr.mxu0 0.0
      %2839 = vmatpush1.msra.mxu0 %v2805
      %2840 = vmatprep.subr.mxu0 0.0
      %2841 = vmatpush1.msra.mxu0 %v2804
      %2842 = vmatprep.subr.mxu0 0.0
      %2843 = vmatpush1.msra.mxu0 %v2803
      %2844 = vmatprep.subr.mxu0 0.0
      %2845 = vmatpush1.msra.mxu0 %v2802
      %2846 = vmatprep.subr.mxu0 0.0
      %2847 = vmatpush1.msra.mxu0 %v2801
      %2848 = vmatprep.subr.mxu0 0.0
      %2849 = vmatpush2.msra.mxu0 0.0
      %2850 = vmatprep.subr.mxu0 0.0
      %2851 = vmatpush2.msra.mxu0 0.0
      %2852 = vmatprep.subr.mxu0 0.0
      %2853 = vmatpush2.msra.mxu0 0.0
      %2854 = vmatprep.subr.mxu0 0.0
      %2855 = vmatpush2.msra.mxu0 0.0
      %2856 = vmatprep.subr.mxu0 0.0
      %2857 = vmatpush2.msra.mxu0 0.0
      %2858 = vmatprep.subr.mxu0 0.0
      %2859 = vmatpush2.msra.mxu0 0.0
      %2860 = vmatprep.subr.mxu0 0.0
      %2861 = vmatpush2.msra.mxu0 0.0
      %2862 = vmatprep.subr.mxu0 0.0
      %2863 = vmatpush2.msra.mxu0 0.0
      %2864 = vmatprep.subr.mxu0 0.0
      %2865 = vmatpush2.msra.mxu0 0.0
      %2866 = vmatprep.subr.mxu0 0.0
      %2867 = vmatpush2.msra.mxu0 0.0
      %2868 = vmatprep.subr.mxu0 0.0
      %2869 = vmatpush2.msra.mxu0 0.0
      %2870 = vmatprep.subr.mxu0 0.0
      %2871 = vmatpush2.msra.mxu0 0.0
      %2872 = vmatprep.subr.mxu0 0.0
      %2873 = vmatpush2.msra.mxu0 0.0
      %2874 = vmatprep.subr.mxu0 0.0
      %2875 = vmatpush2.msra.mxu0 0.0
      %2876 = vmatprep.subr.mxu0 0.0
      %2877 = vmatpush2.msra.mxu0 0.0
      %2878 = vmatprep.subr.mxu0 0.0
      %2879 = vmatpush2.msra.mxu0 0.0
      %2880 = vmatprep.mubr.f32.mxu0 0.0
      %2881 = vmatmul.mubr.f32.gmra.mxu0 %v2814
      %v2882 = vpop.f32.mrf.mxu0
      %v2883 = vadd.f32 0.0, %v2882
      %v2884 = vpop.f32.mrf.mxu0
      %2885 = vdwg.mxu0
      %v2886 = vadd.f32 %v2797, %v2883
      %v2888 = vrot.slane %v362, 3
      %v2890 = vadd.f32 %v2886, %v2888
      %s2891 = scalar_lea.vmem [#allocation2], %s21
      %vm2892 = vcmask 122880
      %2893 = vst.msk [vmem:[%s2891] sm:$0x1] %vm2892, %v2890
      %p2894 = scmp.eq.s32.totalorder %s21, 5
      // Predicated region
      $region61: #{cnn_lstm_forward.1} parent=59 // pred_check
        %p2895 = pneg %p2894
      $region62: #{cnn_lstm_forward.1} parent=59 // pred_check_branch
        %2897 = sbr.rel (%p2895) target = $region64
      $region63: #{cnn_lstm_forward.1} parent=59 // pred_region
        %v2898 = vld [vmem:[#allocation2] sm:$0x1]
        %v2899 = vld [vmem:[#allocation2 + $0x1] sm:$0x1]
        %v2900 = vld [vmem:[#allocation2 + $0x2] sm:$0x1]
        %v2901 = vld [vmem:[#allocation2 + $0x3] sm:$0x1]
        %v2902 = vld [vmem:[#allocation2 + $0x4] sm:$0x1]
        %v2903 = vld [vmem:[#allocation2 + $0x5] sm:$0x1]
        %v2904 = vld [vmem:[%s7] sm:$0xff]
        %v2905 = vld [vmem:[%s7 + $0x8] sm:$0xff]
        %v2906 = vlaneseq
        %v2907 = vshrl.u32 %v2906, 7
        %v2908 = vsub.s32 4, %v2907
        %v2909 = vrot.slane %v362, %v2908
        %v2912 = vcombine.low %v2898, %v2899
        %v2914 = vunpack.c.l.s4 1966171168
        %v2915 = vunpack.c.0.s8 %v2914
        %v2916 = vlaneseq
        %v2917 = vshrl.u32 %v2916, 7
        %v2918 = vsub.s32 %v2915, %v2917
        %v2919 = vrot.slane %v2912, %v2918
        %v2921 = vunpack.c.l.s4 1966171168
        %v2922 = vunpack.c.0.s8 %v2921
        %v2923 = vlaneseq
        %v2924 = vshrl.u32 %v2923, 7
        %v2925 = vsub.s32 %v2922, %v2924
        %v2926 = vrot.slane %v2919, %v2925
        %vm2927 = vcmask 130048
        %v2928 = vsel %vm2927, %v2926, 0
        %2930 = vmatprep.subr.mxu0 0.0
        %2931 = vmatpush1.msra.mxu0 0.0
        %2932 = vmatprep.subr.mxu0 0.0
        %2933 = vmatpush1.msra.mxu0 0.0
        %2934 = vmatprep.subr.mxu0 0.0
        %2935 = vmatpush1.msra.mxu0 0.0
        %2936 = vmatprep.subr.mxu0 0.0
        %2937 = vmatpush1.msra.mxu0 0.0
        %2938 = vmatprep.subr.mxu0 0.0
        %2939 = vmatpush1.msra.mxu0 0.0
        %2940 = vmatprep.subr.mxu0 0.0
        %2941 = vmatpush1.msra.mxu0 0.0
        %2942 = vmatprep.subr.mxu0 0.0
        %2943 = vmatpush1.msra.mxu0 0.0
        %2944 = vmatprep.subr.mxu0 0.0
        %2945 = vmatpush1.msra.mxu0 0.0
        %2946 = vmatprep.subr.mxu0 0.0
        %2947 = vmatpush1.msra.mxu0 0.0
        %2948 = vmatprep.subr.mxu0 0.0
        %2949 = vmatpush1.msra.mxu0 0.0
        %2950 = vmatprep.subr.mxu0 0.0
        %2951 = vmatpush1.msra.mxu0 0.0
        %2952 = vmatprep.subr.mxu0 0.0
        %2953 = vmatpush1.msra.mxu0 0.0
        %2954 = vmatprep.subr.mxu0 0.0
        %2955 = vmatpush1.msra.mxu0 0.0
        %2956 = vmatprep.subr.mxu0 0.0
        %2957 = vmatpush1.msra.mxu0 0.0
        %2958 = vmatprep.subr.mxu0 0.0
        %2959 = vmatpush1.msra.mxu0 %v2905
        %2960 = vmatprep.subr.mxu0 0.0
        %2961 = vmatpush1.msra.mxu0 %v2904
        %2962 = vmatprep.subr.mxu0 0.0
        %2963 = vmatpush2.msra.mxu0 0.0
        %2964 = vmatprep.subr.mxu0 0.0
        %2965 = vmatpush2.msra.mxu0 0.0
        %2966 = vmatprep.subr.mxu0 0.0
        %2967 = vmatpush2.msra.mxu0 0.0
        %2968 = vmatprep.subr.mxu0 0.0
        %2969 = vmatpush2.msra.mxu0 0.0
        %2970 = vmatprep.subr.mxu0 0.0
        %2971 = vmatpush2.msra.mxu0 0.0
        %2972 = vmatprep.subr.mxu0 0.0
        %2973 = vmatpush2.msra.mxu0 0.0
        %2974 = vmatprep.subr.mxu0 0.0
        %2975 = vmatpush2.msra.mxu0 0.0
        %2976 = vmatprep.subr.mxu0 0.0
        %2977 = vmatpush2.msra.mxu0 0.0
        %2978 = vmatprep.subr.mxu0 0.0
        %2979 = vmatpush2.msra.mxu0 0.0
        %2980 = vmatprep.subr.mxu0 0.0
        %2981 = vmatpush2.msra.mxu0 0.0
        %2982 = vmatprep.subr.mxu0 0.0
        %2983 = vmatpush2.msra.mxu0 0.0
        %2984 = vmatprep.subr.mxu0 0.0
        %2985 = vmatpush2.msra.mxu0 0.0
        %2986 = vmatprep.subr.mxu0 0.0
        %2987 = vmatpush2.msra.mxu0 0.0
        %2988 = vmatprep.subr.mxu0 0.0
        %2989 = vmatpush2.msra.mxu0 0.0
        %2990 = vmatprep.subr.mxu0 0.0
        %2991 = vmatpush2.msra.mxu0 0.0
        %2992 = vmatprep.subr.mxu0 0.0
        %2993 = vmatpush2.msra.mxu0 0.0
        %2994 = vmatprep.mubr.f32.mxu0 0.0
        %2995 = vmatmul.mubr.f32.gmra.mxu0 %v2928
        %v2996 = vpop.f32.mrf.mxu0
        %v2997 = vadd.f32 %v2909, %v2996
        %v2998 = vpop.f32.mrf.mxu0
        %2999 = vdwg.mxu0
        %v3002 = vcombine.low %v2900, %v2901
        %v3004 = vunpack.c.l.s4 1966171168
        %v3005 = vunpack.c.0.s8 %v3004
        %v3006 = vlaneseq
        %v3007 = vshrl.u32 %v3006, 7
        %v3008 = vsub.s32 %v3005, %v3007
        %v3009 = vrot.slane %v3002, %v3008
        %v3011 = vunpack.c.l.s4 1966171168
        %v3012 = vunpack.c.0.s8 %v3011
        %v3013 = vlaneseq
        %v3014 = vshrl.u32 %v3013, 7
        %v3015 = vsub.s32 %v3012, %v3014
        %v3016 = vrot.slane %v3009, %v3015
        %v3017 = vsel %vm2927, %v3016, 0
        %3019 = vmatprep.subr.mxu0 0.0
        %3020 = vmatpush1.msra.mxu0 0.0
        %3021 = vmatprep.subr.mxu0 0.0
        %3022 = vmatpush1.msra.mxu0 0.0
        %3023 = vmatprep.subr.mxu0 0.0
        %3024 = vmatpush1.msra.mxu0 0.0
        %3025 = vmatprep.subr.mxu0 0.0
        %3026 = vmatpush1.msra.mxu0 0.0
        %3027 = vmatprep.subr.mxu0 0.0
        %3028 = vmatpush1.msra.mxu0 0.0
        %3029 = vmatprep.subr.mxu0 0.0
        %3030 = vmatpush1.msra.mxu0 0.0
        %3031 = vmatprep.subr.mxu0 0.0
        %3032 = vmatpush1.msra.mxu0 0.0
        %3033 = vmatprep.subr.mxu0 0.0
        %3034 = vmatpush1.msra.mxu0 0.0
        %3035 = vmatprep.subr.mxu0 0.0
        %3036 = vmatpush1.msra.mxu0 0.0
        %3037 = vmatprep.subr.mxu0 0.0
        %3038 = vmatpush1.msra.mxu0 0.0
        %3039 = vmatprep.subr.mxu0 0.0
        %3040 = vmatpush1.msra.mxu0 0.0
        %3041 = vmatprep.subr.mxu0 0.0
        %3042 = vmatpush1.msra.mxu0 0.0
        %3043 = vmatprep.subr.mxu0 0.0
        %3044 = vmatpush1.msra.mxu0 0.0
        %3045 = vmatprep.subr.mxu0 0.0
        %3046 = vmatpush1.msra.mxu0 0.0
        %3047 = vmatprep.subr.mxu0 0.0
        %3048 = vmatpush1.msra.mxu0 %v2905
        %3049 = vmatprep.subr.mxu0 0.0
        %3050 = vmatpush1.msra.mxu0 %v2904
        %3051 = vmatprep.subr.mxu0 0.0
        %3052 = vmatpush2.msra.mxu0 0.0
        %3053 = vmatprep.subr.mxu0 0.0
        %3054 = vmatpush2.msra.mxu0 0.0
        %3055 = vmatprep.subr.mxu0 0.0
        %3056 = vmatpush2.msra.mxu0 0.0
        %3057 = vmatprep.subr.mxu0 0.0
        %3058 = vmatpush2.msra.mxu0 0.0
        %3059 = vmatprep.subr.mxu0 0.0
        %3060 = vmatpush2.msra.mxu0 0.0
        %3061 = vmatprep.subr.mxu0 0.0
        %3062 = vmatpush2.msra.mxu0 0.0
        %3063 = vmatprep.subr.mxu0 0.0
        %3064 = vmatpush2.msra.mxu0 0.0
        %3065 = vmatprep.subr.mxu0 0.0
        %3066 = vmatpush2.msra.mxu0 0.0
        %3067 = vmatprep.subr.mxu0 0.0
        %3068 = vmatpush2.msra.mxu0 0.0
        %3069 = vmatprep.subr.mxu0 0.0
        %3070 = vmatpush2.msra.mxu0 0.0
        %3071 = vmatprep.subr.mxu0 0.0
        %3072 = vmatpush2.msra.mxu0 0.0
        %3073 = vmatprep.subr.mxu0 0.0
        %3074 = vmatpush2.msra.mxu0 0.0
        %3075 = vmatprep.subr.mxu0 0.0
        %3076 = vmatpush2.msra.mxu0 0.0
        %3077 = vmatprep.subr.mxu0 0.0
        %3078 = vmatpush2.msra.mxu0 0.0
        %3079 = vmatprep.subr.mxu0 0.0
        %3080 = vmatpush2.msra.mxu0 0.0
        %3081 = vmatprep.subr.mxu0 0.0
        %3082 = vmatpush2.msra.mxu0 0.0
        %3083 = vmatprep.mubr.f32.mxu0 0.0
        %3084 = vmatmul.mubr.f32.gmra.mxu0 %v3017
        %v3085 = vpop.f32.mrf.mxu0
        %v3086 = vadd.f32 %v2909, %v3085
        %v3087 = vpop.f32.mrf.mxu0
        %3088 = vdwg.mxu0
        %v3091 = vcombine.low %v2902, %v2903
        %v3093 = vunpack.c.l.s4 1966171168
        %v3094 = vunpack.c.0.s8 %v3093
        %v3095 = vlaneseq
        %v3096 = vshrl.u32 %v3095, 7
        %v3097 = vsub.s32 %v3094, %v3096
        %v3098 = vrot.slane %v3091, %v3097
        %v3100 = vunpack.c.l.s4 1966171168
        %v3101 = vunpack.c.0.s8 %v3100
        %v3102 = vlaneseq
        %v3103 = vshrl.u32 %v3102, 7
        %v3104 = vsub.s32 %v3101, %v3103
        %v3105 = vrot.slane %v3098, %v3104
        %v3106 = vsel %vm2927, %v3105, 0
        %3108 = vmatprep.subr.mxu0 0.0
        %3109 = vmatpush1.msra.mxu0 0.0
        %3110 = vmatprep.subr.mxu0 0.0
        %3111 = vmatpush1.msra.mxu0 0.0
        %3112 = vmatprep.subr.mxu0 0.0
        %3113 = vmatpush1.msra.mxu0 0.0
        %3114 = vmatprep.subr.mxu0 0.0
        %3115 = vmatpush1.msra.mxu0 0.0
        %3116 = vmatprep.subr.mxu0 0.0
        %3117 = vmatpush1.msra.mxu0 0.0
        %3118 = vmatprep.subr.mxu0 0.0
        %3119 = vmatpush1.msra.mxu0 0.0
        %3120 = vmatprep.subr.mxu0 0.0
        %3121 = vmatpush1.msra.mxu0 0.0
        %3122 = vmatprep.subr.mxu0 0.0
        %3123 = vmatpush1.msra.mxu0 0.0
        %3124 = vmatprep.subr.mxu0 0.0
        %3125 = vmatpush1.msra.mxu0 0.0
        %3126 = vmatprep.subr.mxu0 0.0
        %3127 = vmatpush1.msra.mxu0 0.0
        %3128 = vmatprep.subr.mxu0 0.0
        %3129 = vmatpush1.msra.mxu0 0.0
        %3130 = vmatprep.subr.mxu0 0.0
        %3131 = vmatpush1.msra.mxu0 0.0
        %3132 = vmatprep.subr.mxu0 0.0
        %3133 = vmatpush1.msra.mxu0 0.0
        %3134 = vmatprep.subr.mxu0 0.0
        %3135 = vmatpush1.msra.mxu0 0.0
        %3136 = vmatprep.subr.mxu0 0.0
        %3137 = vmatpush1.msra.mxu0 %v2905
        %3138 = vmatprep.subr.mxu0 0.0
        %3139 = vmatpush1.msra.mxu0 %v2904
        %3140 = vmatprep.subr.mxu0 0.0
        %3141 = vmatpush2.msra.mxu0 0.0
        %3142 = vmatprep.subr.mxu0 0.0
        %3143 = vmatpush2.msra.mxu0 0.0
        %3144 = vmatprep.subr.mxu0 0.0
        %3145 = vmatpush2.msra.mxu0 0.0
        %3146 = vmatprep.subr.mxu0 0.0
        %3147 = vmatpush2.msra.mxu0 0.0
        %3148 = vmatprep.subr.mxu0 0.0
        %3149 = vmatpush2.msra.mxu0 0.0
        %3150 = vmatprep.subr.mxu0 0.0
        %3151 = vmatpush2.msra.mxu0 0.0
        %3152 = vmatprep.subr.mxu0 0.0
        %3153 = vmatpush2.msra.mxu0 0.0
        %3154 = vmatprep.subr.mxu0 0.0
        %3155 = vmatpush2.msra.mxu0 0.0
        %3156 = vmatprep.subr.mxu0 0.0
        %3157 = vmatpush2.msra.mxu0 0.0
        %3158 = vmatprep.subr.mxu0 0.0
        %3159 = vmatpush2.msra.mxu0 0.0
        %3160 = vmatprep.subr.mxu0 0.0
        %3161 = vmatpush2.msra.mxu0 0.0
        %3162 = vmatprep.subr.mxu0 0.0
        %3163 = vmatpush2.msra.mxu0 0.0
        %3164 = vmatprep.subr.mxu0 0.0
        %3165 = vmatpush2.msra.mxu0 0.0
        %3166 = vmatprep.subr.mxu0 0.0
        %3167 = vmatpush2.msra.mxu0 0.0
        %3168 = vmatprep.subr.mxu0 0.0
        %3169 = vmatpush2.msra.mxu0 0.0
        %3170 = vmatprep.subr.mxu0 0.0
        %3171 = vmatpush2.msra.mxu0 0.0
        %3172 = vmatprep.mubr.f32.mxu0 0.0
        %3173 = vmatmul.mubr.f32.gmra.mxu0 %v3106
        %v3174 = vpop.f32.mrf.mxu0
        %v3175 = vadd.f32 %v2909, %v3174
        %v3176 = vpop.f32.mrf.mxu0
        %3177 = vdwg.mxu0
        %v3178 = vld [vmem:[%s8] sm:$0xff]
        %v3179 = vld [vmem:[%s8 + $0x8] sm:$0xff]
        %vm3180 = vcmask 64512
        %v3182 = vsel %vm3180, 0.0, 0
        %3184 = vmatprep.subr.mxu0 0.0
        %3185 = vmatpush1.msra.mxu0 0.0
        %3186 = vmatprep.subr.mxu0 0.0
        %3187 = vmatpush1.msra.mxu0 0.0
        %3188 = vmatprep.subr.mxu0 0.0
        %3189 = vmatpush1.msra.mxu0 0.0
        %3190 = vmatprep.subr.mxu0 0.0
        %3191 = vmatpush1.msra.mxu0 0.0
        %3192 = vmatprep.subr.mxu0 0.0
        %3193 = vmatpush1.msra.mxu0 0.0
        %3194 = vmatprep.subr.mxu0 0.0
        %3195 = vmatpush1.msra.mxu0 0.0
        %3196 = vmatprep.subr.mxu0 0.0
        %3197 = vmatpush1.msra.mxu0 0.0
        %3198 = vmatprep.subr.mxu0 0.0
        %3199 = vmatpush1.msra.mxu0 0.0
        %3200 = vmatprep.subr.mxu0 0.0
        %3201 = vmatpush1.msra.mxu0 0.0
        %3202 = vmatprep.subr.mxu0 0.0
        %3203 = vmatpush1.msra.mxu0 0.0
        %3204 = vmatprep.subr.mxu0 0.0
        %3205 = vmatpush1.msra.mxu0 0.0
        %3206 = vmatprep.subr.mxu0 0.0
        %3207 = vmatpush1.msra.mxu0 0.0
        %3208 = vmatprep.subr.mxu0 0.0
        %3209 = vmatpush1.msra.mxu0 0.0
        %3210 = vmatprep.subr.mxu0 0.0
        %3211 = vmatpush1.msra.mxu0 0.0
        %3212 = vmatprep.subr.mxu0 0.0
        %3213 = vmatpush1.msra.mxu0 0.0
        %3214 = vmatprep.subr.mxu0 0.0
        %3215 = vmatpush1.msra.mxu0 %v3178
        %3216 = vmatprep.subr.mxu0 0.0
        %3217 = vmatpush2.msra.mxu0 0.0
        %3218 = vmatprep.subr.mxu0 0.0
        %3219 = vmatpush2.msra.mxu0 0.0
        %3220 = vmatprep.subr.mxu0 0.0
        %3221 = vmatpush2.msra.mxu0 0.0
        %3222 = vmatprep.subr.mxu0 0.0
        %3223 = vmatpush2.msra.mxu0 0.0
        %3224 = vmatprep.subr.mxu0 0.0
        %3225 = vmatpush2.msra.mxu0 0.0
        %3226 = vmatprep.subr.mxu0 0.0
        %3227 = vmatpush2.msra.mxu0 0.0
        %3228 = vmatprep.subr.mxu0 0.0
        %3229 = vmatpush2.msra.mxu0 0.0
        %3230 = vmatprep.subr.mxu0 0.0
        %3231 = vmatpush2.msra.mxu0 0.0
        %3232 = vmatprep.subr.mxu0 0.0
        %3233 = vmatpush2.msra.mxu0 0.0
        %3234 = vmatprep.subr.mxu0 0.0
        %3235 = vmatpush2.msra.mxu0 0.0
        %3236 = vmatprep.subr.mxu0 0.0
        %3237 = vmatpush2.msra.mxu0 0.0
        %3238 = vmatprep.subr.mxu0 0.0
        %3239 = vmatpush2.msra.mxu0 0.0
        %3240 = vmatprep.subr.mxu0 0.0
        %3241 = vmatpush2.msra.mxu0 0.0
        %3242 = vmatprep.subr.mxu0 0.0
        %3243 = vmatpush2.msra.mxu0 0.0
        %3244 = vmatprep.subr.mxu0 0.0
        %3245 = vmatpush2.msra.mxu0 0.0
        %3246 = vmatprep.subr.mxu0 0.0
        %3247 = vmatpush2.msra.mxu0 0.0
        %3248 = vmatprep.mubr.f32.mxu0 0.0
        %3249 = vmatmul.mubr.f32.gmra.mxu0 %v3182
        %v3250 = vpop.f32.mrf.mxu0
        %v3251 = vadd.f32 0.0, %v3250
        %v3252 = vpop.f32.mrf.mxu0
        %3253 = vdwg.mxu0
        %v3254 = vadd.f32 %v2997, %v3251
        %v3255 = vmul.f32 %v3254, 0.5
        %v3256 = vtanh.pop %v3255
        %v3257 = vadd.f32 %v3256, 1.0
        %v3258 = vmul.f32 %v3257, 0.5
        %v3259 = vtanh.pop %v3254
        %v3260 = vmul.f32 %v3258, 0.0
        %3262 = vrot.lane.b32.xlu0 %v3259, 112
        %v3263 = vpop.permute.xlu0 %3262
        %v3265 = vmul.f32 %v3258, %v3263
        %3267 = vrot.lane.b32.xlu0 %v3265, 8
        %v3268 = vpop.permute.xlu0 %3267
        %v3270 = vadd.f32 %v3260, %v3268
        %v3271 = vtanh.pop %v3270
        %3273 = vrot.lane.b32.xlu0 %v3271, 16
        %v3274 = vpop.permute.xlu0 %3273
        %v3276 = vmul.f32 %v3258, %v3274
        %3278 = vrot.lane.b32.xlu0 %v3276, 104
        %v3279 = vpop.permute.xlu0 %3278
        %v3280 = vsel %vm3180, %v3279, 0
        %3282 = vmatprep.subr.mxu0 0.0
        %3283 = vmatpush1.msra.mxu0 0.0
        %3284 = vmatprep.subr.mxu0 0.0
        %3285 = vmatpush1.msra.mxu0 0.0
        %3286 = vmatprep.subr.mxu0 0.0
        %3287 = vmatpush1.msra.mxu0 0.0
        %3288 = vmatprep.subr.mxu0 0.0
        %3289 = vmatpush1.msra.mxu0 0.0
        %3290 = vmatprep.subr.mxu0 0.0
        %3291 = vmatpush1.msra.mxu0 0.0
        %3292 = vmatprep.subr.mxu0 0.0
        %3293 = vmatpush1.msra.mxu0 0.0
        %3294 = vmatprep.subr.mxu0 0.0
        %3295 = vmatpush1.msra.mxu0 0.0
        %3296 = vmatprep.subr.mxu0 0.0
        %3297 = vmatpush1.msra.mxu0 0.0
        %3298 = vmatprep.subr.mxu0 0.0
        %3299 = vmatpush1.msra.mxu0 0.0
        %3300 = vmatprep.subr.mxu0 0.0
        %3301 = vmatpush1.msra.mxu0 0.0
        %3302 = vmatprep.subr.mxu0 0.0
        %3303 = vmatpush1.msra.mxu0 0.0
        %3304 = vmatprep.subr.mxu0 0.0
        %3305 = vmatpush1.msra.mxu0 0.0
        %3306 = vmatprep.subr.mxu0 0.0
        %3307 = vmatpush1.msra.mxu0 0.0
        %3308 = vmatprep.subr.mxu0 0.0
        %3309 = vmatpush1.msra.mxu0 0.0
        %3310 = vmatprep.subr.mxu0 0.0
        %3311 = vmatpush1.msra.mxu0 0.0
        %3312 = vmatprep.subr.mxu0 0.0
        %3313 = vmatpush1.msra.mxu0 %v3178
        %3314 = vmatprep.subr.mxu0 0.0
        %3315 = vmatpush2.msra.mxu0 0.0
        %3316 = vmatprep.subr.mxu0 0.0
        %3317 = vmatpush2.msra.mxu0 0.0
        %3318 = vmatprep.subr.mxu0 0.0
        %3319 = vmatpush2.msra.mxu0 0.0
        %3320 = vmatprep.subr.mxu0 0.0
        %3321 = vmatpush2.msra.mxu0 0.0
        %3322 = vmatprep.subr.mxu0 0.0
        %3323 = vmatpush2.msra.mxu0 0.0
        %3324 = vmatprep.subr.mxu0 0.0
        %3325 = vmatpush2.msra.mxu0 0.0
        %3326 = vmatprep.subr.mxu0 0.0
        %3327 = vmatpush2.msra.mxu0 0.0
        %3328 = vmatprep.subr.mxu0 0.0
        %3329 = vmatpush2.msra.mxu0 0.0
        %3330 = vmatprep.subr.mxu0 0.0
        %3331 = vmatpush2.msra.mxu0 0.0
        %3332 = vmatprep.subr.mxu0 0.0
        %3333 = vmatpush2.msra.mxu0 0.0
        %3334 = vmatprep.subr.mxu0 0.0
        %3335 = vmatpush2.msra.mxu0 0.0
        %3336 = vmatprep.subr.mxu0 0.0
        %3337 = vmatpush2.msra.mxu0 0.0
        %3338 = vmatprep.subr.mxu0 0.0
        %3339 = vmatpush2.msra.mxu0 0.0
        %3340 = vmatprep.subr.mxu0 0.0
        %3341 = vmatpush2.msra.mxu0 0.0
        %3342 = vmatprep.subr.mxu0 0.0
        %3343 = vmatpush2.msra.mxu0 0.0
        %3344 = vmatprep.subr.mxu0 0.0
        %3345 = vmatpush2.msra.mxu0 0.0
        %3346 = vmatprep.mubr.f32.mxu0 0.0
        %3347 = vmatmul.mubr.f32.gmra.mxu0 %v3280
        %v3348 = vpop.f32.mrf.mxu0
        %v3349 = vadd.f32 0.0, %v3348
        %v3350 = vpop.f32.mrf.mxu0
        %3351 = vdwg.mxu0
        %v3352 = vadd.f32 %v3086, %v3349
        %v3353 = vmul.f32 %v3352, 0.5
        %v3354 = vtanh.pop %v3353
        %v3355 = vadd.f32 %v3354, 1.0
        %v3356 = vmul.f32 %v3355, 0.5
        %v3357 = vtanh.pop %v3352
        %v3358 = vmul.f32 %v3356, %v3270
        %3360 = vrot.lane.b32.xlu0 %v3357, 112
        %v3361 = vpop.permute.xlu0 %3360
        %v3363 = vmul.f32 %v3356, %v3361
        %3365 = vrot.lane.b32.xlu0 %v3363, 8
        %v3366 = vpop.permute.xlu0 %3365
        %v3368 = vadd.f32 %v3358, %v3366
        %v3369 = vtanh.pop %v3368
        %3371 = vrot.lane.b32.xlu0 %v3369, 16
        %v3372 = vpop.permute.xlu0 %3371
        %v3374 = vmul.f32 %v3356, %v3372
        %3376 = vrot.lane.b32.xlu0 %v3374, 104
        %v3377 = vpop.permute.xlu0 %3376
        %v3378 = vsel %vm3180, %v3377, 0
        %3380 = vmatprep.subr.mxu0 0.0
        %3381 = vmatpush1.msra.mxu0 0.0
        %3382 = vmatprep.subr.mxu0 0.0
        %3383 = vmatpush1.msra.mxu0 0.0
        %3384 = vmatprep.subr.mxu0 0.0
        %3385 = vmatpush1.msra.mxu0 0.0
        %3386 = vmatprep.subr.mxu0 0.0
        %3387 = vmatpush1.msra.mxu0 0.0
        %3388 = vmatprep.subr.mxu0 0.0
        %3389 = vmatpush1.msra.mxu0 0.0
        %3390 = vmatprep.subr.mxu0 0.0
        %3391 = vmatpush1.msra.mxu0 0.0
        %3392 = vmatprep.subr.mxu0 0.0
        %3393 = vmatpush1.msra.mxu0 0.0
        %3394 = vmatprep.subr.mxu0 0.0
        %3395 = vmatpush1.msra.mxu0 0.0
        %3396 = vmatprep.subr.mxu0 0.0
        %3397 = vmatpush1.msra.mxu0 0.0
        %3398 = vmatprep.subr.mxu0 0.0
        %3399 = vmatpush1.msra.mxu0 0.0
        %3400 = vmatprep.subr.mxu0 0.0
        %3401 = vmatpush1.msra.mxu0 0.0
        %3402 = vmatprep.subr.mxu0 0.0
        %3403 = vmatpush1.msra.mxu0 0.0
        %3404 = vmatprep.subr.mxu0 0.0
        %3405 = vmatpush1.msra.mxu0 0.0
        %3406 = vmatprep.subr.mxu0 0.0
        %3407 = vmatpush1.msra.mxu0 0.0
        %3408 = vmatprep.subr.mxu0 0.0
        %3409 = vmatpush1.msra.mxu0 0.0
        %3410 = vmatprep.subr.mxu0 0.0
        %3411 = vmatpush1.msra.mxu0 %v3178
        %3412 = vmatprep.subr.mxu0 0.0
        %3413 = vmatpush2.msra.mxu0 0.0
        %3414 = vmatprep.subr.mxu0 0.0
        %3415 = vmatpush2.msra.mxu0 0.0
        %3416 = vmatprep.subr.mxu0 0.0
        %3417 = vmatpush2.msra.mxu0 0.0
        %3418 = vmatprep.subr.mxu0 0.0
        %3419 = vmatpush2.msra.mxu0 0.0
        %3420 = vmatprep.subr.mxu0 0.0
        %3421 = vmatpush2.msra.mxu0 0.0
        %3422 = vmatprep.subr.mxu0 0.0
        %3423 = vmatpush2.msra.mxu0 0.0
        %3424 = vmatprep.subr.mxu0 0.0
        %3425 = vmatpush2.msra.mxu0 0.0
        %3426 = vmatprep.subr.mxu0 0.0
        %3427 = vmatpush2.msra.mxu0 0.0
        %3428 = vmatprep.subr.mxu0 0.0
        %3429 = vmatpush2.msra.mxu0 0.0
        %3430 = vmatprep.subr.mxu0 0.0
        %3431 = vmatpush2.msra.mxu0 0.0
        %3432 = vmatprep.subr.mxu0 0.0
        %3433 = vmatpush2.msra.mxu0 0.0
        %3434 = vmatprep.subr.mxu0 0.0
        %3435 = vmatpush2.msra.mxu0 0.0
        %3436 = vmatprep.subr.mxu0 0.0
        %3437 = vmatpush2.msra.mxu0 0.0
        %3438 = vmatprep.subr.mxu0 0.0
        %3439 = vmatpush2.msra.mxu0 0.0
        %3440 = vmatprep.subr.mxu0 0.0
        %3441 = vmatpush2.msra.mxu0 0.0
        %3442 = vmatprep.subr.mxu0 0.0
        %3443 = vmatpush2.msra.mxu0 0.0
        %3444 = vmatprep.mubr.f32.mxu0 0.0
        %3445 = vmatmul.mubr.f32.gmra.mxu0 %v3378
        %v3446 = vpop.f32.mrf.mxu0
        %v3447 = vadd.f32 0.0, %v3446
        %v3448 = vpop.f32.mrf.mxu0
        %3449 = vdwg.mxu0
        %v3450 = vadd.f32 %v3175, %v3447
        %v3451 = vmul.f32 %v3450, 0.5
        %v3452 = vtanh.pop %v3451
        %v3453 = vadd.f32 %v3452, 1.0
        %v3454 = vmul.f32 %v3453, 0.5
        %v3455 = vtanh.pop %v3450
        %v3456 = vmul.f32 %v3454, %v3368
        %3458 = vrot.lane.b32.xlu0 %v3455, 112
        %v3459 = vpop.permute.xlu0 %3458
        %v3461 = vmul.f32 %v3454, %v3459
        %3463 = vrot.lane.b32.xlu0 %v3461, 8
        %v3464 = vpop.permute.xlu0 %3463
        %v3466 = vadd.f32 %v3456, %v3464
        %v3467 = vtanh.pop %v3466
        %3469 = vrot.lane.b32.xlu0 %v3467, 16
        %v3470 = vpop.permute.xlu0 %3469
        %v3472 = vmul.f32 %v3454, %v3470
        %3473 = vmatprep.subr.mxu0 0.0
        %3474 = vmatpush1.msra.mxu0 0.0
        %3475 = vmatprep.subr.mxu0 0.0
        %3476 = vmatpush1.msra.mxu0 0.0
        %3477 = vmatprep.subr.mxu0 0.0
        %3478 = vmatpush1.msra.mxu0 0.0
        %3479 = vmatprep.subr.mxu0 0.0
        %3480 = vmatpush1.msra.mxu0 0.0
        %3481 = vmatprep.subr.mxu0 0.0
        %3482 = vmatpush1.msra.mxu0 0.0
        %3483 = vmatprep.subr.mxu0 0.0
        %3484 = vmatpush1.msra.mxu0 0.0
        %3485 = vmatprep.subr.mxu0 0.0
        %3486 = vmatpush1.msra.mxu0 0.0
        %3487 = vmatprep.subr.mxu0 0.0
        %3488 = vmatpush1.msra.mxu0 0.0
        %3489 = vmatprep.subr.mxu0 0.0
        %3490 = vmatpush1.msra.mxu0 0.0
        %3491 = vmatprep.subr.mxu0 0.0
        %3492 = vmatpush1.msra.mxu0 0.0
        %3493 = vmatprep.subr.mxu0 0.0
        %3494 = vmatpush1.msra.mxu0 0.0
        %3495 = vmatprep.subr.mxu0 0.0
        %3496 = vmatpush1.msra.mxu0 0.0
        %3497 = vmatprep.subr.mxu0 0.0
        %3498 = vmatpush1.msra.mxu0 0.0
        %3499 = vmatprep.subr.mxu0 0.0
        %3500 = vmatpush1.msra.mxu0 0.0
        %3501 = vmatprep.subr.mxu0 0.0
        %3502 = vmatpush1.msra.mxu0 0.0
        %3503 = vmatprep.subr.mxu0 0.0
        %3504 = vmatpush1.msra.mxu0 %v3179
        %3505 = vmatprep.subr.mxu0 0.0
        %3506 = vmatpush2.msra.mxu0 0.0
        %3507 = vmatprep.subr.mxu0 0.0
        %3508 = vmatpush2.msra.mxu0 0.0
        %3509 = vmatprep.subr.mxu0 0.0
        %3510 = vmatpush2.msra.mxu0 0.0
        %3511 = vmatprep.subr.mxu0 0.0
        %3512 = vmatpush2.msra.mxu0 0.0
        %3513 = vmatprep.subr.mxu0 0.0
        %3514 = vmatpush2.msra.mxu0 0.0
        %3515 = vmatprep.subr.mxu0 0.0
        %3516 = vmatpush2.msra.mxu0 0.0
        %3517 = vmatprep.subr.mxu0 0.0
        %3518 = vmatpush2.msra.mxu0 0.0
        %3519 = vmatprep.subr.mxu0 0.0
        %3520 = vmatpush2.msra.mxu0 0.0
        %3521 = vmatprep.subr.mxu0 0.0
        %3522 = vmatpush2.msra.mxu0 0.0
        %3523 = vmatprep.subr.mxu0 0.0
        %3524 = vmatpush2.msra.mxu0 0.0
        %3525 = vmatprep.subr.mxu0 0.0
        %3526 = vmatpush2.msra.mxu0 0.0
        %3527 = vmatprep.subr.mxu0 0.0
        %3528 = vmatpush2.msra.mxu0 0.0
        %3529 = vmatprep.subr.mxu0 0.0
        %3530 = vmatpush2.msra.mxu0 0.0
        %3531 = vmatprep.subr.mxu0 0.0
        %3532 = vmatpush2.msra.mxu0 0.0
        %3533 = vmatprep.subr.mxu0 0.0
        %3534 = vmatpush2.msra.mxu0 0.0
        %3535 = vmatprep.subr.mxu0 0.0
        %3536 = vmatpush2.msra.mxu0 0.0
        %3537 = vmatprep.mubr.f32.mxu0 0.0
        %3538 = vmatmul.mubr.f32.gmra.mxu0 %v3182
        %v3539 = vpop.f32.mrf.mxu0
        %v3540 = vadd.f32 0.0, %v3539
        %v3541 = vpop.f32.mrf.mxu0
        %3542 = vdwg.mxu0
        %3544 = vrot.lane.b32.xlu0 %v3540, 32
        %v3545 = vpop.permute.xlu0 %3544
        %v3547 = vadd.f32 %v3175, %v3545
        %v3548 = vmul.f32 %v3547, 0.5
        %v3549 = vtanh.pop %v3548
        %v3550 = vadd.f32 %v3549, 1.0
        %v3551 = vmul.f32 %v3550, 0.5
        %v3552 = vtanh.pop %v3547
        %v3553 = vmul.f32 %v3551, 0.0
        %3555 = vrot.lane.b32.xlu0 %v3552, 112
        %v3556 = vpop.permute.xlu0 %3555
        %v3558 = vmul.f32 %v3551, %v3556
        %3560 = vrot.lane.b32.xlu0 %v3558, 8
        %v3561 = vpop.permute.xlu0 %3560
        %v3563 = vadd.f32 %v3553, %v3561
        %v3564 = vtanh.pop %v3563
        %3566 = vrot.lane.b32.xlu0 %v3564, 16
        %v3567 = vpop.permute.xlu0 %3566
        %v3569 = vmul.f32 %v3551, %v3567
        %3571 = vrot.lane.b32.xlu0 %v3569, 72
        %v3572 = vpop.permute.xlu0 %3571
        %v3573 = vsel %vm3180, %v3572, 0
        %3575 = vmatprep.subr.mxu0 0.0
        %3576 = vmatpush1.msra.mxu0 0.0
        %3577 = vmatprep.subr.mxu0 0.0
        %3578 = vmatpush1.msra.mxu0 0.0
        %3579 = vmatprep.subr.mxu0 0.0
        %3580 = vmatpush1.msra.mxu0 0.0
        %3581 = vmatprep.subr.mxu0 0.0
        %3582 = vmatpush1.msra.mxu0 0.0
        %3583 = vmatprep.subr.mxu0 0.0
        %3584 = vmatpush1.msra.mxu0 0.0
        %3585 = vmatprep.subr.mxu0 0.0
        %3586 = vmatpush1.msra.mxu0 0.0
        %3587 = vmatprep.subr.mxu0 0.0
        %3588 = vmatpush1.msra.mxu0 0.0
        %3589 = vmatprep.subr.mxu0 0.0
        %3590 = vmatpush1.msra.mxu0 0.0
        %3591 = vmatprep.subr.mxu0 0.0
        %3592 = vmatpush1.msra.mxu0 0.0
        %3593 = vmatprep.subr.mxu0 0.0
        %3594 = vmatpush1.msra.mxu0 0.0
        %3595 = vmatprep.subr.mxu0 0.0
        %3596 = vmatpush1.msra.mxu0 0.0
        %3597 = vmatprep.subr.mxu0 0.0
        %3598 = vmatpush1.msra.mxu0 0.0
        %3599 = vmatprep.subr.mxu0 0.0
        %3600 = vmatpush1.msra.mxu0 0.0
        %3601 = vmatprep.subr.mxu0 0.0
        %3602 = vmatpush1.msra.mxu0 0.0
        %3603 = vmatprep.subr.mxu0 0.0
        %3604 = vmatpush1.msra.mxu0 0.0
        %3605 = vmatprep.subr.mxu0 0.0
        %3606 = vmatpush1.msra.mxu0 %v3179
        %3607 = vmatprep.subr.mxu0 0.0
        %3608 = vmatpush2.msra.mxu0 0.0
        %3609 = vmatprep.subr.mxu0 0.0
        %3610 = vmatpush2.msra.mxu0 0.0
        %3611 = vmatprep.subr.mxu0 0.0
        %3612 = vmatpush2.msra.mxu0 0.0
        %3613 = vmatprep.subr.mxu0 0.0
        %3614 = vmatpush2.msra.mxu0 0.0
        %3615 = vmatprep.subr.mxu0 0.0
        %3616 = vmatpush2.msra.mxu0 0.0
        %3617 = vmatprep.subr.mxu0 0.0
        %3618 = vmatpush2.msra.mxu0 0.0
        %3619 = vmatprep.subr.mxu0 0.0
        %3620 = vmatpush2.msra.mxu0 0.0
        %3621 = vmatprep.subr.mxu0 0.0
        %3622 = vmatpush2.msra.mxu0 0.0
        %3623 = vmatprep.subr.mxu0 0.0
        %3624 = vmatpush2.msra.mxu0 0.0
        %3625 = vmatprep.subr.mxu0 0.0
        %3626 = vmatpush2.msra.mxu0 0.0
        %3627 = vmatprep.subr.mxu0 0.0
        %3628 = vmatpush2.msra.mxu0 0.0
        %3629 = vmatprep.subr.mxu0 0.0
        %3630 = vmatpush2.msra.mxu0 0.0
        %3631 = vmatprep.subr.mxu0 0.0
        %3632 = vmatpush2.msra.mxu0 0.0
        %3633 = vmatprep.subr.mxu0 0.0
        %3634 = vmatpush2.msra.mxu0 0.0
        %3635 = vmatprep.subr.mxu0 0.0
        %3636 = vmatpush2.msra.mxu0 0.0
        %3637 = vmatprep.subr.mxu0 0.0
        %3638 = vmatpush2.msra.mxu0 0.0
        %3639 = vmatprep.mubr.f32.mxu0 0.0
        %3640 = vmatmul.mubr.f32.gmra.mxu0 %v3573
        %v3641 = vpop.f32.mrf.mxu0
        %v3642 = vadd.f32 0.0, %v3641
        %v3643 = vpop.f32.mrf.mxu0
        %3644 = vdwg.mxu0
        %3646 = vrot.lane.b32.xlu0 %v3642, 32
        %v3647 = vpop.permute.xlu0 %3646
        %v3649 = vadd.f32 %v3086, %v3647
        %v3650 = vmul.f32 %v3649, 0.5
        %v3651 = vtanh.pop %v3650
        %v3652 = vadd.f32 %v3651, 1.0
        %v3653 = vmul.f32 %v3652, 0.5
        %v3654 = vtanh.pop %v3649
        %v3655 = vmul.f32 %v3653, %v3563
        %3657 = vrot.lane.b32.xlu0 %v3654, 112
        %v3658 = vpop.permute.xlu0 %3657
        %v3660 = vmul.f32 %v3653, %v3658
        %3662 = vrot.lane.b32.xlu0 %v3660, 8
        %v3663 = vpop.permute.xlu0 %3662
        %v3665 = vadd.f32 %v3655, %v3663
        %v3666 = vtanh.pop %v3665
        %3668 = vrot.lane.b32.xlu0 %v3666, 16
        %v3669 = vpop.permute.xlu0 %3668
        %v3671 = vmul.f32 %v3653, %v3669
        %3673 = vrot.lane.b32.xlu0 %v3671, 72
        %v3674 = vpop.permute.xlu0 %3673
        %v3675 = vsel %vm3180, %v3674, 0
        %3677 = vmatprep.subr.mxu0 0.0
        %3678 = vmatpush1.msra.mxu0 0.0
        %3679 = vmatprep.subr.mxu0 0.0
        %3680 = vmatpush1.msra.mxu0 0.0
        %3681 = vmatprep.subr.mxu0 0.0
        %3682 = vmatpush1.msra.mxu0 0.0
        %3683 = vmatprep.subr.mxu0 0.0
        %3684 = vmatpush1.msra.mxu0 0.0
        %3685 = vmatprep.subr.mxu0 0.0
        %3686 = vmatpush1.msra.mxu0 0.0
        %3687 = vmatprep.subr.mxu0 0.0
        %3688 = vmatpush1.msra.mxu0 0.0
        %3689 = vmatprep.subr.mxu0 0.0
        %3690 = vmatpush1.msra.mxu0 0.0
        %3691 = vmatprep.subr.mxu0 0.0
        %3692 = vmatpush1.msra.mxu0 0.0
        %3693 = vmatprep.subr.mxu0 0.0
        %3694 = vmatpush1.msra.mxu0 0.0
        %3695 = vmatprep.subr.mxu0 0.0
        %3696 = vmatpush1.msra.mxu0 0.0
        %3697 = vmatprep.subr.mxu0 0.0
        %3698 = vmatpush1.msra.mxu0 0.0
        %3699 = vmatprep.subr.mxu0 0.0
        %3700 = vmatpush1.msra.mxu0 0.0
        %3701 = vmatprep.subr.mxu0 0.0
        %3702 = vmatpush1.msra.mxu0 0.0
        %3703 = vmatprep.subr.mxu0 0.0
        %3704 = vmatpush1.msra.mxu0 0.0
        %3705 = vmatprep.subr.mxu0 0.0
        %3706 = vmatpush1.msra.mxu0 0.0
        %3707 = vmatprep.subr.mxu0 0.0
        %3708 = vmatpush1.msra.mxu0 %v3179
        %3709 = vmatprep.subr.mxu0 0.0
        %3710 = vmatpush2.msra.mxu0 0.0
        %3711 = vmatprep.subr.mxu0 0.0
        %3712 = vmatpush2.msra.mxu0 0.0
        %3713 = vmatprep.subr.mxu0 0.0
        %3714 = vmatpush2.msra.mxu0 0.0
        %3715 = vmatprep.subr.mxu0 0.0
        %3716 = vmatpush2.msra.mxu0 0.0
        %3717 = vmatprep.subr.mxu0 0.0
        %3718 = vmatpush2.msra.mxu0 0.0
        %3719 = vmatprep.subr.mxu0 0.0
        %3720 = vmatpush2.msra.mxu0 0.0
        %3721 = vmatprep.subr.mxu0 0.0
        %3722 = vmatpush2.msra.mxu0 0.0
        %3723 = vmatprep.subr.mxu0 0.0
        %3724 = vmatpush2.msra.mxu0 0.0
        %3725 = vmatprep.subr.mxu0 0.0
        %3726 = vmatpush2.msra.mxu0 0.0
        %3727 = vmatprep.subr.mxu0 0.0
        %3728 = vmatpush2.msra.mxu0 0.0
        %3729 = vmatprep.subr.mxu0 0.0
        %3730 = vmatpush2.msra.mxu0 0.0
        %3731 = vmatprep.subr.mxu0 0.0
        %3732 = vmatpush2.msra.mxu0 0.0
        %3733 = vmatprep.subr.mxu0 0.0
        %3734 = vmatpush2.msra.mxu0 0.0
        %3735 = vmatprep.subr.mxu0 0.0
        %3736 = vmatpush2.msra.mxu0 0.0
        %3737 = vmatprep.subr.mxu0 0.0
        %3738 = vmatpush2.msra.mxu0 0.0
        %3739 = vmatprep.subr.mxu0 0.0
        %3740 = vmatpush2.msra.mxu0 0.0
        %3741 = vmatprep.mubr.f32.mxu0 0.0
        %3742 = vmatmul.mubr.f32.gmra.mxu0 %v3675
        %v3743 = vpop.f32.mrf.mxu0
        %v3744 = vadd.f32 0.0, %v3743
        %v3745 = vpop.f32.mrf.mxu0
        %3746 = vdwg.mxu0
        %3748 = vrot.lane.b32.xlu0 %v3744, 32
        %v3749 = vpop.permute.xlu0 %3748
        %v3751 = vadd.f32 %v2997, %v3749
        %v3752 = vmul.f32 %v3751, 0.5
        %v3753 = vtanh.pop %v3752
        %v3754 = vadd.f32 %v3753, 1.0
        %v3755 = vmul.f32 %v3754, 0.5
        %v3756 = vtanh.pop %v3751
        %v3757 = vmul.f32 %v3755, %v3665
        %3759 = vrot.lane.b32.xlu0 %v3756, 112
        %v3760 = vpop.permute.xlu0 %3759
        %v3762 = vmul.f32 %v3755, %v3760
        %3764 = vrot.lane.b32.xlu0 %v3762, 8
        %v3765 = vpop.permute.xlu0 %3764
        %v3767 = vadd.f32 %v3757, %v3765
        %v3768 = vtanh.pop %v3767
        %3770 = vrot.lane.b32.xlu0 %v3768, 16
        %v3771 = vpop.permute.xlu0 %3770
        %v3773 = vmul.f32 %v3755, %v3771
        %3776 = vrot.lane.b32.xlu0 %v3773, 80
        %v3777 = vpop.permute.xlu0 %3776
        %v3779 = vsel %vm3180, %v3279, %v3777
        %s3780 = scalar_lea.vmem %s7, 16
        %v3781 = vld [vmem:[%s3780] sm:$0xff]
        %v3782 = vld [vmem:[%s3780 + $0x8] sm:$0xff]
        %v3783 = vlaneseq
        %v3784 = vshrl.u32 %v3783, 7
        %v3785 = vsub.s32 5, %v3784
        %v3786 = vrot.slane %v362, %v3785
        %v3788 = vsel %vm2927, %v3779, 0
        %3790 = vmatprep.subr.mxu0 0.0
        %3791 = vmatpush1.msra.mxu0 0.0
        %3792 = vmatprep.subr.mxu0 0.0
        %3793 = vmatpush1.msra.mxu0 0.0
        %3794 = vmatprep.subr.mxu0 0.0
        %3795 = vmatpush1.msra.mxu0 0.0
        %3796 = vmatprep.subr.mxu0 0.0
        %3797 = vmatpush1.msra.mxu0 0.0
        %3798 = vmatprep.subr.mxu0 0.0
        %3799 = vmatpush1.msra.mxu0 0.0
        %3800 = vmatprep.subr.mxu0 0.0
        %3801 = vmatpush1.msra.mxu0 0.0
        %3802 = vmatprep.subr.mxu0 0.0
        %3803 = vmatpush1.msra.mxu0 0.0
        %3804 = vmatprep.subr.mxu0 0.0
        %3805 = vmatpush1.msra.mxu0 0.0
        %3806 = vmatprep.subr.mxu0 0.0
        %3807 = vmatpush1.msra.mxu0 0.0
        %3808 = vmatprep.subr.mxu0 0.0
        %3809 = vmatpush1.msra.mxu0 0.0
        %3810 = vmatprep.subr.mxu0 0.0
        %3811 = vmatpush1.msra.mxu0 0.0
        %3812 = vmatprep.subr.mxu0 0.0
        %3813 = vmatpush1.msra.mxu0 0.0
        %3814 = vmatprep.subr.mxu0 0.0
        %3815 = vmatpush1.msra.mxu0 0.0
        %3816 = vmatprep.subr.mxu0 0.0
        %3817 = vmatpush1.msra.mxu0 0.0
        %3818 = vmatprep.subr.mxu0 0.0
        %3819 = vmatpush1.msra.mxu0 %v3782
        %3820 = vmatprep.subr.mxu0 0.0
        %3821 = vmatpush1.msra.mxu0 %v3781
        %3822 = vmatprep.subr.mxu0 0.0
        %3823 = vmatpush2.msra.mxu0 0.0
        %3824 = vmatprep.subr.mxu0 0.0
        %3825 = vmatpush2.msra.mxu0 0.0
        %3826 = vmatprep.subr.mxu0 0.0
        %3827 = vmatpush2.msra.mxu0 0.0
        %3828 = vmatprep.subr.mxu0 0.0
        %3829 = vmatpush2.msra.mxu0 0.0
        %3830 = vmatprep.subr.mxu0 0.0
        %3831 = vmatpush2.msra.mxu0 0.0
        %3832 = vmatprep.subr.mxu0 0.0
        %3833 = vmatpush2.msra.mxu0 0.0
        %3834 = vmatprep.subr.mxu0 0.0
        %3835 = vmatpush2.msra.mxu0 0.0
        %3836 = vmatprep.subr.mxu0 0.0
        %3837 = vmatpush2.msra.mxu0 0.0
        %3838 = vmatprep.subr.mxu0 0.0
        %3839 = vmatpush2.msra.mxu0 0.0
        %3840 = vmatprep.subr.mxu0 0.0
        %3841 = vmatpush2.msra.mxu0 0.0
        %3842 = vmatprep.subr.mxu0 0.0
        %3843 = vmatpush2.msra.mxu0 0.0
        %3844 = vmatprep.subr.mxu0 0.0
        %3845 = vmatpush2.msra.mxu0 0.0
        %3846 = vmatprep.subr.mxu0 0.0
        %3847 = vmatpush2.msra.mxu0 0.0
        %3848 = vmatprep.subr.mxu0 0.0
        %3849 = vmatpush2.msra.mxu0 0.0
        %3850 = vmatprep.subr.mxu0 0.0
        %3851 = vmatpush2.msra.mxu0 0.0
        %3852 = vmatprep.subr.mxu0 0.0
        %3853 = vmatpush2.msra.mxu0 0.0
        %3854 = vmatprep.mubr.f32.mxu0 0.0
        %3855 = vmatmul.mubr.f32.gmra.mxu0 %v3788
        %v3856 = vpop.f32.mrf.mxu0
        %v3857 = vadd.f32 %v3786, %v3856
        %v3858 = vpop.f32.mrf.mxu0
        %3859 = vdwg.mxu0
        %3861 = vrot.lane.b32.xlu0 %v3671, 80
        %v3862 = vpop.permute.xlu0 %3861
        %v3864 = vsel %vm3180, %v3377, %v3862
        %v3866 = vsel %vm2927, %v3864, 0
        %3868 = vmatprep.subr.mxu0 0.0
        %3869 = vmatpush1.msra.mxu0 0.0
        %3870 = vmatprep.subr.mxu0 0.0
        %3871 = vmatpush1.msra.mxu0 0.0
        %3872 = vmatprep.subr.mxu0 0.0
        %3873 = vmatpush1.msra.mxu0 0.0
        %3874 = vmatprep.subr.mxu0 0.0
        %3875 = vmatpush1.msra.mxu0 0.0
        %3876 = vmatprep.subr.mxu0 0.0
        %3877 = vmatpush1.msra.mxu0 0.0
        %3878 = vmatprep.subr.mxu0 0.0
        %3879 = vmatpush1.msra.mxu0 0.0
        %3880 = vmatprep.subr.mxu0 0.0
        %3881 = vmatpush1.msra.mxu0 0.0
        %3882 = vmatprep.subr.mxu0 0.0
        %3883 = vmatpush1.msra.mxu0 0.0
        %3884 = vmatprep.subr.mxu0 0.0
        %3885 = vmatpush1.msra.mxu0 0.0
        %3886 = vmatprep.subr.mxu0 0.0
        %3887 = vmatpush1.msra.mxu0 0.0
        %3888 = vmatprep.subr.mxu0 0.0
        %3889 = vmatpush1.msra.mxu0 0.0
        %3890 = vmatprep.subr.mxu0 0.0
        %3891 = vmatpush1.msra.mxu0 0.0
        %3892 = vmatprep.subr.mxu0 0.0
        %3893 = vmatpush1.msra.mxu0 0.0
        %3894 = vmatprep.subr.mxu0 0.0
        %3895 = vmatpush1.msra.mxu0 0.0
        %3896 = vmatprep.subr.mxu0 0.0
        %3897 = vmatpush1.msra.mxu0 %v3782
        %3898 = vmatprep.subr.mxu0 0.0
        %3899 = vmatpush1.msra.mxu0 %v3781
        %3900 = vmatprep.subr.mxu0 0.0
        %3901 = vmatpush2.msra.mxu0 0.0
        %3902 = vmatprep.subr.mxu0 0.0
        %3903 = vmatpush2.msra.mxu0 0.0
        %3904 = vmatprep.subr.mxu0 0.0
        %3905 = vmatpush2.msra.mxu0 0.0
        %3906 = vmatprep.subr.mxu0 0.0
        %3907 = vmatpush2.msra.mxu0 0.0
        %3908 = vmatprep.subr.mxu0 0.0
        %3909 = vmatpush2.msra.mxu0 0.0
        %3910 = vmatprep.subr.mxu0 0.0
        %3911 = vmatpush2.msra.mxu0 0.0
        %3912 = vmatprep.subr.mxu0 0.0
        %3913 = vmatpush2.msra.mxu0 0.0
        %3914 = vmatprep.subr.mxu0 0.0
        %3915 = vmatpush2.msra.mxu0 0.0
        %3916 = vmatprep.subr.mxu0 0.0
        %3917 = vmatpush2.msra.mxu0 0.0
        %3918 = vmatprep.subr.mxu0 0.0
        %3919 = vmatpush2.msra.mxu0 0.0
        %3920 = vmatprep.subr.mxu0 0.0
        %3921 = vmatpush2.msra.mxu0 0.0
        %3922 = vmatprep.subr.mxu0 0.0
        %3923 = vmatpush2.msra.mxu0 0.0
        %3924 = vmatprep.subr.mxu0 0.0
        %3925 = vmatpush2.msra.mxu0 0.0
        %3926 = vmatprep.subr.mxu0 0.0
        %3927 = vmatpush2.msra.mxu0 0.0
        %3928 = vmatprep.subr.mxu0 0.0
        %3929 = vmatpush2.msra.mxu0 0.0
        %3930 = vmatprep.subr.mxu0 0.0
        %3931 = vmatpush2.msra.mxu0 0.0
        %3932 = vmatprep.mubr.f32.mxu0 0.0
        %3933 = vmatmul.mubr.f32.gmra.mxu0 %v3866
        %v3934 = vpop.f32.mrf.mxu0
        %v3935 = vadd.f32 %v3786, %v3934
        %v3936 = vpop.f32.mrf.mxu0
        %3937 = vdwg.mxu0
        %3939 = vrot.lane.b32.xlu0 %v3472, 104
        %v3940 = vpop.permute.xlu0 %3939
        %3942 = vrot.lane.b32.xlu0 %v3569, 80
        %v3943 = vpop.permute.xlu0 %3942
        %v3945 = vsel %vm3180, %v3940, %v3943
        %v3947 = vsel %vm2927, %v3945, 0
        %3949 = vmatprep.subr.mxu0 0.0
        %3950 = vmatpush1.msra.mxu0 0.0
        %3951 = vmatprep.subr.mxu0 0.0
        %3952 = vmatpush1.msra.mxu0 0.0
        %3953 = vmatprep.subr.mxu0 0.0
        %3954 = vmatpush1.msra.mxu0 0.0
        %3955 = vmatprep.subr.mxu0 0.0
        %3956 = vmatpush1.msra.mxu0 0.0
        %3957 = vmatprep.subr.mxu0 0.0
        %3958 = vmatpush1.msra.mxu0 0.0
        %3959 = vmatprep.subr.mxu0 0.0
        %3960 = vmatpush1.msra.mxu0 0.0
        %3961 = vmatprep.subr.mxu0 0.0
        %3962 = vmatpush1.msra.mxu0 0.0
        %3963 = vmatprep.subr.mxu0 0.0
        %3964 = vmatpush1.msra.mxu0 0.0
        %3965 = vmatprep.subr.mxu0 0.0
        %3966 = vmatpush1.msra.mxu0 0.0
        %3967 = vmatprep.subr.mxu0 0.0
        %3968 = vmatpush1.msra.mxu0 0.0
        %3969 = vmatprep.subr.mxu0 0.0
        %3970 = vmatpush1.msra.mxu0 0.0
        %3971 = vmatprep.subr.mxu0 0.0
        %3972 = vmatpush1.msra.mxu0 0.0
        %3973 = vmatprep.subr.mxu0 0.0
        %3974 = vmatpush1.msra.mxu0 0.0
        %3975 = vmatprep.subr.mxu0 0.0
        %3976 = vmatpush1.msra.mxu0 0.0
        %3977 = vmatprep.subr.mxu0 0.0
        %3978 = vmatpush1.msra.mxu0 %v3782
        %3979 = vmatprep.subr.mxu0 0.0
        %3980 = vmatpush1.msra.mxu0 %v3781
        %3981 = vmatprep.subr.mxu0 0.0
        %3982 = vmatpush2.msra.mxu0 0.0
        %3983 = vmatprep.subr.mxu0 0.0
        %3984 = vmatpush2.msra.mxu0 0.0
        %3985 = vmatprep.subr.mxu0 0.0
        %3986 = vmatpush2.msra.mxu0 0.0
        %3987 = vmatprep.subr.mxu0 0.0
        %3988 = vmatpush2.msra.mxu0 0.0
        %3989 = vmatprep.subr.mxu0 0.0
        %3990 = vmatpush2.msra.mxu0 0.0
        %3991 = vmatprep.subr.mxu0 0.0
        %3992 = vmatpush2.msra.mxu0 0.0
        %3993 = vmatprep.subr.mxu0 0.0
        %3994 = vmatpush2.msra.mxu0 0.0
        %3995 = vmatprep.subr.mxu0 0.0
        %3996 = vmatpush2.msra.mxu0 0.0
        %3997 = vmatprep.subr.mxu0 0.0
        %3998 = vmatpush2.msra.mxu0 0.0
        %3999 = vmatprep.subr.mxu0 0.0
        %4000 = vmatpush2.msra.mxu0 0.0
        %4001 = vmatprep.subr.mxu0 0.0
        %4002 = vmatpush2.msra.mxu0 0.0
        %4003 = vmatprep.subr.mxu0 0.0
        %4004 = vmatpush2.msra.mxu0 0.0
        %4005 = vmatprep.subr.mxu0 0.0
        %4006 = vmatpush2.msra.mxu0 0.0
        %4007 = vmatprep.subr.mxu0 0.0
        %4008 = vmatpush2.msra.mxu0 0.0
        %4009 = vmatprep.subr.mxu0 0.0
        %4010 = vmatpush2.msra.mxu0 0.0
        %4011 = vmatprep.subr.mxu0 0.0
        %4012 = vmatpush2.msra.mxu0 0.0
        %4013 = vmatprep.mubr.f32.mxu0 0.0
        %4014 = vmatmul.mubr.f32.gmra.mxu0 %v3947
        %v4015 = vpop.f32.mrf.mxu0
        %v4016 = vadd.f32 %v3786, %v4015
        %v4017 = vpop.f32.mrf.mxu0
        %4018 = vdwg.mxu0
        %s4019 = scalar_lea.vmem %s8, 16
        %v4020 = vld [vmem:[%s4019] sm:$0xff]
        %v4021 = vld [vmem:[%s4019 + $0x8] sm:$0xff]
        %4022 = vmatprep.subr.mxu0 0.0
        %4023 = vmatpush1.msra.mxu0 0.0
        %4024 = vmatprep.subr.mxu0 0.0
        %4025 = vmatpush1.msra.mxu0 0.0
        %4026 = vmatprep.subr.mxu0 0.0
        %4027 = vmatpush1.msra.mxu0 0.0
        %4028 = vmatprep.subr.mxu0 0.0
        %4029 = vmatpush1.msra.mxu0 0.0
        %4030 = vmatprep.subr.mxu0 0.0
        %4031 = vmatpush1.msra.mxu0 0.0
        %4032 = vmatprep.subr.mxu0 0.0
        %4033 = vmatpush1.msra.mxu0 0.0
        %4034 = vmatprep.subr.mxu0 0.0
        %4035 = vmatpush1.msra.mxu0 0.0
        %4036 = vmatprep.subr.mxu0 0.0
        %4037 = vmatpush1.msra.mxu0 0.0
        %4038 = vmatprep.subr.mxu0 0.0
        %4039 = vmatpush1.msra.mxu0 0.0
        %4040 = vmatprep.subr.mxu0 0.0
        %4041 = vmatpush1.msra.mxu0 0.0
        %4042 = vmatprep.subr.mxu0 0.0
        %4043 = vmatpush1.msra.mxu0 0.0
        %4044 = vmatprep.subr.mxu0 0.0
        %4045 = vmatpush1.msra.mxu0 0.0
        %4046 = vmatprep.subr.mxu0 0.0
        %4047 = vmatpush1.msra.mxu0 0.0
        %4048 = vmatprep.subr.mxu0 0.0
        %4049 = vmatpush1.msra.mxu0 0.0
        %4050 = vmatprep.subr.mxu0 0.0
        %4051 = vmatpush1.msra.mxu0 0.0
        %4052 = vmatprep.subr.mxu0 0.0
        %4053 = vmatpush1.msra.mxu0 %v4020
        %4054 = vmatprep.subr.mxu0 0.0
        %4055 = vmatpush2.msra.mxu0 0.0
        %4056 = vmatprep.subr.mxu0 0.0
        %4057 = vmatpush2.msra.mxu0 0.0
        %4058 = vmatprep.subr.mxu0 0.0
        %4059 = vmatpush2.msra.mxu0 0.0
        %4060 = vmatprep.subr.mxu0 0.0
        %4061 = vmatpush2.msra.mxu0 0.0
        %4062 = vmatprep.subr.mxu0 0.0
        %4063 = vmatpush2.msra.mxu0 0.0
        %4064 = vmatprep.subr.mxu0 0.0
        %4065 = vmatpush2.msra.mxu0 0.0
        %4066 = vmatprep.subr.mxu0 0.0
        %4067 = vmatpush2.msra.mxu0 0.0
        %4068 = vmatprep.subr.mxu0 0.0
        %4069 = vmatpush2.msra.mxu0 0.0
        %4070 = vmatprep.subr.mxu0 0.0
        %4071 = vmatpush2.msra.mxu0 0.0
        %4072 = vmatprep.subr.mxu0 0.0
        %4073 = vmatpush2.msra.mxu0 0.0
        %4074 = vmatprep.subr.mxu0 0.0
        %4075 = vmatpush2.msra.mxu0 0.0
        %4076 = vmatprep.subr.mxu0 0.0
        %4077 = vmatpush2.msra.mxu0 0.0
        %4078 = vmatprep.subr.mxu0 0.0
        %4079 = vmatpush2.msra.mxu0 0.0
        %4080 = vmatprep.subr.mxu0 0.0
        %4081 = vmatpush2.msra.mxu0 0.0
        %4082 = vmatprep.subr.mxu0 0.0
        %4083 = vmatpush2.msra.mxu0 0.0
        %4084 = vmatprep.subr.mxu0 0.0
        %4085 = vmatpush2.msra.mxu0 0.0
        %4086 = vmatprep.mubr.f32.mxu0 0.0
        %4087 = vmatmul.mubr.f32.gmra.mxu0 %v3182
        %v4088 = vpop.f32.mrf.mxu0
        %v4089 = vadd.f32 0.0, %v4088
        %v4090 = vpop.f32.mrf.mxu0
        %4091 = vdwg.mxu0
        %v4092 = vadd.f32 %v3857, %v4089
        %v4093 = vmul.f32 %v4092, 0.5
        %v4094 = vtanh.pop %v4093
        %v4095 = vadd.f32 %v4094, 1.0
        %v4096 = vmul.f32 %v4095, 0.5
        %v4097 = vtanh.pop %v4092
        %v4098 = vmul.f32 %v4096, 0.0
        %4100 = vrot.lane.b32.xlu0 %v4097, 112
        %v4101 = vpop.permute.xlu0 %4100
        %v4103 = vmul.f32 %v4096, %v4101
        %4105 = vrot.lane.b32.xlu0 %v4103, 8
        %v4106 = vpop.permute.xlu0 %4105
        %v4108 = vadd.f32 %v4098, %v4106
        %v4109 = vtanh.pop %v4108
        %4111 = vrot.lane.b32.xlu0 %v4109, 16
        %v4112 = vpop.permute.xlu0 %4111
        %v4114 = vmul.f32 %v4096, %v4112
        %4116 = vrot.lane.b32.xlu0 %v4114, 104
        %v4117 = vpop.permute.xlu0 %4116
        %v4118 = vsel %vm3180, %v4117, 0
        %4120 = vmatprep.subr.mxu0 0.0
        %4121 = vmatpush1.msra.mxu0 0.0
        %4122 = vmatprep.subr.mxu0 0.0
        %4123 = vmatpush1.msra.mxu0 0.0
        %4124 = vmatprep.subr.mxu0 0.0
        %4125 = vmatpush1.msra.mxu0 0.0
        %4126 = vmatprep.subr.mxu0 0.0
        %4127 = vmatpush1.msra.mxu0 0.0
        %4128 = vmatprep.subr.mxu0 0.0
        %4129 = vmatpush1.msra.mxu0 0.0
        %4130 = vmatprep.subr.mxu0 0.0
        %4131 = vmatpush1.msra.mxu0 0.0
        %4132 = vmatprep.subr.mxu0 0.0
        %4133 = vmatpush1.msra.mxu0 0.0
        %4134 = vmatprep.subr.mxu0 0.0
        %4135 = vmatpush1.msra.mxu0 0.0
        %4136 = vmatprep.subr.mxu0 0.0
        %4137 = vmatpush1.msra.mxu0 0.0
        %4138 = vmatprep.subr.mxu0 0.0
        %4139 = vmatpush1.msra.mxu0 0.0
        %4140 = vmatprep.subr.mxu0 0.0
        %4141 = vmatpush1.msra.mxu0 0.0
        %4142 = vmatprep.subr.mxu0 0.0
        %4143 = vmatpush1.msra.mxu0 0.0
        %4144 = vmatprep.subr.mxu0 0.0
        %4145 = vmatpush1.msra.mxu0 0.0
        %4146 = vmatprep.subr.mxu0 0.0
        %4147 = vmatpush1.msra.mxu0 0.0
        %4148 = vmatprep.subr.mxu0 0.0
        %4149 = vmatpush1.msra.mxu0 0.0
        %4150 = vmatprep.subr.mxu0 0.0
        %4151 = vmatpush1.msra.mxu0 %v4020
        %4152 = vmatprep.subr.mxu0 0.0
        %4153 = vmatpush2.msra.mxu0 0.0
        %4154 = vmatprep.subr.mxu0 0.0
        %4155 = vmatpush2.msra.mxu0 0.0
        %4156 = vmatprep.subr.mxu0 0.0
        %4157 = vmatpush2.msra.mxu0 0.0
        %4158 = vmatprep.subr.mxu0 0.0
        %4159 = vmatpush2.msra.mxu0 0.0
        %4160 = vmatprep.subr.mxu0 0.0
        %4161 = vmatpush2.msra.mxu0 0.0
        %4162 = vmatprep.subr.mxu0 0.0
        %4163 = vmatpush2.msra.mxu0 0.0
        %4164 = vmatprep.subr.mxu0 0.0
        %4165 = vmatpush2.msra.mxu0 0.0
        %4166 = vmatprep.subr.mxu0 0.0
        %4167 = vmatpush2.msra.mxu0 0.0
        %4168 = vmatprep.subr.mxu0 0.0
        %4169 = vmatpush2.msra.mxu0 0.0
        %4170 = vmatprep.subr.mxu0 0.0
        %4171 = vmatpush2.msra.mxu0 0.0
        %4172 = vmatprep.subr.mxu0 0.0
        %4173 = vmatpush2.msra.mxu0 0.0
        %4174 = vmatprep.subr.mxu0 0.0
        %4175 = vmatpush2.msra.mxu0 0.0
        %4176 = vmatprep.subr.mxu0 0.0
        %4177 = vmatpush2.msra.mxu0 0.0
        %4178 = vmatprep.subr.mxu0 0.0
        %4179 = vmatpush2.msra.mxu0 0.0
        %4180 = vmatprep.subr.mxu0 0.0
        %4181 = vmatpush2.msra.mxu0 0.0
        %4182 = vmatprep.subr.mxu0 0.0
        %4183 = vmatpush2.msra.mxu0 0.0
        %4184 = vmatprep.mubr.f32.mxu0 0.0
        %4185 = vmatmul.mubr.f32.gmra.mxu0 %v4118
        %v4186 = vpop.f32.mrf.mxu0
        %v4187 = vadd.f32 0.0, %v4186
        %v4188 = vpop.f32.mrf.mxu0
        %4189 = vdwg.mxu0
        %v4190 = vadd.f32 %v3935, %v4187
        %v4191 = vmul.f32 %v4190, 0.5
        %v4192 = vtanh.pop %v4191
        %v4193 = vadd.f32 %v4192, 1.0
        %v4194 = vmul.f32 %v4193, 0.5
        %v4195 = vtanh.pop %v4190
        %v4196 = vmul.f32 %v4194, %v4108
        %4198 = vrot.lane.b32.xlu0 %v4195, 112
        %v4199 = vpop.permute.xlu0 %4198
        %v4201 = vmul.f32 %v4194, %v4199
        %4203 = vrot.lane.b32.xlu0 %v4201, 8
        %v4204 = vpop.permute.xlu0 %4203
        %v4206 = vadd.f32 %v4196, %v4204
        %v4207 = vtanh.pop %v4206
        %4209 = vrot.lane.b32.xlu0 %v4207, 16
        %v4210 = vpop.permute.xlu0 %4209
        %v4212 = vmul.f32 %v4194, %v4210
        %4214 = vrot.lane.b32.xlu0 %v4212, 104
        %v4215 = vpop.permute.xlu0 %4214
        %v4216 = vsel %vm3180, %v4215, 0
        %4218 = vmatprep.subr.mxu0 0.0
        %4219 = vmatpush1.msra.mxu0 0.0
        %4220 = vmatprep.subr.mxu0 0.0
        %4221 = vmatpush1.msra.mxu0 0.0
        %4222 = vmatprep.subr.mxu0 0.0
        %4223 = vmatpush1.msra.mxu0 0.0
        %4224 = vmatprep.subr.mxu0 0.0
        %4225 = vmatpush1.msra.mxu0 0.0
        %4226 = vmatprep.subr.mxu0 0.0
        %4227 = vmatpush1.msra.mxu0 0.0
        %4228 = vmatprep.subr.mxu0 0.0
        %4229 = vmatpush1.msra.mxu0 0.0
        %4230 = vmatprep.subr.mxu0 0.0
        %4231 = vmatpush1.msra.mxu0 0.0
        %4232 = vmatprep.subr.mxu0 0.0
        %4233 = vmatpush1.msra.mxu0 0.0
        %4234 = vmatprep.subr.mxu0 0.0
        %4235 = vmatpush1.msra.mxu0 0.0
        %4236 = vmatprep.subr.mxu0 0.0
        %4237 = vmatpush1.msra.mxu0 0.0
        %4238 = vmatprep.subr.mxu0 0.0
        %4239 = vmatpush1.msra.mxu0 0.0
        %4240 = vmatprep.subr.mxu0 0.0
        %4241 = vmatpush1.msra.mxu0 0.0
        %4242 = vmatprep.subr.mxu0 0.0
        %4243 = vmatpush1.msra.mxu0 0.0
        %4244 = vmatprep.subr.mxu0 0.0
        %4245 = vmatpush1.msra.mxu0 0.0
        %4246 = vmatprep.subr.mxu0 0.0
        %4247 = vmatpush1.msra.mxu0 0.0
        %4248 = vmatprep.subr.mxu0 0.0
        %4249 = vmatpush1.msra.mxu0 %v4020
        %4250 = vmatprep.subr.mxu0 0.0
        %4251 = vmatpush2.msra.mxu0 0.0
        %4252 = vmatprep.subr.mxu0 0.0
        %4253 = vmatpush2.msra.mxu0 0.0
        %4254 = vmatprep.subr.mxu0 0.0
        %4255 = vmatpush2.msra.mxu0 0.0
        %4256 = vmatprep.subr.mxu0 0.0
        %4257 = vmatpush2.msra.mxu0 0.0
        %4258 = vmatprep.subr.mxu0 0.0
        %4259 = vmatpush2.msra.mxu0 0.0
        %4260 = vmatprep.subr.mxu0 0.0
        %4261 = vmatpush2.msra.mxu0 0.0
        %4262 = vmatprep.subr.mxu0 0.0
        %4263 = vmatpush2.msra.mxu0 0.0
        %4264 = vmatprep.subr.mxu0 0.0
        %4265 = vmatpush2.msra.mxu0 0.0
        %4266 = vmatprep.subr.mxu0 0.0
        %4267 = vmatpush2.msra.mxu0 0.0
        %4268 = vmatprep.subr.mxu0 0.0
        %4269 = vmatpush2.msra.mxu0 0.0
        %4270 = vmatprep.subr.mxu0 0.0
        %4271 = vmatpush2.msra.mxu0 0.0
        %4272 = vmatprep.subr.mxu0 0.0
        %4273 = vmatpush2.msra.mxu0 0.0
        %4274 = vmatprep.subr.mxu0 0.0
        %4275 = vmatpush2.msra.mxu0 0.0
        %4276 = vmatprep.subr.mxu0 0.0
        %4277 = vmatpush2.msra.mxu0 0.0
        %4278 = vmatprep.subr.mxu0 0.0
        %4279 = vmatpush2.msra.mxu0 0.0
        %4280 = vmatprep.subr.mxu0 0.0
        %4281 = vmatpush2.msra.mxu0 0.0
        %4282 = vmatprep.mubr.f32.mxu0 0.0
        %4283 = vmatmul.mubr.f32.gmra.mxu0 %v4216
        %v4284 = vpop.f32.mrf.mxu0
        %v4285 = vadd.f32 0.0, %v4284
        %v4286 = vpop.f32.mrf.mxu0
        %4287 = vdwg.mxu0
        %v4288 = vadd.f32 %v4016, %v4285
        %v4289 = vmul.f32 %v4288, 0.5
        %v4290 = vtanh.pop %v4289
        %v4291 = vadd.f32 %v4290, 1.0
        %v4292 = vmul.f32 %v4291, 0.5
        %v4293 = vtanh.pop %v4288
        %v4294 = vmul.f32 %v4292, %v4206
        %4296 = vrot.lane.b32.xlu0 %v4293, 112
        %v4297 = vpop.permute.xlu0 %4296
        %v4299 = vmul.f32 %v4292, %v4297
        %4301 = vrot.lane.b32.xlu0 %v4299, 8
        %v4302 = vpop.permute.xlu0 %4301
        %v4304 = vadd.f32 %v4294, %v4302
        %v4305 = vtanh.pop %v4304
        %4307 = vrot.lane.b32.xlu0 %v4305, 16
        %v4308 = vpop.permute.xlu0 %4307
        %v4310 = vmul.f32 %v4292, %v4308
        %4311 = vmatprep.subr.mxu0 0.0
        %4312 = vmatpush1.msra.mxu0 0.0
        %4313 = vmatprep.subr.mxu0 0.0
        %4314 = vmatpush1.msra.mxu0 0.0
        %4315 = vmatprep.subr.mxu0 0.0
        %4316 = vmatpush1.msra.mxu0 0.0
        %4317 = vmatprep.subr.mxu0 0.0
        %4318 = vmatpush1.msra.mxu0 0.0
        %4319 = vmatprep.subr.mxu0 0.0
        %4320 = vmatpush1.msra.mxu0 0.0
        %4321 = vmatprep.subr.mxu0 0.0
        %4322 = vmatpush1.msra.mxu0 0.0
        %4323 = vmatprep.subr.mxu0 0.0
        %4324 = vmatpush1.msra.mxu0 0.0
        %4325 = vmatprep.subr.mxu0 0.0
        %4326 = vmatpush1.msra.mxu0 0.0
        %4327 = vmatprep.subr.mxu0 0.0
        %4328 = vmatpush1.msra.mxu0 0.0
        %4329 = vmatprep.subr.mxu0 0.0
        %4330 = vmatpush1.msra.mxu0 0.0
        %4331 = vmatprep.subr.mxu0 0.0
        %4332 = vmatpush1.msra.mxu0 0.0
        %4333 = vmatprep.subr.mxu0 0.0
        %4334 = vmatpush1.msra.mxu0 0.0
        %4335 = vmatprep.subr.mxu0 0.0
        %4336 = vmatpush1.msra.mxu0 0.0
        %4337 = vmatprep.subr.mxu0 0.0
        %4338 = vmatpush1.msra.mxu0 0.0
        %4339 = vmatprep.subr.mxu0 0.0
        %4340 = vmatpush1.msra.mxu0 0.0
        %4341 = vmatprep.subr.mxu0 0.0
        %4342 = vmatpush1.msra.mxu0 %v4021
        %4343 = vmatprep.subr.mxu0 0.0
        %4344 = vmatpush2.msra.mxu0 0.0
        %4345 = vmatprep.subr.mxu0 0.0
        %4346 = vmatpush2.msra.mxu0 0.0
        %4347 = vmatprep.subr.mxu0 0.0
        %4348 = vmatpush2.msra.mxu0 0.0
        %4349 = vmatprep.subr.mxu0 0.0
        %4350 = vmatpush2.msra.mxu0 0.0
        %4351 = vmatprep.subr.mxu0 0.0
        %4352 = vmatpush2.msra.mxu0 0.0
        %4353 = vmatprep.subr.mxu0 0.0
        %4354 = vmatpush2.msra.mxu0 0.0
        %4355 = vmatprep.subr.mxu0 0.0
        %4356 = vmatpush2.msra.mxu0 0.0
        %4357 = vmatprep.subr.mxu0 0.0
        %4358 = vmatpush2.msra.mxu0 0.0
        %4359 = vmatprep.subr.mxu0 0.0
        %4360 = vmatpush2.msra.mxu0 0.0
        %4361 = vmatprep.subr.mxu0 0.0
        %4362 = vmatpush2.msra.mxu0 0.0
        %4363 = vmatprep.subr.mxu0 0.0
        %4364 = vmatpush2.msra.mxu0 0.0
        %4365 = vmatprep.subr.mxu0 0.0
        %4366 = vmatpush2.msra.mxu0 0.0
        %4367 = vmatprep.subr.mxu0 0.0
        %4368 = vmatpush2.msra.mxu0 0.0
        %4369 = vmatprep.subr.mxu0 0.0
        %4370 = vmatpush2.msra.mxu0 0.0
        %4371 = vmatprep.subr.mxu0 0.0
        %4372 = vmatpush2.msra.mxu0 0.0
        %4373 = vmatprep.subr.mxu0 0.0
        %4374 = vmatpush2.msra.mxu0 0.0
        %4375 = vmatprep.mubr.f32.mxu0 0.0
        %4376 = vmatmul.mubr.f32.gmra.mxu0 %v3182
        %v4377 = vpop.f32.mrf.mxu0
        %v4378 = vadd.f32 0.0, %v4377
        %v4379 = vpop.f32.mrf.mxu0
        %4380 = vdwg.mxu0
        %4382 = vrot.lane.b32.xlu0 %v4378, 32
        %v4383 = vpop.permute.xlu0 %4382
        %v4385 = vadd.f32 %v4016, %v4383
        %v4386 = vmul.f32 %v4385, 0.5
        %v4387 = vtanh.pop %v4386
        %v4388 = vadd.f32 %v4387, 1.0
        %v4389 = vmul.f32 %v4388, 0.5
        %v4390 = vtanh.pop %v4385
        %v4391 = vmul.f32 %v4389, 0.0
        %4393 = vrot.lane.b32.xlu0 %v4390, 112
        %v4394 = vpop.permute.xlu0 %4393
        %v4396 = vmul.f32 %v4389, %v4394
        %4398 = vrot.lane.b32.xlu0 %v4396, 8
        %v4399 = vpop.permute.xlu0 %4398
        %v4401 = vadd.f32 %v4391, %v4399
        %v4402 = vtanh.pop %v4401
        %4404 = vrot.lane.b32.xlu0 %v4402, 16
        %v4405 = vpop.permute.xlu0 %4404
        %v4407 = vmul.f32 %v4389, %v4405
        %4409 = vrot.lane.b32.xlu0 %v4310, 104
        %v4410 = vpop.permute.xlu0 %4409
        %4413 = vrot.lane.b32.xlu0 %v4407, 80
        %v4414 = vpop.permute.xlu0 %4413
        %v4416 = vsel %vm3180, %v4410, %v4414
        %v4417 = vlaneseq
        %v4418 = vshrl.u32 %v4417, 7
        %v4419 = vsub.s32 6, %v4418
        %v4420 = vrot.slane %v362, %v4419
        %v4421 = vmul.f32 %v4416, %v4420
        %vm4422 = vcmask 123904
        %v4423 = vsel %vm4422, %v4421, 0.0
        %4424 = vadd.xlane.f32.xlu0 %v4423
        %v4425 = vpop.xlane.xlu0 %4424
        %v4426 = vadd.f32 %v4425, %v4420
        %4428 = vrot.lane.b32.xlu0 %v4426, 112
        %v4429 = vpop.permute.xlu0 %4428
        %vm4431 = vcmask 1024
        %4432 = vst.msk [vmem:[%s10] sm:$0x3] %vm4431, %v4429
      $region64: #{cnn_lstm_forward.1} parent=59 // pred_fallthru
        _
      // Predicated region
      $region65: #{cnn_lstm_forward.1} parent=59 // pred_check
        %p4433 = pneg %p254
      $region66: #{cnn_lstm_forward.1} parent=59 // pred_check_branch
        %4435 = sbr.rel (%p4433) target = $region68
      $region67: #{cnn_lstm_forward.1} parent=59 // pred_region
        _
      $region68: #{cnn_lstm_forward.1} parent=59 // pred_fallthru
        _
      // Predicated region
      $region69: #{cnn_lstm_forward.1} parent=59 // pred_check
        %p4436 = pneg %p254
      $region70: #{cnn_lstm_forward.1} parent=59 // pred_check_branch
        %4438 = sbr.rel (%p4436) target = $region72
      $region71: #{cnn_lstm_forward.1} parent=59 // pred_region
        _
      $region72: #{cnn_lstm_forward.1} parent=59 // pred_fallthru
        _
    $region60: #{cnn_lstm_forward.1} parent=5 // pred_fallthru
      _
    %p4439 = scmp.le.s32.totalorder 2, %s16
    // Predicated region
    $region73: #{cnn_lstm_forward.1} parent=5 // pred_check
      %p4440 = pneg %p4439
    $region74: #{cnn_lstm_forward.1} parent=5 // pred_check_branch
      %4442 = sbr.rel (%p4440) target = $region76
    $region75: #{cnn_lstm_forward.1} parent=5 // pred_region
      %s4443 = ssub.s32 %s16, 2
    $region76: #{cnn_lstm_forward.1} parent=5 // pred_fallthru
      _
  $region6: #{cnn_lstm_forward.1} parent=0 // loop_footer
    %s20 = sadd.s32 1, %s16
  $region7: #{cnn_lstm_forward.1} parent=0 // loop_footer_branch
    %15 = sbr.rel target = $region3
  $region8: #{cnn_lstm_forward.1} parent=0 // loop_exit
    _

</llo_original>
